<compile_context>
chip_gen: v7x
topology: tpu7x:2x2x1
jax: 0.10.0
libtpu: 0.0.40
codegen_flags: <defaults>
</compile_context>

<pallas_src>
import functools
import math

import jax
import jax.numpy as jnp
import numpy as np
from jax.experimental import pallas as pl
from jax.experimental.pallas import tpu as pltpu


# ----------------------------------------------------------------------------
# Synthetic stand-ins for the missing config classes (small shapes).
# ----------------------------------------------------------------------------
class TrainingParameters:
    PREDICTION_TIMESTEPS_LIMIT = 8          # P


class NetParameters:
    D_MODEL = 32
    D_HIDDEN = 64
    N_LAYERS = 1
    N_HEAD = 4
    D_K = 16
    D_V = 16
    N_POSITION = 16
    N_AGENTS = 8                            # sequence length of the encoder


# ----------------------------------------------------------------------------
# Single fused Pallas kernel for the whole Communication forward pass.
# ----------------------------------------------------------------------------
def _layernorm(x, g, b, eps=1e-5):
    mu = jnp.mean(x, axis=-1, keepdims=True)
    var = jnp.mean((x - mu) ** 2, axis=-1, keepdims=True)
    return (x - mu) * jax.lax.rsqrt(var + eps) * g + b


def _fused_comm_kernel(u_ref, mask_ref, pos_ref,
                       w_in_ref, b_in_ref, relu_mask_ref,
                       ln_in_g_ref, ln_in_b_ref,
                       wqkv_ref, bqkv_ref, wo_ref, bo_ref,
                       ln1_g_ref, ln1_b_ref,
                       wf1_ref, bf1_ref, wf2_ref, bf2_ref,
                       ln2_g_ref, ln2_b_ref,
                       o_ref, a_ref,
                       *, B, N, H, DK, DV, D, n_layers):
    scale = 1.0 / math.sqrt(DK)

    # ---- fused "linear2 / linear3 / concat" via block-diagonal weight ----
    # u = [message | curr_pos_time | predicted_actions]  (raw widths 32|18|8)
    # w_in = blockdiag(I_32, W3, W2)  ->  msg = [message | relu(l3) | relu(l2)]
    u = u_ref[...]                                                    # (M, 58)
    z = jnp.dot(u, w_in_ref[...], preferred_element_type=jnp.float32) + b_in_ref[...]
    msg = jnp.where(relu_mask_ref[...] > 0.0, jnp.maximum(z, 0.0), z)  # (M, D)

    # ---- positional encoding + input LayerNorm ----
    x = msg + jnp.tile(pos_ref[...], (B, 1))                          # (M, D)
    x = _layernorm(x, ln_in_g_ref[...], ln_in_b_ref[...])

    # ---- encoder layers (statically unrolled) ----
    for l in range(n_layers):
        wqkv = wqkv_ref[l]                                            # (D, 3*H*DK)
        bqkv = bqkv_ref[l]                                            # (1, 3*H*DK)
        wo = wo_ref[l]                                                # (H*DV, D)
        bo = bo_ref[l]                                                # (1, D)

        qkv = jnp.dot(x, wqkv, preferred_element_type=jnp.float32) + bqkv

        rows = []
        for b in range(B):
            # hoisted additive mask (one select per batch, not per head)
            add_mask = jnp.where(mask_ref[b] > 0.0, 0.0, -1e9)        # (N, N)
            qkv_b = qkv[b * N:(b + 1) * N, :]                         # (N, 3*H*DK)
            acc = jnp.zeros((N, D), jnp.float32)
            for h in range(H):
                q = qkv_b[:, h * DK:(h + 1) * DK]
                k = qkv_b[:, H * DK + h * DK: H * DK + (h + 1) * DK]
                v = qkv_b[:, 2 * H * DK + h * DV: 2 * H * DK + (h + 1) * DV]
                # q @ k.T without an explicit transpose
                s = jax.lax.dot_general(q, k, (((1,), (1,)), ((), ())),
                                        preferred_element_type=jnp.float32)
                s = s * scale + add_mask
                s = s - jnp.max(s, axis=-1, keepdims=True)
                e = jnp.exp(s)
                p = e / jnp.sum(e, axis=-1, keepdims=True)            # (N, N)
                a_ref[(b * n_layers + l) * H + h] = p
                ctx = jnp.dot(p, v, preferred_element_type=jnp.float32)   # (N, DV)
                # fold the output projection in per head -> no head concat
                acc = acc + jnp.dot(ctx, wo[h * DV:(h + 1) * DV, :],
                                    preferred_element_type=jnp.float32)
            rows.append(acc)
        attn_out = jnp.concatenate(rows, axis=0) + bo                 # (M, D)

        x = _layernorm(x + attn_out, ln1_g_ref[l], ln1_b_ref[l])
        h1 = jnp.maximum(
            jnp.dot(x, wf1_ref[l], preferred_element_type=jnp.float32) + bf1_ref[l],
            0.0)
        ffn = jnp.dot(h1, wf2_ref[l], preferred_element_type=jnp.float32) + bf2_ref[l]
        x = _layernorm(x + ffn, ln2_g_ref[l], ln2_b_ref[l])

    o_ref[...] = x.astype(o_ref.dtype)


# ----------------------------------------------------------------------------
# Parameter construction (deterministic, synthetic)
# ----------------------------------------------------------------------------
def sinusoid_pos_table(n_position, d_model):
    pos = np.arange(n_position)[:, None].astype(np.float64)
    i = np.arange(d_model)[None, :].astype(np.float64)
    angle = pos / np.power(10000.0, 2.0 * (i // 2) / d_model)
    table = np.zeros((n_position, d_model), dtype=np.float64)
    table[:, 0::2] = np.sin(angle[:, 0::2])
    table[:, 1::2] = np.cos(angle[:, 1::2])
    return jnp.asarray(table[None], dtype=jnp.float32)     # (1, n_position, d_model)


def init_params(key):
    P = TrainingParameters.PREDICTION_TIMESTEPS_LIMIT
    DM = NetParameters.D_MODEL
    d_model = DM + 2 * (P + 1) + P // 2                    # 54
    d_in = DM + 2 * (P + 1) + P                            # 58 (raw concat width)
    d_hidden = NetParameters.D_HIDDEN // 2
    n_position = NetParameters.N_POSITION // 2
    H, DK, DV = NetParameters.N_HEAD, NetParameters.D_K, NetParameters.D_V
    L = NetParameters.N_LAYERS

    keys = iter(jax.random.split(key, 64))

    def w(shape, scale=0.05):
        return (np.asarray(jax.random.normal(next(keys), shape, jnp.float32))
                * scale).astype(np.float32)

    # linear2: P -> P//2 ; linear3: 2(P+1) -> 2(P+1)   (stored as (in, out))
    w2, b2 = w((P, P // 2)), w((P // 2,))
    w3, b3 = w((2 * (P + 1), 2 * (P + 1))), w((2 * (P + 1),))

    # Block-diagonal fused input projection: identity for `message`,
    # linear3 for curr_pos_time, linear2 for predicted_actions.
    w_in = np.zeros((d_in, d_model), np.float32)
    b_in = np.zeros((d_model,), np.float32)
    relu_mask = np.zeros((d_model,), np.float32)
    w_in[:DM, :DM] = np.eye(DM, dtype=np.float32)
    w_in[DM:DM + 2 * (P + 1), DM:DM + 2 * (P + 1)] = w3
    b_in[DM:DM + 2 * (P + 1)] = b3
    w_in[DM + 2 * (P + 1):, DM + 2 * (P + 1):] = w2
    b_in[DM + 2 * (P + 1):] = b2
    relu_mask[DM:] = 1.0                                   # ReLU only on projected cols

    layers = []
    for _ in range(L):
        wq, bq = w((d_model, H * DK)), w((H * DK,))
        wk, bk = w((d_model, H * DK)), w((H * DK,))
        wv, bv = w((d_model, H * DV)), w((H * DV,))
        layers.append({
            "wqkv": np.concatenate([wq, wk, wv], axis=1),          # (D, 3*H*DK)
            "bqkv": np.concatenate([bq, bk, bv])[None, :],
            "wo": w((H * DV, d_model)), "bo": w((d_model,))[None, :],
            "ln1_g": np.ones((1, d_model), np.float32),
            "ln1_b": np.zeros((1, d_model), np.float32),
            "wf1": w((d_model, d_hidden)), "bf1": w((d_hidden,))[None, :],
            "wf2": w((d_hidden, d_model)), "bf2": w((d_model,))[None, :],
            "ln2_g": np.ones((1, d_model), np.float32),
            "ln2_b": np.zeros((1, d_model), np.float32),
        })

    def stacked(name):
        return jnp.asarray(np.stack([lyr[name] for lyr in layers], axis=0),
                           jnp.float32)

    params = {
        "w_in": jnp.asarray(w_in),
        "b_in": jnp.asarray(b_in)[None, :],
        "relu_mask": jnp.asarray(relu_mask)[None, :],
        "pos_table": sinusoid_pos_table(n_position, d_model),
        "ln_in_g": jnp.ones((1, d_model), jnp.float32),
        "ln_in_b": jnp.zeros((1, d_model), jnp.float32),
    }
    for name in layers[0]:
        params[name] = stacked(name)                       # leading n_layers dim
    return params, d_model


# ----------------------------------------------------------------------------
# Forward pass (mirrors Communication.forward) — one pallas_call total.
# ----------------------------------------------------------------------------
def communication_forward(params, message, obs, comms_mask_groupwise,
                          predicted_actions, curr_pos_time):
    del obs  # present in the signature but unused by the reference forward
    B, N, _ = message.shape
    H, DK, DV = NetParameters.N_HEAD, NetParameters.D_K, NetParameters.D_V
    L = NetParameters.N_LAYERS
    D = params["w_in"].shape[1]

    # Raw input slab: [message | curr_pos_time | predicted_actions]
    u = jnp.concatenate([message, curr_pos_time, predicted_actions],
                        axis=2).reshape(B * N, -1)
    pos = params["pos_table"][0, :N]                       # (N, D)

    kernel = functools.partial(_fused_comm_kernel, B=B, N=N, H=H, DK=DK, DV=DV,
                               D=D, n_layers=L)
    vmem = pl.BlockSpec(memory_space=pltpu.MemorySpace.VMEM)

    out2d, attns_flat = pl.pallas_call(
        kernel,
        out_shape=(jax.ShapeDtypeStruct((B * N, D), jnp.float32),
                   jax.ShapeDtypeStruct((B * L * H, N, N), jnp.float32)),
        in_specs=[vmem] * 20,
        out_specs=(vmem, vmem),
    )(u, comms_mask_groupwise, pos,
      params["w_in"], params["b_in"], params["relu_mask"],
      params["ln_in_g"], params["ln_in_b"],
      params["wqkv"], params["bqkv"], params["wo"], params["bo"],
      params["ln1_g"], params["ln1_b"],
      params["wf1"], params["bf1"], params["wf2"], params["bf2"],
      params["ln2_g"], params["ln2_b"])

    t_intra = out2d.reshape(B, N, D)
    attns = attns_flat.reshape(B, L, H, N, N)
    return t_intra, attns


# ----------------------------------------------------------------------------
if __name__ == "__main__":
    key = jax.random.PRNGKey(0)
    kmsg, kobs, kpa, kcpt, kmask, kparams = jax.random.split(key, 6)

    B = 2
    N = NetParameters.N_AGENTS
    P = TrainingParameters.PREDICTION_TIMESTEPS_LIMIT

    message = jax.random.normal(kmsg, (B, N, NetParameters.D_MODEL), jnp.float32)
    obs = jax.random.normal(kobs, (B, 4, 16, 16), jnp.float32)        # NCHW, unused
    predicted_actions = jax.random.normal(kpa, (B, N, P), jnp.float32)
    curr_pos_time = jax.random.normal(kcpt, (B, N, 2 * (P + 1)), jnp.float32)

    # group-wise comms mask: 1 = attend, 0 = masked; diagonal always attends.
    rand_mask = (jax.random.uniform(kmask, (B, N, N)) > 0.3).astype(jnp.float32)
    comms_mask_groupwise = jnp.clip(
        rand_mask + jnp.eye(N, dtype=jnp.float32)[None], 0.0, 1.0)

    params, d_model_enc = init_params(kparams)

    fwd = jax.jit(functools.partial(communication_forward, params))
    t_intra, attns = fwd(message, obs, comms_mask_groupwise,
                         predicted_actions, curr_pos_time)
    jax.block_until_ready((t_intra, attns))

    assert t_intra.shape == (B, N, d_model_enc), t_intra.shape
    assert attns.shape == (B, NetParameters.N_LAYERS, NetParameters.N_HEAD, N, N), attns.shape
    assert bool(jnp.all(jnp.isfinite(t_intra))) and bool(jnp.all(jnp.isfinite(attns)))
    assert bool(jnp.allclose(jnp.sum(attns, axis=-1), 1.0, atol=1e-4))
    print("KERNEL_OK")
</pallas_src>

<mosaic_0001>
module attributes {stable_mosaic.version = 11 : i64} {
  func.func @_fused_comm_kernel(%arg0: memref<16x58xf32, #tpu.memory_space<vmem>>, %arg1: memref<2x8x8xf32, #tpu.memory_space<vmem>>, %arg2: memref<8x54xf32, #tpu.memory_space<vmem>>, %arg3: memref<58x54xf32, #tpu.memory_space<vmem>>, %arg4: memref<1x54xf32, #tpu.memory_space<vmem>>, %arg5: memref<1x54xf32, #tpu.memory_space<vmem>>, %arg6: memref<1x54xf32, #tpu.memory_space<vmem>>, %arg7: memref<1x54xf32, #tpu.memory_space<vmem>>, %arg8: memref<1x54x192xf32, #tpu.memory_space<vmem>>, %arg9: memref<1x1x192xf32, #tpu.memory_space<vmem>>, %arg10: memref<1x64x54xf32, #tpu.memory_space<vmem>>, %arg11: memref<1x1x54xf32, #tpu.memory_space<vmem>>, %arg12: memref<1x1x54xf32, #tpu.memory_space<vmem>>, %arg13: memref<1x1x54xf32, #tpu.memory_space<vmem>>, %arg14: memref<1x54x32xf32, #tpu.memory_space<vmem>>, %arg15: memref<1x1x32xf32, #tpu.memory_space<vmem>>, %arg16: memref<1x32x54xf32, #tpu.memory_space<vmem>>, %arg17: memref<1x1x54xf32, #tpu.memory_space<vmem>>, %arg18: memref<1x1x54xf32, #tpu.memory_space<vmem>>, %arg19: memref<1x1x54xf32, #tpu.memory_space<vmem>>, %arg20: memref<16x54xf32, #tpu.memory_space<vmem>>, %arg21: memref<8x8x8xf32, #tpu.memory_space<vmem>>) attributes {dimension_semantics = [], scalar_prefetch = 0 : i64, scratch_operands = 0 : i64, tpu.core_type = #tpu.core_type<tc>} {
    %c0 = arith.constant 0 : index
    %c0_0 = arith.constant 0 : index
    %0 = vector.load %arg0[%c0, %c0_0] : memref<16x58xf32, #tpu.memory_space<vmem>>, vector<16x58xf32>
    %c0_1 = arith.constant 0 : index
    %c0_2 = arith.constant 0 : index
    %1 = vector.load %arg3[%c0_1, %c0_2] : memref<58x54xf32, #tpu.memory_space<vmem>>, vector<58x54xf32>
    %cst = arith.constant dense<0.000000e+00> : vector<16x54xf32>
    %2 = tpu.matmul %0, %1, %cst {dimension_numbers = #tpu.dot_dimension_numbers<[1], [0], [0], [1], [0, 0, 1, 1], [], []>} : vector<16x58xf32>, vector<58x54xf32>, vector<16x54xf32> -> vector<16x54xf32>
    %c0_3 = arith.constant 0 : index
    %c0_4 = arith.constant 0 : index
    %3 = vector.load %arg4[%c0_3, %c0_4] : memref<1x54xf32, #tpu.memory_space<vmem>>, vector<1x54xf32>
    %4 = vector.broadcast %3 : vector<1x54xf32> to vector<16x54xf32>
    %5 = arith.addf %2, %4 : vector<16x54xf32>
    %c0_5 = arith.constant 0 : index
    %c0_6 = arith.constant 0 : index
    %6 = vector.load %arg5[%c0_5, %c0_6] : memref<1x54xf32, #tpu.memory_space<vmem>>, vector<1x54xf32>
    %cst_7 = arith.constant 0.000000e+00 : f32
    %7 = vector.broadcast %cst_7 : f32 to vector<1x54xf32>
    %8 = arith.cmpf ogt, %6, %7 : vector<1x54xf32>
    %cst_8 = arith.constant 0.000000e+00 : f32
    %9 = vector.broadcast %cst_8 : f32 to vector<16x54xf32>
    %10 = arith.maximumf %5, %9 : vector<16x54xf32>
    %11 = vector.shape_cast %8 : vector<1x54xi1> to vector<1x54xi1>
    %12 = vector.broadcast %11 : vector<1x54xi1> to vector<16x54xi1>
    %13 = arith.select %12, %10, %5 : vector<16x54xi1>, vector<16x54xf32>
    %c0_9 = arith.constant 0 : index
    %c0_10 = arith.constant 0 : index
    %14 = vector.load %arg2[%c0_9, %c0_10] : memref<8x54xf32, #tpu.memory_space<vmem>>, vector<8x54xf32>
    %15 = tpu.concatenate %14, %14 in 0 : vector<8x54xf32>, vector<8x54xf32> -> vector<16x54xf32>
    %16 = arith.addf %13, %15 : vector<16x54xf32>
    %c0_11 = arith.constant 0 : index
    %c0_12 = arith.constant 0 : index
    %17 = vector.load %arg6[%c0_11, %c0_12] : memref<1x54xf32, #tpu.memory_space<vmem>>, vector<1x54xf32>
    %c0_13 = arith.constant 0 : index
    %c0_14 = arith.constant 0 : index
    %18 = vector.load %arg7[%c0_13, %c0_14] : memref<1x54xf32, #tpu.memory_space<vmem>>, vector<1x54xf32>
    %cst_15 = arith.constant dense<0.000000e+00> : vector<16xf32>
    %19 = vector.multi_reduction <add>, %16, %cst_15 [1] : vector<16x54xf32> to vector<16xf32>
    %20 = vector.shape_cast %19 : vector<16xf32> to vector<16x1xf32>
    %cst_16 = arith.constant 5.400000e+01 : f32
    %21 = vector.broadcast %cst_16 : f32 to vector<16x1xf32>
    %22 = arith.divf %20, %21 : vector<16x1xf32>
    %23 = vector.broadcast %22 : vector<16x1xf32> to vector<16x54xf32>
    %24 = arith.subf %16, %23 : vector<16x54xf32>
    %25 = arith.mulf %24, %24 : vector<16x54xf32>
    %cst_17 = arith.constant dense<0.000000e+00> : vector<16xf32>
    %26 = vector.multi_reduction <add>, %25, %cst_17 [1] : vector<16x54xf32> to vector<16xf32>
    %27 = vector.shape_cast %26 : vector<16xf32> to vector<16x1xf32>
    %cst_18 = arith.constant 5.400000e+01 : f32
    %28 = vector.broadcast %cst_18 : f32 to vector<16x1xf32>
    %29 = arith.divf %27, %28 : vector<16x1xf32>
    %30 = vector.broadcast %22 : vector<16x1xf32> to vector<16x54xf32>
    %31 = arith.subf %16, %30 : vector<16x54xf32>
    %cst_19 = arith.constant 9.99999974E-6 : f32
    %32 = vector.broadcast %cst_19 : f32 to vector<16x1xf32>
    %33 = arith.addf %29, %32 : vector<16x1xf32>
    %34 = math.rsqrt %33 : vector<16x1xf32>
    %35 = vector.broadcast %34 : vector<16x1xf32> to vector<16x54xf32>
    %36 = arith.mulf %31, %35 : vector<16x54xf32>
    %37 = vector.broadcast %17 : vector<1x54xf32> to vector<16x54xf32>
    %38 = arith.mulf %36, %37 : vector<16x54xf32>
    %39 = vector.broadcast %18 : vector<1x54xf32> to vector<16x54xf32>
    %40 = arith.addf %38, %39 : vector<16x54xf32>
    %c0_20 = arith.constant 0 : index
    %c0_21 = arith.constant 0 : index
    %c0_22 = arith.constant 0 : index
    %41 = vector.load %arg8[%c0_20, %c0_21, %c0_22] : memref<1x54x192xf32, #tpu.memory_space<vmem>>, vector<1x54x192xf32>
    %42 = vector.shape_cast %41 : vector<1x54x192xf32> to vector<54x192xf32>
    %c0_23 = arith.constant 0 : index
    %c0_24 = arith.constant 0 : index
    %c0_25 = arith.constant 0 : index
    %43 = vector.load %arg9[%c0_23, %c0_24, %c0_25] : memref<1x1x192xf32, #tpu.memory_space<vmem>>, vector<1x1x192xf32>
    %44 = vector.shape_cast %43 : vector<1x1x192xf32> to vector<1x192xf32>
    %c0_26 = arith.constant 0 : index
    %c0_27 = arith.constant 0 : index
    %c0_28 = arith.constant 0 : index
    %45 = vector.load %arg10[%c0_26, %c0_27, %c0_28] : memref<1x64x54xf32, #tpu.memory_space<vmem>>, vector<1x64x54xf32>
    %46 = vector.shape_cast %45 : vector<1x64x54xf32> to vector<64x54xf32>
    %c0_29 = arith.constant 0 : index
    %c0_30 = arith.constant 0 : index
    %c0_31 = arith.constant 0 : index
    %47 = vector.load %arg11[%c0_29, %c0_30, %c0_31] : memref<1x1x54xf32, #tpu.memory_space<vmem>>, vector<1x1x54xf32>
    %48 = vector.shape_cast %47 : vector<1x1x54xf32> to vector<1x54xf32>
    %cst_32 = arith.constant dense<0.000000e+00> : vector<16x192xf32>
    %49 = tpu.matmul %40, %42, %cst_32 {dimension_numbers = #tpu.dot_dimension_numbers<[1], [0], [0], [1], [0, 0, 1, 1], [], []>} : vector<16x54xf32>, vector<54x192xf32>, vector<16x192xf32> -> vector<16x192xf32>
    %50 = vector.broadcast %44 : vector<1x192xf32> to vector<16x192xf32>
    %51 = arith.addf %49, %50 : vector<16x192xf32>
    %c0_33 = arith.constant 0 : index
    %c0_34 = arith.constant 0 : index
    %c0_35 = arith.constant 0 : index
    %52 = vector.load %arg1[%c0_33, %c0_34, %c0_35] : memref<2x8x8xf32, #tpu.memory_space<vmem>>, vector<1x8x8xf32>
    %53 = vector.shape_cast %52 : vector<1x8x8xf32> to vector<8x8xf32>
    %cst_36 = arith.constant 0.000000e+00 : f32
    %54 = vector.broadcast %cst_36 : f32 to vector<8x8xf32>
    %55 = arith.cmpf ogt, %53, %54 : vector<8x8xf32>
    %cst_37 = arith.constant 0.000000e+00 : f32
    %cst_38 = arith.constant -1.000000e+09 : f32
    %56 = vector.broadcast %cst_37 : f32 to vector<8x8xf32>
    %57 = vector.broadcast %cst_38 : f32 to vector<8x8xf32>
    %58 = arith.select %55, %56, %57 : vector<8x8xi1>, vector<8x8xf32>
    %59 = vector.extract_strided_slice %51 {offsets = [0, 0], sizes = [8, 192], strides = [1, 1]} : vector<16x192xf32> to vector<8x192xf32>
    %cst_39 = arith.constant 0.000000e+00 : f32
    %60 = vector.broadcast %cst_39 : f32 to vector<8x54xf32>
    %61 = vector.extract_strided_slice %59 {offsets = [0, 0], sizes = [8, 16], strides = [1, 1]} : vector<8x192xf32> to vector<8x16xf32>
    %62 = vector.extract_strided_slice %59 {offsets = [0, 64], sizes = [8, 16], strides = [1, 1]} : vector<8x192xf32> to vector<8x16xf32>
    %63 = vector.extract_strided_slice %59 {offsets = [0, 128], sizes = [8, 16], strides = [1, 1]} : vector<8x192xf32> to vector<8x16xf32>
    %cst_40 = arith.constant dense<0.000000e+00> : vector<8x8xf32>
    %64 = tpu.matmul %61, %62, %cst_40 {dimension_numbers = #tpu.dot_dimension_numbers<[1], [1], [0], [0], [0, 0, 1, 0], [], []>} : vector<8x16xf32>, vector<8x16xf32>, vector<8x8xf32> -> vector<8x8xf32>
    %cst_41 = arith.constant 2.500000e-01 : f32
    %65 = vector.broadcast %cst_41 : f32 to vector<8x8xf32>
    %66 = arith.mulf %64, %65 : vector<8x8xf32>
    %67 = arith.addf %66, %58 : vector<8x8xf32>
    %cst_42 = arith.constant dense<0xFF800000> : vector<8xf32>
    %68 = vector.multi_reduction <maximumf>, %67, %cst_42 [1] : vector<8x8xf32> to vector<8xf32>
    %69 = vector.shape_cast %68 : vector<8xf32> to vector<8x1xf32>
    %70 = vector.broadcast %69 : vector<8x1xf32> to vector<8x8xf32>
    %71 = arith.subf %67, %70 : vector<8x8xf32>
    %72 = math.exp %71 : vector<8x8xf32>
    %cst_43 = arith.constant dense<0.000000e+00> : vector<8xf32>
    %73 = vector.multi_reduction <add>, %72, %cst_43 [1] : vector<8x8xf32> to vector<8xf32>
    %74 = vector.shape_cast %73 : vector<8xf32> to vector<8x1xf32>
    %75 = vector.broadcast %74 : vector<8x1xf32> to vector<8x8xf32>
    %76 = arith.divf %72, %75 : vector<8x8xf32>
    %c0_44 = arith.constant 0 : index
    %c0_45 = arith.constant 0 : index
    %c0_46 = arith.constant 0 : index
    %77 = vector.load %arg21[%c0_44, %c0_45, %c0_46] : memref<8x8x8xf32, #tpu.memory_space<vmem>>, vector<1x8x8xf32>
    %78 = vector.shape_cast %77 : vector<1x8x8xf32> to vector<8x8xf32>
    %79 = vector.shape_cast %76 : vector<8x8xf32> to vector<1x8x8xf32>
    tpu.vector_store %arg21[%c0_44, %c0_45, %c0_46], %79 {strides = array<i32>} : memref<8x8x8xf32, #tpu.memory_space<vmem>>, vector<1x8x8xf32>,
    %cst_47 = arith.constant dense<0.000000e+00> : vector<8x16xf32>
    %80 = tpu.matmul %76, %63, %cst_47 {dimension_numbers = #tpu.dot_dimension_numbers<[1], [0], [0], [1], [0, 0, 1, 1], [], []>} : vector<8x8xf32>, vector<8x16xf32>, vector<8x16xf32> -> vector<8x16xf32>
    %81 = vector.extract_strided_slice %46 {offsets = [0, 0], sizes = [16, 54], strides = [1, 1]} : vector<64x54xf32> to vector<16x54xf32>
    %cst_48 = arith.constant dense<0.000000e+00> : vector<8x54xf32>
    %82 = tpu.matmul %80, %81, %cst_48 {dimension_numbers = #tpu.dot_dimension_numbers<[1], [0], [0], [1], [0, 0, 1, 1], [], []>} : vector<8x16xf32>, vector<16x54xf32>, vector<8x54xf32> -> vector<8x54xf32>
    %83 = arith.addf %60, %82 : vector<8x54xf32>
    %84 = vector.extract_strided_slice %59 {offsets = [0, 16], sizes = [8, 16], strides = [1, 1]} : vector<8x192xf32> to vector<8x16xf32>
    %85 = vector.extract_strided_slice %59 {offsets = [0, 80], sizes = [8, 16], strides = [1, 1]} : vector<8x192xf32> to vector<8x16xf32>
    %86 = vector.extract_strided_slice %59 {offsets = [0, 144], sizes = [8, 16], strides = [1, 1]} : vector<8x192xf32> to vector<8x16xf32>
    %cst_49 = arith.constant dense<0.000000e+00> : vector<8x8xf32>
    %87 = tpu.matmul %84, %85, %cst_49 {dimension_numbers = #tpu.dot_dimension_numbers<[1], [1], [0], [0], [0, 0, 1, 0], [], []>} : vector<8x16xf32>, vector<8x16xf32>, vector<8x8xf32> -> vector<8x8xf32>
    %cst_50 = arith.constant 2.500000e-01 : f32
    %88 = vector.broadcast %cst_50 : f32 to vector<8x8xf32>
    %89 = arith.mulf %87, %88 : vector<8x8xf32>
    %90 = arith.addf %89, %58 : vector<8x8xf32>
    %cst_51 = arith.constant dense<0xFF800000> : vector<8xf32>
    %91 = vector.multi_reduction <maximumf>, %90, %cst_51 [1] : vector<8x8xf32> to vector<8xf32>
    %92 = vector.shape_cast %91 : vector<8xf32> to vector<8x1xf32>
    %93 = vector.broadcast %92 : vector<8x1xf32> to vector<8x8xf32>
    %94 = arith.subf %90, %93 : vector<8x8xf32>
    %95 = math.exp %94 : vector<8x8xf32>
    %cst_52 = arith.constant dense<0.000000e+00> : vector<8xf32>
    %96 = vector.multi_reduction <add>, %95, %cst_52 [1] : vector<8x8xf32> to vector<8xf32>
    %97 = vector.shape_cast %96 : vector<8xf32> to vector<8x1xf32>
    %98 = vector.broadcast %97 : vector<8x1xf32> to vector<8x8xf32>
    %99 = arith.divf %95, %98 : vector<8x8xf32>
    %c1 = arith.constant 1 : index
    %c0_53 = arith.constant 0 : index
    %c0_54 = arith.constant 0 : index
    %100 = vector.load %arg21[%c1, %c0_53, %c0_54] : memref<8x8x8xf32, #tpu.memory_space<vmem>>, vector<1x8x8xf32>
    %101 = vector.shape_cast %100 : vector<1x8x8xf32> to vector<8x8xf32>
    %102 = vector.shape_cast %99 : vector<8x8xf32> to vector<1x8x8xf32>
    tpu.vector_store %arg21[%c1, %c0_53, %c0_54], %102 {strides = array<i32>} : memref<8x8x8xf32, #tpu.memory_space<vmem>>, vector<1x8x8xf32>,
    %cst_55 = arith.constant dense<0.000000e+00> : vector<8x16xf32>
    %103 = tpu.matmul %99, %86, %cst_55 {dimension_numbers = #tpu.dot_dimension_numbers<[1], [0], [0], [1], [0, 0, 1, 1], [], []>} : vector<8x8xf32>, vector<8x16xf32>, vector<8x16xf32> -> vector<8x16xf32>
    %104 = vector.extract_strided_slice %46 {offsets = [16, 0], sizes = [16, 54], strides = [1, 1]} : vector<64x54xf32> to vector<16x54xf32>
    %cst_56 = arith.constant dense<0.000000e+00> : vector<8x54xf32>
    %105 = tpu.matmul %103, %104, %cst_56 {dimension_numbers = #tpu.dot_dimension_numbers<[1], [0], [0], [1], [0, 0, 1, 1], [], []>} : vector<8x16xf32>, vector<16x54xf32>, vector<8x54xf32> -> vector<8x54xf32>
    %106 = arith.addf %83, %105 : vector<8x54xf32>
    %107 = vector.extract_strided_slice %59 {offsets = [0, 32], sizes = [8, 16], strides = [1, 1]} : vector<8x192xf32> to vector<8x16xf32>
    %108 = vector.extract_strided_slice %59 {offsets = [0, 96], sizes = [8, 16], strides = [1, 1]} : vector<8x192xf32> to vector<8x16xf32>
    %109 = vector.extract_strided_slice %59 {offsets = [0, 160], sizes = [8, 16], strides = [1, 1]} : vector<8x192xf32> to vector<8x16xf32>
    %cst_57 = arith.constant dense<0.000000e+00> : vector<8x8xf32>
    %110 = tpu.matmul %107, %108, %cst_57 {dimension_numbers = #tpu.dot_dimension_numbers<[1], [1], [0], [0], [0, 0, 1, 0], [], []>} : vector<8x16xf32>, vector<8x16xf32>, vector<8x8xf32> -> vector<8x8xf32>
    %cst_58 = arith.constant 2.500000e-01 : f32
    %111 = vector.broadcast %cst_58 : f32 to vector<8x8xf32>
    %112 = arith.mulf %110, %111 : vector<8x8xf32>
    %113 = arith.addf %112, %58 : vector<8x8xf32>
    %cst_59 = arith.constant dense<0xFF800000> : vector<8xf32>
    %114 = vector.multi_reduction <maximumf>, %113, %cst_59 [1] : vector<8x8xf32> to vector<8xf32>
    %115 = vector.shape_cast %114 : vector<8xf32> to vector<8x1xf32>
    %116 = vector.broadcast %115 : vector<8x1xf32> to vector<8x8xf32>
    %117 = arith.subf %113, %116 : vector<8x8xf32>
    %118 = math.exp %117 : vector<8x8xf32>
    %cst_60 = arith.constant dense<0.000000e+00> : vector<8xf32>
    %119 = vector.multi_reduction <add>, %118, %cst_60 [1] : vector<8x8xf32> to vector<8xf32>
    %120 = vector.shape_cast %119 : vector<8xf32> to vector<8x1xf32>
    %121 = vector.broadcast %120 : vector<8x1xf32> to vector<8x8xf32>
    %122 = arith.divf %118, %121 : vector<8x8xf32>
    %c2 = arith.constant 2 : index
    %c0_61 = arith.constant 0 : index
    %c0_62 = arith.constant 0 : index
    %123 = vector.load %arg21[%c2, %c0_61, %c0_62] : memref<8x8x8xf32, #tpu.memory_space<vmem>>, vector<1x8x8xf32>
    %124 = vector.shape_cast %123 : vector<1x8x8xf32> to vector<8x8xf32>
    %125 = vector.shape_cast %122 : vector<8x8xf32> to vector<1x8x8xf32>
    tpu.vector_store %arg21[%c2, %c0_61, %c0_62], %125 {strides = array<i32>} : memref<8x8x8xf32, #tpu.memory_space<vmem>>, vector<1x8x8xf32>,
    %cst_63 = arith.constant dense<0.000000e+00> : vector<8x16xf32>
    %126 = tpu.matmul %122, %109, %cst_63 {dimension_numbers = #tpu.dot_dimension_numbers<[1], [0], [0], [1], [0, 0, 1, 1], [], []>} : vector<8x8xf32>, vector<8x16xf32>, vector<8x16xf32> -> vector<8x16xf32>
    %127 = vector.extract_strided_slice %46 {offsets = [32, 0], sizes = [16, 54], strides = [1, 1]} : vector<64x54xf32> to vector<16x54xf32>
    %cst_64 = arith.constant dense<0.000000e+00> : vector<8x54xf32>
    %128 = tpu.matmul %126, %127, %cst_64 {dimension_numbers = #tpu.dot_dimension_numbers<[1], [0], [0], [1], [0, 0, 1, 1], [], []>} : vector<8x16xf32>, vector<16x54xf32>, vector<8x54xf32> -> vector<8x54xf32>
    %129 = arith.addf %106, %128 : vector<8x54xf32>
    %130 = vector.extract_strided_slice %59 {offsets = [0, 48], sizes = [8, 16], strides = [1, 1]} : vector<8x192xf32> to vector<8x16xf32>
    %131 = vector.extract_strided_slice %59 {offsets = [0, 112], sizes = [8, 16], strides = [1, 1]} : vector<8x192xf32> to vector<8x16xf32>
    %132 = vector.extract_strided_slice %59 {offsets = [0, 176], sizes = [8, 16], strides = [1, 1]} : vector<8x192xf32> to vector<8x16xf32>
    %cst_65 = arith.constant dense<0.000000e+00> : vector<8x8xf32>
    %133 = tpu.matmul %130, %131, %cst_65 {dimension_numbers = #tpu.dot_dimension_numbers<[1], [1], [0], [0], [0, 0, 1, 0], [], []>} : vector<8x16xf32>, vector<8x16xf32>, vector<8x8xf32> -> vector<8x8xf32>
    %cst_66 = arith.constant 2.500000e-01 : f32
    %134 = vector.broadcast %cst_66 : f32 to vector<8x8xf32>
    %135 = arith.mulf %133, %134 : vector<8x8xf32>
    %136 = arith.addf %135, %58 : vector<8x8xf32>
    %cst_67 = arith.constant dense<0xFF800000> : vector<8xf32>
    %137 = vector.multi_reduction <maximumf>, %136, %cst_67 [1] : vector<8x8xf32> to vector<8xf32>
    %138 = vector.shape_cast %137 : vector<8xf32> to vector<8x1xf32>
    %139 = vector.broadcast %138 : vector<8x1xf32> to vector<8x8xf32>
    %140 = arith.subf %136, %139 : vector<8x8xf32>
    %141 = math.exp %140 : vector<8x8xf32>
    %cst_68 = arith.constant dense<0.000000e+00> : vector<8xf32>
    %142 = vector.multi_reduction <add>, %141, %cst_68 [1] : vector<8x8xf32> to vector<8xf32>
    %143 = vector.shape_cast %142 : vector<8xf32> to vector<8x1xf32>
    %144 = vector.broadcast %143 : vector<8x1xf32> to vector<8x8xf32>
    %145 = arith.divf %141, %144 : vector<8x8xf32>
    %c3 = arith.constant 3 : index
    %c0_69 = arith.constant 0 : index
    %c0_70 = arith.constant 0 : index
    %146 = vector.load %arg21[%c3, %c0_69, %c0_70] : memref<8x8x8xf32, #tpu.memory_space<vmem>>, vector<1x8x8xf32>
    %147 = vector.shape_cast %146 : vector<1x8x8xf32> to vector<8x8xf32>
    %148 = vector.shape_cast %145 : vector<8x8xf32> to vector<1x8x8xf32>
    tpu.vector_store %arg21[%c3, %c0_69, %c0_70], %148 {strides = array<i32>} : memref<8x8x8xf32, #tpu.memory_space<vmem>>, vector<1x8x8xf32>,
    %cst_71 = arith.constant dense<0.000000e+00> : vector<8x16xf32>
    %149 = tpu.matmul %145, %132, %cst_71 {dimension_numbers = #tpu.dot_dimension_numbers<[1], [0], [0], [1], [0, 0, 1, 1], [], []>} : vector<8x8xf32>, vector<8x16xf32>, vector<8x16xf32> -> vector<8x16xf32>
    %150 = vector.extract_strided_slice %46 {offsets = [48, 0], sizes = [16, 54], strides = [1, 1]} : vector<64x54xf32> to vector<16x54xf32>
    %cst_72 = arith.constant dense<0.000000e+00> : vector<8x54xf32>
    %151 = tpu.matmul %149, %150, %cst_72 {dimension_numbers = #tpu.dot_dimension_numbers<[1], [0], [0], [1], [0, 0, 1, 1], [], []>} : vector<8x16xf32>, vector<16x54xf32>, vector<8x54xf32> -> vector<8x54xf32>
    %152 = arith.addf %129, %151 : vector<8x54xf32>
    %c1_73 = arith.constant 1 : index
    %c0_74 = arith.constant 0 : index
    %c0_75 = arith.constant 0 : index
    %153 = vector.load %arg1[%c1_73, %c0_74, %c0_75] : memref<2x8x8xf32, #tpu.memory_space<vmem>>, vector<1x8x8xf32>
    %154 = vector.shape_cast %153 : vector<1x8x8xf32> to vector<8x8xf32>
    %cst_76 = arith.constant 0.000000e+00 : f32
    %155 = vector.broadcast %cst_76 : f32 to vector<8x8xf32>
    %156 = arith.cmpf ogt, %154, %155 : vector<8x8xf32>
    %cst_77 = arith.constant 0.000000e+00 : f32
    %cst_78 = arith.constant -1.000000e+09 : f32
    %157 = vector.broadcast %cst_77 : f32 to vector<8x8xf32>
    %158 = vector.broadcast %cst_78 : f32 to vector<8x8xf32>
    %159 = arith.select %156, %157, %158 : vector<8x8xi1>, vector<8x8xf32>
    %160 = vector.extract_strided_slice %51 {offsets = [8, 0], sizes = [8, 192], strides = [1, 1]} : vector<16x192xf32> to vector<8x192xf32>
    %cst_79 = arith.constant 0.000000e+00 : f32
    %161 = vector.broadcast %cst_79 : f32 to vector<8x54xf32>
    %162 = vector.extract_strided_slice %160 {offsets = [0, 0], sizes = [8, 16], strides = [1, 1]} : vector<8x192xf32> to vector<8x16xf32>
    %163 = vector.extract_strided_slice %160 {offsets = [0, 64], sizes = [8, 16], strides = [1, 1]} : vector<8x192xf32> to vector<8x16xf32>
    %164 = vector.extract_strided_slice %160 {offsets = [0, 128], sizes = [8, 16], strides = [1, 1]} : vector<8x192xf32> to vector<8x16xf32>
    %cst_80 = arith.constant dense<0.000000e+00> : vector<8x8xf32>
    %165 = tpu.matmul %162, %163, %cst_80 {dimension_numbers = #tpu.dot_dimension_numbers<[1], [1], [0], [0], [0, 0, 1, 0], [], []>} : vector<8x16xf32>, vector<8x16xf32>, vector<8x8xf32> -> vector<8x8xf32>
    %cst_81 = arith.constant 2.500000e-01 : f32
    %166 = vector.broadcast %cst_81 : f32 to vector<8x8xf32>
    %167 = arith.mulf %165, %166 : vector<8x8xf32>
    %168 = arith.addf %167, %159 : vector<8x8xf32>
    %cst_82 = arith.constant dense<0xFF800000> : vector<8xf32>
    %169 = vector.multi_reduction <maximumf>, %168, %cst_82 [1] : vector<8x8xf32> to vector<8xf32>
    %170 = vector.shape_cast %169 : vector<8xf32> to vector<8x1xf32>
    %171 = vector.broadcast %170 : vector<8x1xf32> to vector<8x8xf32>
    %172 = arith.subf %168, %171 : vector<8x8xf32>
    %173 = math.exp %172 : vector<8x8xf32>
    %cst_83 = arith.constant dense<0.000000e+00> : vector<8xf32>
    %174 = vector.multi_reduction <add>, %173, %cst_83 [1] : vector<8x8xf32> to vector<8xf32>
    %175 = vector.shape_cast %174 : vector<8xf32> to vector<8x1xf32>
    %176 = vector.broadcast %175 : vector<8x1xf32> to vector<8x8xf32>
    %177 = arith.divf %173, %176 : vector<8x8xf32>
    %c4 = arith.constant 4 : index
    %c0_84 = arith.constant 0 : index
    %c0_85 = arith.constant 0 : index
    %178 = vector.load %arg21[%c4, %c0_84, %c0_85] : memref<8x8x8xf32, #tpu.memory_space<vmem>>, vector<1x8x8xf32>
    %179 = vector.shape_cast %178 : vector<1x8x8xf32> to vector<8x8xf32>
    %180 = vector.shape_cast %177 : vector<8x8xf32> to vector<1x8x8xf32>
    tpu.vector_store %arg21[%c4, %c0_84, %c0_85], %180 {strides = array<i32>} : memref<8x8x8xf32, #tpu.memory_space<vmem>>, vector<1x8x8xf32>,
    %cst_86 = arith.constant dense<0.000000e+00> : vector<8x16xf32>
    %181 = tpu.matmul %177, %164, %cst_86 {dimension_numbers = #tpu.dot_dimension_numbers<[1], [0], [0], [1], [0, 0, 1, 1], [], []>} : vector<8x8xf32>, vector<8x16xf32>, vector<8x16xf32> -> vector<8x16xf32>
    %182 = vector.extract_strided_slice %46 {offsets = [0, 0], sizes = [16, 54], strides = [1, 1]} : vector<64x54xf32> to vector<16x54xf32>
    %cst_87 = arith.constant dense<0.000000e+00> : vector<8x54xf32>
    %183 = tpu.matmul %181, %182, %cst_87 {dimension_numbers = #tpu.dot_dimension_numbers<[1], [0], [0], [1], [0, 0, 1, 1], [], []>} : vector<8x16xf32>, vector<16x54xf32>, vector<8x54xf32> -> vector<8x54xf32>
    %184 = arith.addf %161, %183 : vector<8x54xf32>
    %185 = vector.extract_strided_slice %160 {offsets = [0, 16], sizes = [8, 16], strides = [1, 1]} : vector<8x192xf32> to vector<8x16xf32>
    %186 = vector.extract_strided_slice %160 {offsets = [0, 80], sizes = [8, 16], strides = [1, 1]} : vector<8x192xf32> to vector<8x16xf32>
    %187 = vector.extract_strided_slice %160 {offsets = [0, 144], sizes = [8, 16], strides = [1, 1]} : vector<8x192xf32> to vector<8x16xf32>
    %cst_88 = arith.constant dense<0.000000e+00> : vector<8x8xf32>
    %188 = tpu.matmul %185, %186, %cst_88 {dimension_numbers = #tpu.dot_dimension_numbers<[1], [1], [0], [0], [0, 0, 1, 0], [], []>} : vector<8x16xf32>, vector<8x16xf32>, vector<8x8xf32> -> vector<8x8xf32>
    %cst_89 = arith.constant 2.500000e-01 : f32
    %189 = vector.broadcast %cst_89 : f32 to vector<8x8xf32>
    %190 = arith.mulf %188, %189 : vector<8x8xf32>
    %191 = arith.addf %190, %159 : vector<8x8xf32>
    %cst_90 = arith.constant dense<0xFF800000> : vector<8xf32>
    %192 = vector.multi_reduction <maximumf>, %191, %cst_90 [1] : vector<8x8xf32> to vector<8xf32>
    %193 = vector.shape_cast %192 : vector<8xf32> to vector<8x1xf32>
    %194 = vector.broadcast %193 : vector<8x1xf32> to vector<8x8xf32>
    %195 = arith.subf %191, %194 : vector<8x8xf32>
    %196 = math.exp %195 : vector<8x8xf32>
    %cst_91 = arith.constant dense<0.000000e+00> : vector<8xf32>
    %197 = vector.multi_reduction <add>, %196, %cst_91 [1] : vector<8x8xf32> to vector<8xf32>
    %198 = vector.shape_cast %197 : vector<8xf32> to vector<8x1xf32>
    %199 = vector.broadcast %198 : vector<8x1xf32> to vector<8x8xf32>
    %200 = arith.divf %196, %199 : vector<8x8xf32>
    %c5 = arith.constant 5 : index
    %c0_92 = arith.constant 0 : index
    %c0_93 = arith.constant 0 : index
    %201 = vector.load %arg21[%c5, %c0_92, %c0_93] : memref<8x8x8xf32, #tpu.memory_space<vmem>>, vector<1x8x8xf32>
    %202 = vector.shape_cast %201 : vector<1x8x8xf32> to vector<8x8xf32>
    %203 = vector.shape_cast %200 : vector<8x8xf32> to vector<1x8x8xf32>
    tpu.vector_store %arg21[%c5, %c0_92, %c0_93], %203 {strides = array<i32>} : memref<8x8x8xf32, #tpu.memory_space<vmem>>, vector<1x8x8xf32>,
    %cst_94 = arith.constant dense<0.000000e+00> : vector<8x16xf32>
    %204 = tpu.matmul %200, %187, %cst_94 {dimension_numbers = #tpu.dot_dimension_numbers<[1], [0], [0], [1], [0, 0, 1, 1], [], []>} : vector<8x8xf32>, vector<8x16xf32>, vector<8x16xf32> -> vector<8x16xf32>
    %205 = vector.extract_strided_slice %46 {offsets = [16, 0], sizes = [16, 54], strides = [1, 1]} : vector<64x54xf32> to vector<16x54xf32>
    %cst_95 = arith.constant dense<0.000000e+00> : vector<8x54xf32>
    %206 = tpu.matmul %204, %205, %cst_95 {dimension_numbers = #tpu.dot_dimension_numbers<[1], [0], [0], [1], [0, 0, 1, 1], [], []>} : vector<8x16xf32>, vector<16x54xf32>, vector<8x54xf32> -> vector<8x54xf32>
    %207 = arith.addf %184, %206 : vector<8x54xf32>
    %208 = vector.extract_strided_slice %160 {offsets = [0, 32], sizes = [8, 16], strides = [1, 1]} : vector<8x192xf32> to vector<8x16xf32>
    %209 = vector.extract_strided_slice %160 {offsets = [0, 96], sizes = [8, 16], strides = [1, 1]} : vector<8x192xf32> to vector<8x16xf32>
    %210 = vector.extract_strided_slice %160 {offsets = [0, 160], sizes = [8, 16], strides = [1, 1]} : vector<8x192xf32> to vector<8x16xf32>
    %cst_96 = arith.constant dense<0.000000e+00> : vector<8x8xf32>
    %211 = tpu.matmul %208, %209, %cst_96 {dimension_numbers = #tpu.dot_dimension_numbers<[1], [1], [0], [0], [0, 0, 1, 0], [], []>} : vector<8x16xf32>, vector<8x16xf32>, vector<8x8xf32> -> vector<8x8xf32>
    %cst_97 = arith.constant 2.500000e-01 : f32
    %212 = vector.broadcast %cst_97 : f32 to vector<8x8xf32>
    %213 = arith.mulf %211, %212 : vector<8x8xf32>
    %214 = arith.addf %213, %159 : vector<8x8xf32>
    %cst_98 = arith.constant dense<0xFF800000> : vector<8xf32>
    %215 = vector.multi_reduction <maximumf>, %214, %cst_98 [1] : vector<8x8xf32> to vector<8xf32>
    %216 = vector.shape_cast %215 : vector<8xf32> to vector<8x1xf32>
    %217 = vector.broadcast %216 : vector<8x1xf32> to vector<8x8xf32>
    %218 = arith.subf %214, %217 : vector<8x8xf32>
    %219 = math.exp %218 : vector<8x8xf32>
    %cst_99 = arith.constant dense<0.000000e+00> : vector<8xf32>
    %220 = vector.multi_reduction <add>, %219, %cst_99 [1] : vector<8x8xf32> to vector<8xf32>
    %221 = vector.shape_cast %220 : vector<8xf32> to vector<8x1xf32>
    %222 = vector.broadcast %221 : vector<8x1xf32> to vector<8x8xf32>
    %223 = arith.divf %219, %222 : vector<8x8xf32>
    %c6 = arith.constant 6 : index
    %c0_100 = arith.constant 0 : index
    %c0_101 = arith.constant 0 : index
    %224 = vector.load %arg21[%c6, %c0_100, %c0_101] : memref<8x8x8xf32, #tpu.memory_space<vmem>>, vector<1x8x8xf32>
    %225 = vector.shape_cast %224 : vector<1x8x8xf32> to vector<8x8xf32>
    %226 = vector.shape_cast %223 : vector<8x8xf32> to vector<1x8x8xf32>
    tpu.vector_store %arg21[%c6, %c0_100, %c0_101], %226 {strides = array<i32>} : memref<8x8x8xf32, #tpu.memory_space<vmem>>, vector<1x8x8xf32>,
    %cst_102 = arith.constant dense<0.000000e+00> : vector<8x16xf32>
    %227 = tpu.matmul %223, %210, %cst_102 {dimension_numbers = #tpu.dot_dimension_numbers<[1], [0], [0], [1], [0, 0, 1, 1], [], []>} : vector<8x8xf32>, vector<8x16xf32>, vector<8x16xf32> -> vector<8x16xf32>
    %228 = vector.extract_strided_slice %46 {offsets = [32, 0], sizes = [16, 54], strides = [1, 1]} : vector<64x54xf32> to vector<16x54xf32>
    %cst_103 = arith.constant dense<0.000000e+00> : vector<8x54xf32>
    %229 = tpu.matmul %227, %228, %cst_103 {dimension_numbers = #tpu.dot_dimension_numbers<[1], [0], [0], [1], [0, 0, 1, 1], [], []>} : vector<8x16xf32>, vector<16x54xf32>, vector<8x54xf32> -> vector<8x54xf32>
    %230 = arith.addf %207, %229 : vector<8x54xf32>
    %231 = vector.extract_strided_slice %160 {offsets = [0, 48], sizes = [8, 16], strides = [1, 1]} : vector<8x192xf32> to vector<8x16xf32>
    %232 = vector.extract_strided_slice %160 {offsets = [0, 112], sizes = [8, 16], strides = [1, 1]} : vector<8x192xf32> to vector<8x16xf32>
    %233 = vector.extract_strided_slice %160 {offsets = [0, 176], sizes = [8, 16], strides = [1, 1]} : vector<8x192xf32> to vector<8x16xf32>
    %cst_104 = arith.constant dense<0.000000e+00> : vector<8x8xf32>
    %234 = tpu.matmul %231, %232, %cst_104 {dimension_numbers = #tpu.dot_dimension_numbers<[1], [1], [0], [0], [0, 0, 1, 0], [], []>} : vector<8x16xf32>, vector<8x16xf32>, vector<8x8xf32> -> vector<8x8xf32>
    %cst_105 = arith.constant 2.500000e-01 : f32
    %235 = vector.broadcast %cst_105 : f32 to vector<8x8xf32>
    %236 = arith.mulf %234, %235 : vector<8x8xf32>
    %237 = arith.addf %236, %159 : vector<8x8xf32>
    %cst_106 = arith.constant dense<0xFF800000> : vector<8xf32>
    %238 = vector.multi_reduction <maximumf>, %237, %cst_106 [1] : vector<8x8xf32> to vector<8xf32>
    %239 = vector.shape_cast %238 : vector<8xf32> to vector<8x1xf32>
    %240 = vector.broadcast %239 : vector<8x1xf32> to vector<8x8xf32>
    %241 = arith.subf %237, %240 : vector<8x8xf32>
    %242 = math.exp %241 : vector<8x8xf32>
    %cst_107 = arith.constant dense<0.000000e+00> : vector<8xf32>
    %243 = vector.multi_reduction <add>, %242, %cst_107 [1] : vector<8x8xf32> to vector<8xf32>
    %244 = vector.shape_cast %243 : vector<8xf32> to vector<8x1xf32>
    %245 = vector.broadcast %244 : vector<8x1xf32> to vector<8x8xf32>
    %246 = arith.divf %242, %245 : vector<8x8xf32>
    %c7 = arith.constant 7 : index
    %c0_108 = arith.constant 0 : index
    %c0_109 = arith.constant 0 : index
    %247 = vector.load %arg21[%c7, %c0_108, %c0_109] : memref<8x8x8xf32, #tpu.memory_space<vmem>>, vector<1x8x8xf32>
    %248 = vector.shape_cast %247 : vector<1x8x8xf32> to vector<8x8xf32>
    %249 = vector.shape_cast %246 : vector<8x8xf32> to vector<1x8x8xf32>
    tpu.vector_store %arg21[%c7, %c0_108, %c0_109], %249 {strides = array<i32>} : memref<8x8x8xf32, #tpu.memory_space<vmem>>, vector<1x8x8xf32>,
    %cst_110 = arith.constant dense<0.000000e+00> : vector<8x16xf32>
    %250 = tpu.matmul %246, %233, %cst_110 {dimension_numbers = #tpu.dot_dimension_numbers<[1], [0], [0], [1], [0, 0, 1, 1], [], []>} : vector<8x8xf32>, vector<8x16xf32>, vector<8x16xf32> -> vector<8x16xf32>
    %251 = vector.extract_strided_slice %46 {offsets = [48, 0], sizes = [16, 54], strides = [1, 1]} : vector<64x54xf32> to vector<16x54xf32>
    %cst_111 = arith.constant dense<0.000000e+00> : vector<8x54xf32>
    %252 = tpu.matmul %250, %251, %cst_111 {dimension_numbers = #tpu.dot_dimension_numbers<[1], [0], [0], [1], [0, 0, 1, 1], [], []>} : vector<8x16xf32>, vector<16x54xf32>, vector<8x54xf32> -> vector<8x54xf32>
    %253 = arith.addf %230, %252 : vector<8x54xf32>
    %254 = tpu.concatenate %152, %253 in 0 : vector<8x54xf32>, vector<8x54xf32> -> vector<16x54xf32>
    %255 = vector.broadcast %48 : vector<1x54xf32> to vector<16x54xf32>
    %256 = arith.addf %254, %255 : vector<16x54xf32>
    %257 = arith.addf %40, %256 : vector<16x54xf32>
    %c0_112 = arith.constant 0 : index
    %c0_113 = arith.constant 0 : index
    %c0_114 = arith.constant 0 : index
    %258 = vector.load %arg12[%c0_112, %c0_113, %c0_114] : memref<1x1x54xf32, #tpu.memory_space<vmem>>, vector<1x1x54xf32>
    %259 = vector.shape_cast %258 : vector<1x1x54xf32> to vector<1x54xf32>
    %c0_115 = arith.constant 0 : index
    %c0_116 = arith.constant 0 : index
    %c0_117 = arith.constant 0 : index
    %260 = vector.load %arg13[%c0_115, %c0_116, %c0_117] : memref<1x1x54xf32, #tpu.memory_space<vmem>>, vector<1x1x54xf32>
    %261 = vector.shape_cast %260 : vector<1x1x54xf32> to vector<1x54xf32>
    %cst_118 = arith.constant dense<0.000000e+00> : vector<16xf32>
    %262 = vector.multi_reduction <add>, %257, %cst_118 [1] : vector<16x54xf32> to vector<16xf32>
    %263 = vector.shape_cast %262 : vector<16xf32> to vector<16x1xf32>
    %cst_119 = arith.constant 5.400000e+01 : f32
    %264 = vector.broadcast %cst_119 : f32 to vector<16x1xf32>
    %265 = arith.divf %263, %264 : vector<16x1xf32>
    %266 = vector.broadcast %265 : vector<16x1xf32> to vector<16x54xf32>
    %267 = arith.subf %257, %266 : vector<16x54xf32>
    %268 = arith.mulf %267, %267 : vector<16x54xf32>
    %cst_120 = arith.constant dense<0.000000e+00> : vector<16xf32>
    %269 = vector.multi_reduction <add>, %268, %cst_120 [1] : vector<16x54xf32> to vector<16xf32>
    %270 = vector.shape_cast %269 : vector<16xf32> to vector<16x1xf32>
    %cst_121 = arith.constant 5.400000e+01 : f32
    %271 = vector.broadcast %cst_121 : f32 to vector<16x1xf32>
    %272 = arith.divf %270, %271 : vector<16x1xf32>
    %273 = vector.broadcast %265 : vector<16x1xf32> to vector<16x54xf32>
    %274 = arith.subf %257, %273 : vector<16x54xf32>
    %cst_122 = arith.constant 9.99999974E-6 : f32
    %275 = vector.broadcast %cst_122 : f32 to vector<16x1xf32>
    %276 = arith.addf %272, %275 : vector<16x1xf32>
    %277 = math.rsqrt %276 : vector<16x1xf32>
    %278 = vector.broadcast %277 : vector<16x1xf32> to vector<16x54xf32>
    %279 = arith.mulf %274, %278 : vector<16x54xf32>
    %280 = vector.broadcast %259 : vector<1x54xf32> to vector<16x54xf32>
    %281 = arith.mulf %279, %280 : vector<16x54xf32>
    %282 = vector.broadcast %261 : vector<1x54xf32> to vector<16x54xf32>
    %283 = arith.addf %281, %282 : vector<16x54xf32>
    %c0_123 = arith.constant 0 : index
    %c0_124 = arith.constant 0 : index
    %c0_125 = arith.constant 0 : index
    %284 = vector.load %arg14[%c0_123, %c0_124, %c0_125] : memref<1x54x32xf32, #tpu.memory_space<vmem>>, vector<1x54x32xf32>
    %285 = vector.shape_cast %284 : vector<1x54x32xf32> to vector<54x32xf32>
    %cst_126 = arith.constant dense<0.000000e+00> : vector<16x32xf32>
    %286 = tpu.matmul %283, %285, %cst_126 {dimension_numbers = #tpu.dot_dimension_numbers<[1], [0], [0], [1], [0, 0, 1, 1], [], []>} : vector<16x54xf32>, vector<54x32xf32>, vector<16x32xf32> -> vector<16x32xf32>
    %c0_127 = arith.constant 0 : index
    %c0_128 = arith.constant 0 : index
    %c0_129 = arith.constant 0 : index
    %287 = vector.load %arg15[%c0_127, %c0_128, %c0_129] : memref<1x1x32xf32, #tpu.memory_space<vmem>>, vector<1x1x32xf32>
    %288 = vector.shape_cast %287 : vector<1x1x32xf32> to vector<1x32xf32>
    %289 = vector.broadcast %288 : vector<1x32xf32> to vector<16x32xf32>
    %290 = arith.addf %286, %289 : vector<16x32xf32>
    %cst_130 = arith.constant 0.000000e+00 : f32
    %291 = vector.broadcast %cst_130 : f32 to vector<16x32xf32>
    %292 = arith.maximumf %290, %291 : vector<16x32xf32>
    %c0_131 = arith.constant 0 : index
    %c0_132 = arith.constant 0 : index
    %c0_133 = arith.constant 0 : index
    %293 = vector.load %arg16[%c0_131, %c0_132, %c0_133] : memref<1x32x54xf32, #tpu.memory_space<vmem>>, vector<1x32x54xf32>
    %294 = vector.shape_cast %293 : vector<1x32x54xf32> to vector<32x54xf32>
    %cst_134 = arith.constant dense<0.000000e+00> : vector<16x54xf32>
    %295 = tpu.matmul %292, %294, %cst_134 {dimension_numbers = #tpu.dot_dimension_numbers<[1], [0], [0], [1], [0, 0, 1, 1], [], []>} : vector<16x32xf32>, vector<32x54xf32>, vector<16x54xf32> -> vector<16x54xf32>
    %c0_135 = arith.constant 0 : index
    %c0_136 = arith.constant 0 : index
    %c0_137 = arith.constant 0 : index
    %296 = vector.load %arg17[%c0_135, %c0_136, %c0_137] : memref<1x1x54xf32, #tpu.memory_space<vmem>>, vector<1x1x54xf32>
    %297 = vector.shape_cast %296 : vector<1x1x54xf32> to vector<1x54xf32>
    %298 = vector.broadcast %297 : vector<1x54xf32> to vector<16x54xf32>
    %299 = arith.addf %295, %298 : vector<16x54xf32>
    %300 = arith.addf %283, %299 : vector<16x54xf32>
    %c0_138 = arith.constant 0 : index
    %c0_139 = arith.constant 0 : index
    %c0_140 = arith.constant 0 : index
    %301 = vector.load %arg18[%c0_138, %c0_139, %c0_140] : memref<1x1x54xf32, #tpu.memory_space<vmem>>, vector<1x1x54xf32>
    %302 = vector.shape_cast %301 : vector<1x1x54xf32> to vector<1x54xf32>
    %c0_141 = arith.constant 0 : index
    %c0_142 = arith.constant 0 : index
    %c0_143 = arith.constant 0 : index
    %303 = vector.load %arg19[%c0_141, %c0_142, %c0_143] : memref<1x1x54xf32, #tpu.memory_space<vmem>>, vector<1x1x54xf32>
    %304 = vector.shape_cast %303 : vector<1x1x54xf32> to vector<1x54xf32>
    %cst_144 = arith.constant dense<0.000000e+00> : vector<16xf32>
    %305 = vector.multi_reduction <add>, %300, %cst_144 [1] : vector<16x54xf32> to vector<16xf32>
    %306 = vector.shape_cast %305 : vector<16xf32> to vector<16x1xf32>
    %cst_145 = arith.constant 5.400000e+01 : f32
    %307 = vector.broadcast %cst_145 : f32 to vector<16x1xf32>
    %308 = arith.divf %306, %307 : vector<16x1xf32>
    %309 = vector.broadcast %308 : vector<16x1xf32> to vector<16x54xf32>
    %310 = arith.subf %300, %309 : vector<16x54xf32>
    %311 = arith.mulf %310, %310 : vector<16x54xf32>
    %cst_146 = arith.constant dense<0.000000e+00> : vector<16xf32>
    %312 = vector.multi_reduction <add>, %311, %cst_146 [1] : vector<16x54xf32> to vector<16xf32>
    %313 = vector.shape_cast %312 : vector<16xf32> to vector<16x1xf32>
    %cst_147 = arith.constant 5.400000e+01 : f32
    %314 = vector.broadcast %cst_147 : f32 to vector<16x1xf32>
    %315 = arith.divf %313, %314 : vector<16x1xf32>
    %316 = vector.broadcast %308 : vector<16x1xf32> to vector<16x54xf32>
    %317 = arith.subf %300, %316 : vector<16x54xf32>
    %cst_148 = arith.constant 9.99999974E-6 : f32
    %318 = vector.broadcast %cst_148 : f32 to vector<16x1xf32>
    %319 = arith.addf %315, %318 : vector<16x1xf32>
    %320 = math.rsqrt %319 : vector<16x1xf32>
    %321 = vector.broadcast %320 : vector<16x1xf32> to vector<16x54xf32>
    %322 = arith.mulf %317, %321 : vector<16x54xf32>
    %323 = vector.broadcast %302 : vector<1x54xf32> to vector<16x54xf32>
    %324 = arith.mulf %322, %323 : vector<16x54xf32>
    %325 = vector.broadcast %304 : vector<1x54xf32> to vector<16x54xf32>
    %326 = arith.addf %324, %325 : vector<16x54xf32>
    %c0_149 = arith.constant 0 : index
    %c0_150 = arith.constant 0 : index
    %327 = vector.load %arg20[%c0_149, %c0_150] : memref<16x54xf32, #tpu.memory_space<vmem>>, vector<16x54xf32>
    tpu.vector_store %arg20[%c0_149, %c0_150], %326 {strides = array<i32>} : memref<16x54xf32, #tpu.memory_space<vmem>>, vector<16x54xf32>,
    return
  }
}

</mosaic_0001>

<llo_original>
// kernel: communication_forward.1
$region0: #{communication_forward.1}
  #allocation0 [shape = 'u32[]', space=smem, size = 0x4, offset = 0x4, fixed_abs, tag = 'smem constant byte address 0x4 - core index']
  #allocation1 [shape = 'u32[144,128]{1,0:T(1,128)}', space=vmem, size = 0x12000, scoped, tag = 'internal scratch']
  %s0 = inlined_call_operand.vmem [shape: f32[16,58], index: 0, kind: input, shape index: {}]
  %s1 = inlined_call_operand.hbm [shape: f32[2,8,8], index: 1, kind: input, shape index: {}]
  %s2 = inlined_call_operand.hbm [shape: f32[8,54], index: 2, kind: input, shape index: {}]
  %s3 = inlined_call_operand.hbm [shape: f32[58,54], index: 3, kind: input, shape index: {}]
  %s4 = inlined_call_operand.hbm [shape: f32[1,54], index: 4, kind: input, shape index: {}]
  %s5 = inlined_call_operand.hbm [shape: f32[1,54], index: 5, kind: input, shape index: {}]
  %s6 = inlined_call_operand.vmem [shape: f32[1,54], index: 6, kind: input, shape index: {}]
  %s7 = inlined_call_operand.vmem [shape: f32[1,54], index: 7, kind: input, shape index: {}]
  %s8 = inlined_call_operand.vmem [shape: f32[1,54,192], index: 8, kind: input, shape index: {}]
  %s9 = inlined_call_operand.vmem [shape: f32[1,1,192], index: 9, kind: input, shape index: {}]
  %s10 = inlined_call_operand.hbm [shape: f32[1,64,54], index: 10, kind: input, shape index: {}]
  %s11 = inlined_call_operand.vmem [shape: f32[1,1,54], index: 11, kind: input, shape index: {}]
  %s12 = inlined_call_operand.vmem [shape: f32[1,1,54], index: 12, kind: input, shape index: {}, may-alias: {12,18}]
  %s13 = inlined_call_operand.vmem [shape: f32[1,1,54], index: 13, kind: input, shape index: {}, may-alias: {13,19}]
  %s14 = inlined_call_operand.hbm [shape: f32[1,54,32], index: 14, kind: input, shape index: {}]
  %s15 = inlined_call_operand.vmem [shape: f32[1,1,32], index: 15, kind: input, shape index: {}]
  %s16 = inlined_call_operand.hbm [shape: f32[1,32,54], index: 16, kind: input, shape index: {}]
  %s17 = inlined_call_operand.vmem [shape: f32[1,1,54], index: 17, kind: input, shape index: {}]
  %s18 = inlined_call_operand.vmem [shape: f32[1,1,54], index: 18, kind: input, shape index: {}, may-alias: {12,18}]
  %s19 = inlined_call_operand.vmem [shape: f32[1,1,54], index: 19, kind: input, shape index: {}, may-alias: {13,19}]
  %s20 = inlined_call_operand.hbm [shape: f32[16,54], index: 20, kind: output, shape index: {0}]
  %s21 = inlined_call_operand.hbm [shape: f32[8,8,8], index: 21, kind: output, shape index: {1}]
  %22 = xla_tuple %s20, %s21
  %s23 = sld [smem:[#allocation0]]
  $region130: #{communication_forward.1} parent=0
    _
  %s25 = ssub.s32 1, %s23
  %s26 = scalar_select 0, %s25, %s23
  $region1: #{communication_forward.1} parent=0
    #allocation2 [shape = 'u8[8192]{0}', space=vmem, size = 0x2000, scoped, tag = 'input window, operand 1, single buffered']
    #allocation3 [shape = 's32[1]{0}', space=sflag, size = 0x4, scoped, tag = 'scoped memory for communication_forward.1']
    #allocation4 [shape = 's32[1]{0}', space=sflag, size = 0x4, scoped, tag = 'scoped memory for communication_forward.1']
    #allocation5 [shape = 'u8[4096]{0}', space=vmem, size = 0x1000, scoped, tag = 'input window, operand 2, single buffered']
    #allocation6 [shape = 's32[1]{0}', space=sflag, size = 0x4, scoped, tag = 'scoped memory for communication_forward.1']
    #allocation7 [shape = 'u8[32768]{0}', space=vmem, size = 0x8000, scoped, tag = 'input window, operand 3, single buffered']
    #allocation8 [shape = 'u8[512]{0}', space=vmem, size = 0x400, scoped, tag = 'input window, operand 4, single buffered']
    #allocation9 [shape = 's32[1]{0}', space=sflag, size = 0x4, scoped, tag = 'scoped memory for communication_forward.1']
    #allocation10 [shape = 'u8[512]{0}', space=vmem, size = 0x400, scoped, tag = 'input window, operand 5, single buffered']
    #allocation11 [shape = 'u8[32768]{0}', space=vmem, size = 0x8000, scoped, tag = 'input window, operand 10, single buffered']
    #allocation12 [shape = 's32[1]{0}', space=sflag, size = 0x4, scoped, tag = 'scoped memory for communication_forward.1']
    #allocation13 [shape = 'u8[28672]{0}', space=vmem, size = 0x7000, scoped, tag = 'input window, operand 14, single buffered']
    #allocation14 [shape = 'u8[16384]{0}', space=vmem, size = 0x4000, scoped, tag = 'input window, operand 16, single buffered']
    #allocation15 [shape = 's32[1]{0}', space=sflag, size = 0x4, scoped, tag = 'scoped memory for communication_forward.1']
    #allocation16 [shape = 'u8[8192]{0}', space=vmem, size = 0x2000, scoped, tag = 'output window, operand 0, single buffered']
    #allocation17 [shape = 'u8[32768]{0}', space=vmem, size = 0x8000, scoped, tag = 'output window, operand 1, single buffered']
    #allocation18 [shape = 's32[1]{0}', space=sflag, size = 0x4, scoped, tag = 'scoped memory for communication_forward.1']
    %27 = vsyncpa [#allocation3], 0
    %28 = vsyncpa [#allocation6], 0
    %29 = vsyncpa [#allocation9], 0
    %30 = vsyncpa [#allocation12], 0
    %31 = vsyncpa [#allocation15], 0
    %32 = vsyncpa [#allocation4], 0
    %33 = vsyncpa [#allocation18], 0
    // Predicated region
    $region2: #{communication_forward.1} parent=1 // pred_check
      _
    $region3: #{communication_forward.1} parent=1 // pred_check_branch
      %35 = sbr.rel (0) target = $region5
    $region4: #{communication_forward.1} parent=1 // pred_region
      _
    $region5: #{communication_forward.1} parent=1 // pred_fallthru
      _
    // Predicated region
    $region6: #{communication_forward.1} parent=1 // pred_check
      _
    $region7: #{communication_forward.1} parent=1 // pred_check_branch
      %37 = sbr.rel (0) target = $region9
    $region8: #{communication_forward.1} parent=1 // pred_region
      %s39 = ssub.s32 256, 256
      %40 = vsyncadd [#allocation3], %s39
      %s41 = sshll.u32 [#allocation2], 4
      %s42 = int_to_ptr.vmem [resolvable:$true] %s41
      %47 = dma.hbm_to_vmem [thread:$0]  %s1, 256, %s42, [#allocation3], 128, 128, 8
    $region9: #{communication_forward.1} parent=1 // pred_fallthru
      _
    // Predicated region
    $region10: #{communication_forward.1} parent=1 // pred_check
      _
    $region11: #{communication_forward.1} parent=1 // pred_check_branch
      %49 = sbr.rel (0) target = $region13
    $region12: #{communication_forward.1} parent=1 // pred_region
      %s51 = ssub.s32 128, 128
      %52 = vsyncadd [#allocation6], %s51
      %s54 = sshll.u32 [#allocation5], 4
      %s55 = int_to_ptr.vmem [resolvable:$true] %s54
      %57 = dma.hbm_to_vmem [thread:$0]  %s2, 128, %s55, [#allocation6]
    $region13: #{communication_forward.1} parent=1 // pred_fallthru
      _
    // Predicated region
    $region14: #{communication_forward.1} parent=1 // pred_check
      _
    $region15: #{communication_forward.1} parent=1 // pred_check_branch
      %59 = sbr.rel (0) target = $region17
    $region16: #{communication_forward.1} parent=1 // pred_region
      %s61 = ssub.s32 1024, 1024
      %62 = vsyncadd [#allocation6], %s61
      %s63 = sshll.u32 [#allocation7], 4
      %s64 = int_to_ptr.vmem [resolvable:$true] %s63
      %69 = dma.hbm_to_vmem [thread:$0]  %s3, 1024, %s64, [#allocation6], 128, 128, 8
    $region17: #{communication_forward.1} parent=1 // pred_fallthru
      _
    // Predicated region
    $region18: #{communication_forward.1} parent=1 // pred_check
      _
    $region19: #{communication_forward.1} parent=1 // pred_check_branch
      %71 = sbr.rel (0) target = $region21
    $region20: #{communication_forward.1} parent=1 // pred_region
      %s73 = ssub.s32 16, 16
      %74 = vsyncadd [#allocation9], %s73
      %s76 = sshll.u32 [#allocation8], 4
      %s77 = int_to_ptr.vmem [resolvable:$true] %s76
      %79 = dma.hbm_to_vmem [thread:$0]  %s4, 16, %s77, [#allocation9]
    $region21: #{communication_forward.1} parent=1 // pred_fallthru
      _
    // Predicated region
    $region22: #{communication_forward.1} parent=1 // pred_check
      _
    $region23: #{communication_forward.1} parent=1 // pred_check_branch
      %81 = sbr.rel (0) target = $region25
    $region24: #{communication_forward.1} parent=1 // pred_region
      %s83 = ssub.s32 16, 16
      %84 = vsyncadd [#allocation9], %s83
      %s86 = sshll.u32 [#allocation10], 4
      %s87 = int_to_ptr.vmem [resolvable:$true] %s86
      %89 = dma.hbm_to_vmem [thread:$0]  %s5, 16, %s87, [#allocation9]
    $region25: #{communication_forward.1} parent=1 // pred_fallthru
      _
    // Predicated region
    $region26: #{communication_forward.1} parent=1 // pred_check
      _
    $region27: #{communication_forward.1} parent=1 // pred_check_branch
      %91 = sbr.rel (0) target = $region29
    $region28: #{communication_forward.1} parent=1 // pred_region
      _
    $region29: #{communication_forward.1} parent=1 // pred_fallthru
      _
    // Predicated region
    $region30: #{communication_forward.1} parent=1 // pred_check
      _
    $region31: #{communication_forward.1} parent=1 // pred_check_branch
      %93 = sbr.rel (0) target = $region33
    $region32: #{communication_forward.1} parent=1 // pred_region
      _
    $region33: #{communication_forward.1} parent=1 // pred_fallthru
      _
    // Predicated region
    $region34: #{communication_forward.1} parent=1 // pred_check
      _
    $region35: #{communication_forward.1} parent=1 // pred_check_branch
      %95 = sbr.rel (0) target = $region37
    $region36: #{communication_forward.1} parent=1 // pred_region
      _
    $region37: #{communication_forward.1} parent=1 // pred_fallthru
      _
    // Predicated region
    $region38: #{communication_forward.1} parent=1 // pred_check
      _
    $region39: #{communication_forward.1} parent=1 // pred_check_branch
      %97 = sbr.rel (0) target = $region41
    $region40: #{communication_forward.1} parent=1 // pred_region
      _
    $region41: #{communication_forward.1} parent=1 // pred_fallthru
      _
    // Predicated region
    $region42: #{communication_forward.1} parent=1 // pred_check
      _
    $region43: #{communication_forward.1} parent=1 // pred_check_branch
      %99 = sbr.rel (0) target = $region45
    $region44: #{communication_forward.1} parent=1 // pred_region
      %s101 = ssub.s32 1024, 1024
      %102 = vsyncadd [#allocation12], %s101
      %s103 = sshll.u32 [#allocation11], 4
      %s104 = int_to_ptr.vmem [resolvable:$true] %s103
      %109 = dma.hbm_to_vmem [thread:$0]  %s10, 1024, %s104, [#allocation12], 128, 128, 8
    $region45: #{communication_forward.1} parent=1 // pred_fallthru
      _
    // Predicated region
    $region46: #{communication_forward.1} parent=1 // pred_check
      _
    $region47: #{communication_forward.1} parent=1 // pred_check_branch
      %111 = sbr.rel (0) target = $region49
    $region48: #{communication_forward.1} parent=1 // pred_region
      _
    $region49: #{communication_forward.1} parent=1 // pred_fallthru
      _
    // Predicated region
    $region50: #{communication_forward.1} parent=1 // pred_check
      _
    $region51: #{communication_forward.1} parent=1 // pred_check_branch
      %113 = sbr.rel (0) target = $region53
    $region52: #{communication_forward.1} parent=1 // pred_region
      _
    $region53: #{communication_forward.1} parent=1 // pred_fallthru
      _
    // Predicated region
    $region54: #{communication_forward.1} parent=1 // pred_check
      _
    $region55: #{communication_forward.1} parent=1 // pred_check_branch
      %115 = sbr.rel (0) target = $region57
    $region56: #{communication_forward.1} parent=1 // pred_region
      _
    $region57: #{communication_forward.1} parent=1 // pred_fallthru
      _
    // Predicated region
    $region58: #{communication_forward.1} parent=1 // pred_check
      _
    $region59: #{communication_forward.1} parent=1 // pred_check_branch
      %117 = sbr.rel (0) target = $region61
    $region60: #{communication_forward.1} parent=1 // pred_region
      %s119 = ssub.s32 896, 896
      %120 = vsyncadd [#allocation12], %s119
      %s121 = sshll.u32 [#allocation13], 4
      %s122 = int_to_ptr.vmem [resolvable:$true] %s121
      %127 = dma.hbm_to_vmem [thread:$0]  %s14, 896, %s122, [#allocation12], 128, 128, 8
    $region61: #{communication_forward.1} parent=1 // pred_fallthru
      _
    // Predicated region
    $region62: #{communication_forward.1} parent=1 // pred_check
      _
    $region63: #{communication_forward.1} parent=1 // pred_check_branch
      %129 = sbr.rel (0) target = $region65
    $region64: #{communication_forward.1} parent=1 // pred_region
      _
    $region65: #{communication_forward.1} parent=1 // pred_fallthru
      _
    // Predicated region
    $region66: #{communication_forward.1} parent=1 // pred_check
      _
    $region67: #{communication_forward.1} parent=1 // pred_check_branch
      %131 = sbr.rel (0) target = $region69
    $region68: #{communication_forward.1} parent=1 // pred_region
      %s133 = ssub.s32 512, 512
      %134 = vsyncadd [#allocation15], %s133
      %s135 = sshll.u32 [#allocation14], 4
      %s136 = int_to_ptr.vmem [resolvable:$true] %s135
      %141 = dma.hbm_to_vmem [thread:$0]  %s16, 512, %s136, [#allocation15], 128, 128, 8
    $region69: #{communication_forward.1} parent=1 // pred_fallthru
      _
    // Predicated region
    $region70: #{communication_forward.1} parent=1 // pred_check
      _
    $region71: #{communication_forward.1} parent=1 // pred_check_branch
      %143 = sbr.rel (0) target = $region73
    $region72: #{communication_forward.1} parent=1 // pred_region
      _
    $region73: #{communication_forward.1} parent=1 // pred_fallthru
      _
    // Predicated region
    $region74: #{communication_forward.1} parent=1 // pred_check
      _
    $region75: #{communication_forward.1} parent=1 // pred_check_branch
      %145 = sbr.rel (0) target = $region77
    $region76: #{communication_forward.1} parent=1 // pred_region
      _
    $region77: #{communication_forward.1} parent=1 // pred_fallthru
      _
    // Predicated region
    $region78: #{communication_forward.1} parent=1 // pred_check
      _
    $region79: #{communication_forward.1} parent=1 // pred_check_branch
      %147 = sbr.rel (0) target = $region81
    $region80: #{communication_forward.1} parent=1 // pred_region
      _
    $region81: #{communication_forward.1} parent=1 // pred_fallthru
      _
    // Predicated region
    $region82: #{communication_forward.1} parent=1 // pred_check
      _
    $region83: #{communication_forward.1} parent=1 // pred_check_branch
      %149 = sbr.rel (0) target = $region85
    $region84: #{communication_forward.1} parent=1 // pred_region
      %150 = dma.done [#allocation3], 256
    $region85: #{communication_forward.1} parent=1 // pred_fallthru
      _
    // Predicated region
    $region86: #{communication_forward.1} parent=1 // pred_check
      _
    $region87: #{communication_forward.1} parent=1 // pred_check_branch
      %152 = sbr.rel (0) target = $region89
    $region88: #{communication_forward.1} parent=1 // pred_region
      %153 = dma.done [#allocation6], 128
    $region89: #{communication_forward.1} parent=1 // pred_fallthru
      _
    // Predicated region
    $region90: #{communication_forward.1} parent=1 // pred_check
      _
    $region91: #{communication_forward.1} parent=1 // pred_check_branch
      %155 = sbr.rel (0) target = $region93
    $region92: #{communication_forward.1} parent=1 // pred_region
      %156 = dma.done [#allocation6], 1024
    $region93: #{communication_forward.1} parent=1 // pred_fallthru
      _
    // Predicated region
    $region94: #{communication_forward.1} parent=1 // pred_check
      _
    $region95: #{communication_forward.1} parent=1 // pred_check_branch
      %158 = sbr.rel (0) target = $region97
    $region96: #{communication_forward.1} parent=1 // pred_region
      %159 = dma.done [#allocation9], 16
    $region97: #{communication_forward.1} parent=1 // pred_fallthru
      _
    // Predicated region
    $region98: #{communication_forward.1} parent=1 // pred_check
      _
    $region99: #{communication_forward.1} parent=1 // pred_check_branch
      %161 = sbr.rel (0) target = $region101
    $region100: #{communication_forward.1} parent=1 // pred_region
      %162 = dma.done [#allocation9], 16
    $region101: #{communication_forward.1} parent=1 // pred_fallthru
      _
    // Predicated region
    $region102: #{communication_forward.1} parent=1 // pred_check
      _
    $region103: #{communication_forward.1} parent=1 // pred_check_branch
      %164 = sbr.rel (0) target = $region105
    $region104: #{communication_forward.1} parent=1 // pred_region
      %165 = dma.done [#allocation12], 1024
    $region105: #{communication_forward.1} parent=1 // pred_fallthru
      _
    // Predicated region
    $region106: #{communication_forward.1} parent=1 // pred_check
      _
    $region107: #{communication_forward.1} parent=1 // pred_check_branch
      %167 = sbr.rel (0) target = $region109
    $region108: #{communication_forward.1} parent=1 // pred_region
      %168 = dma.done [#allocation12], 896
    $region109: #{communication_forward.1} parent=1 // pred_fallthru
      _
    // Predicated region
    $region110: #{communication_forward.1} parent=1 // pred_check
      _
    $region111: #{communication_forward.1} parent=1 // pred_check_branch
      %170 = sbr.rel (0) target = $region113
    $region112: #{communication_forward.1} parent=1 // pred_region
      %171 = dma.done [#allocation15], 512
    $region113: #{communication_forward.1} parent=1 // pred_fallthru
      _
    %v172 = vld [vmem:[%s0] sm:$0xff]
    %v173 = vld [vmem:[%s0 + $0x8] sm:$0xff]
    %v174 = vld [vmem:[#allocation7] sm:$0xff]
    %v175 = vld [vmem:[#allocation7 + $0x8] sm:$0xff]
    %v176 = vld [vmem:[#allocation7 + $0x10] sm:$0xff]
    %v177 = vld [vmem:[#allocation7 + $0x18] sm:$0xff]
    %v178 = vld [vmem:[#allocation7 + $0x20] sm:$0xff]
    %v179 = vld [vmem:[#allocation7 + $0x28] sm:$0xff]
    %v180 = vld [vmem:[#allocation7 + $0x30] sm:$0xff]
    %v181 = vld [vmem:[#allocation7 + $0x38] sm:$0x3]
    %v182 = vld [vmem:[#allocation8] sm:$0x1]
    %v184 = vlaneseq
    %v185 = vshrl.u32 %v184, 7
    %v186 = vsub.s32 0, %v185
    %v187 = vrot.slane %v182, %v186
    %vm189 = vcmask 474112
    %v191 = vsel %vm189, %v172, 0
    %v194 = vsel %vm189, %v173, 0
    %vm196 = vcmask 1041408
    %v198 = vsel %vm196, %v181, 0
    %200 = vmatprep.subr.mxu0 0.0
    %201 = vmatpush1.msra.mxu0 %v174
    %202 = vmatprep.subr.mxu0 0.0
    %203 = vmatpush1.msra.mxu0 %v175
    %204 = vmatprep.subr.mxu0 0.0
    %205 = vmatpush1.msra.mxu0 %v176
    %206 = vmatprep.subr.mxu0 0.0
    %207 = vmatpush1.msra.mxu0 %v177
    %208 = vmatprep.subr.mxu0 0.0
    %209 = vmatpush1.msra.mxu0 %v178
    %210 = vmatprep.subr.mxu0 0.0
    %211 = vmatpush1.msra.mxu0 %v179
    %212 = vmatprep.subr.mxu0 0.0
    %213 = vmatpush1.msra.mxu0 %v180
    %214 = vmatprep.subr.mxu0 0.0
    %215 = vmatpush1.msra.mxu0 %v198
    %216 = vmatprep.subr.mxu0 0.0
    %217 = vmatpush1.msra.mxu0 0.0
    %218 = vmatprep.subr.mxu0 0.0
    %219 = vmatpush1.msra.mxu0 0.0
    %220 = vmatprep.subr.mxu0 0.0
    %221 = vmatpush1.msra.mxu0 0.0
    %222 = vmatprep.subr.mxu0 0.0
    %223 = vmatpush1.msra.mxu0 0.0
    %224 = vmatprep.subr.mxu0 0.0
    %225 = vmatpush1.msra.mxu0 0.0
    %226 = vmatprep.subr.mxu0 0.0
    %227 = vmatpush1.msra.mxu0 0.0
    %228 = vmatprep.subr.mxu0 0.0
    %229 = vmatpush1.msra.mxu0 0.0
    %230 = vmatprep.subr.mxu0 0.0
    %231 = vmatpush1.msra.mxu0 0.0
    %232 = vmatprep.subr.mxu0 0.0
    %233 = vmatpush1.msra.mxu0 0.0
    %234 = vmatprep.subr.mxu0 0.0
    %235 = vmatpush1.msra.mxu0 0.0
    %236 = vmatprep.subr.mxu0 0.0
    %237 = vmatpush1.msra.mxu0 0.0
    %238 = vmatprep.subr.mxu0 0.0
    %239 = vmatpush1.msra.mxu0 0.0
    %240 = vmatprep.subr.mxu0 0.0
    %241 = vmatpush1.msra.mxu0 0.0
    %242 = vmatprep.subr.mxu0 0.0
    %243 = vmatpush1.msra.mxu0 0.0
    %244 = vmatprep.subr.mxu0 0.0
    %245 = vmatpush1.msra.mxu0 0.0
    %246 = vmatprep.subr.mxu0 0.0
    %247 = vmatpush1.msra.mxu0 0.0
    %248 = vmatprep.subr.mxu0 0.0
    %249 = vmatpush1.msra.mxu0 0.0
    %250 = vmatprep.subr.mxu0 0.0
    %251 = vmatpush1.msra.mxu0 0.0
    %252 = vmatprep.subr.mxu0 0.0
    %253 = vmatpush1.msra.mxu0 0.0
    %254 = vmatprep.subr.mxu0 0.0
    %255 = vmatpush1.msra.mxu0 0.0
    %256 = vmatprep.subr.mxu0 0.0
    %257 = vmatpush1.msra.mxu0 0.0
    %258 = vmatprep.subr.mxu0 0.0
    %259 = vmatpush1.msra.mxu0 0.0
    %260 = vmatprep.subr.mxu0 0.0
    %261 = vmatpush1.msra.mxu0 0.0
    %262 = vmatprep.subr.mxu0 0.0
    %263 = vmatpush1.msra.mxu0 0.0
    %264 = vmatprep.mubr.f32.mxu0 0.0
    %265 = vmatmul.mubr.f32.gmra.mrb[0].mxu0 %v191
    %v266 = vpop.f32.mrb[0].mxu0
    %v267 = vadd.f32 %v187, %v266
    %v268 = vpop.f32.mrb[0].mxu0
    %269 = vmatprep.mubr.f32.mxu0 0.0
    %270 = vmatmul.mubr.f32.gmra.mrb[0].mxu0 %v194
    %v271 = vpop.f32.mrb[0].mxu0
    %v272 = vadd.f32 %v187, %v271
    %v273 = vpop.f32.mrb[0].mxu0
    %274 = vdwg.mxu0
    %v275 = vld [vmem:[#allocation10] sm:$0x1]
    %vm276 = vcmp.gt.f32.partialorder %v275, 0.0
    %v277 = vmax.f32 %v267, 0.0
    %v278 = vmax.f32 %v272, 0.0
    %v279 = vsel %vm276, 1, 0
    %v280 = vlaneseq
    %v281 = vshrl.u32 %v280, 7
    %v282 = vsub.s32 0, %v281
    %v283 = vrot.slane %v279, %v282
    %vm284 = vcmp.eq.s32.totalorder %v283, 1
    %v285 = vsel %vm284, %v277, %v267
    %v286 = vsel %vm284, %v278, %v272
    %v287 = vld [vmem:[#allocation5] sm:$0xff]
    %v288 = vadd.f32 %v285, %v287
    %v289 = vadd.f32 %v286, %v287
    %v290 = vld [vmem:[%s6] sm:$0x1]
    %v291 = vld [vmem:[%s7] sm:$0x1]
    %vm292 = vcmask 441344
    %v293 = vsel %vm292, %v288, 0.0
    %294 = vadd.xlane.f32.xlu0 %v293
    %v295 = vpop.xlane.xlu0 %294
    %v296 = vsel %vm292, %v289, 0.0
    %297 = vadd.xlane.f32.xlu0 %v296
    %v298 = vpop.xlane.xlu0 %297
    %v299 = vrcp.pop 54.0
    %v300 = vmul.f32 %v295, %v299
    %v301 = vmul.f32 %v298, %v299
    %v302 = vsub.f32 %v288, %v300
    %v303 = vsub.f32 %v289, %v301
    %v304 = vmul.f32 %v302, %v302
    %v305 = vmul.f32 %v303, %v303
    %v306 = vsel %vm292, %v304, 0.0
    %307 = vadd.xlane.f32.xlu0 %v306
    %v308 = vpop.xlane.xlu0 %307
    %v309 = vsel %vm292, %v305, 0.0
    %310 = vadd.xlane.f32.xlu0 %v309
    %v311 = vpop.xlane.xlu0 %310
    %v312 = vmul.f32 %v308, %v299
    %v313 = vmul.f32 %v311, %v299
    %v314 = vadd.f32 %v312, 1e-05
    %v315 = vadd.f32 %v313, 1e-05
    %v316 = vrsqrt.pop %v314
    %v317 = vrsqrt.pop %v315
    %v318 = vmul.f32 %v302, %v316
    %v319 = vmul.f32 %v303, %v317
    %v321 = vlaneseq
    %v322 = vshrl.u32 %v321, 7
    %v323 = vsub.s32 0, %v322
    %v324 = vrot.slane %v290, %v323
    %v326 = vmul.f32 %v318, %v324
    %v327 = vmul.f32 %v319, %v324
    %v329 = vlaneseq
    %v330 = vshrl.u32 %v329, 7
    %v331 = vsub.s32 0, %v330
    %v332 = vrot.slane %v291, %v331
    %v334 = vadd.f32 %v326, %v332
    %v335 = vadd.f32 %v327, %v332
    %v336 = vld [vmem:[%s8] sm:$0xff]
    %v337 = vld [vmem:[%s8 + $0x8] sm:$0xff]
    %v338 = vld [vmem:[%s8 + $0x10] sm:$0xff]
    %v339 = vld [vmem:[%s8 + $0x18] sm:$0xff]
    %v340 = vld [vmem:[%s8 + $0x20] sm:$0xff]
    %v341 = vld [vmem:[%s8 + $0x28] sm:$0xff]
    %v342 = vld [vmem:[%s8 + $0x30] sm:$0xff]
    %v343 = vld [vmem:[%s8 + $0x38] sm:$0xff]
    %v344 = vld [vmem:[%s8 + $0x40] sm:$0xff]
    %v345 = vld [vmem:[%s8 + $0x48] sm:$0xff]
    %v346 = vld [vmem:[%s8 + $0x50] sm:$0xff]
    %v347 = vld [vmem:[%s8 + $0x58] sm:$0xff]
    %v348 = vld [vmem:[%s8 + $0x60] sm:$0x3f]
    %v349 = vld [vmem:[%s8 + $0x68] sm:$0x3f]
    %v350 = vld [vmem:[%s9] sm:$0x3]
    %v351 = vld [vmem:[#allocation11] sm:$0xff]
    %v352 = vld [vmem:[#allocation11 + $0x8] sm:$0xff]
    %v353 = vld [vmem:[#allocation11 + $0x10] sm:$0xff]
    %v354 = vld [vmem:[#allocation11 + $0x18] sm:$0xff]
    %v355 = vld [vmem:[#allocation11 + $0x20] sm:$0xff]
    %v356 = vld [vmem:[#allocation11 + $0x28] sm:$0xff]
    %v357 = vld [vmem:[#allocation11 + $0x30] sm:$0xff]
    %v358 = vld [vmem:[#allocation11 + $0x38] sm:$0xff]
    %v359 = vld [vmem:[%s11] sm:$0x1]
    %v361 = vlaneseq
    %v362 = vshrl.u32 %v361, 7
    %v363 = vsub.s32 0, %v362
    %v364 = vrot.slane %v350, %v363
    %v365 = vlaneseq
    %v366 = vshrl.u32 %v365, 7
    %v367 = vsub.s32 1, %v366
    %v368 = vrot.slane %v350, %v367
    %v372 = vsel %vm292, %v334, 0
    %v375 = vsel %vm292, %v335, 0
    %vm377 = vcmask 1045504
    %v379 = vsel %vm377, %v348, 0
    %v382 = vsel %vm377, %v349, 0
    %384 = vmatprep.subr.mxu0 %v337
    %385 = vmatpush1.msra.mxu0 %v336
    %386 = vmatprep.subr.mxu0 %v339
    %387 = vmatpush1.msra.mxu0 %v338
    %388 = vmatprep.subr.mxu0 %v341
    %389 = vmatpush1.msra.mxu0 %v340
    %390 = vmatprep.subr.mxu0 %v343
    %391 = vmatpush1.msra.mxu0 %v342
    %392 = vmatprep.subr.mxu0 %v345
    %393 = vmatpush1.msra.mxu0 %v344
    %394 = vmatprep.subr.mxu0 %v347
    %395 = vmatpush1.msra.mxu0 %v346
    %396 = vmatprep.subr.mxu0 %v382
    %397 = vmatpush1.msra.mxu0 %v379
    %398 = vmatprep.subr.mxu0 0.0
    %399 = vmatpush1.msra.mxu0 0.0
    %400 = vmatprep.subr.mxu0 0.0
    %401 = vmatpush1.msra.mxu0 0.0
    %402 = vmatprep.subr.mxu0 0.0
    %403 = vmatpush1.msra.mxu0 0.0
    %404 = vmatprep.subr.mxu0 0.0
    %405 = vmatpush1.msra.mxu0 0.0
    %406 = vmatprep.subr.mxu0 0.0
    %407 = vmatpush1.msra.mxu0 0.0
    %408 = vmatprep.subr.mxu0 0.0
    %409 = vmatpush1.msra.mxu0 0.0
    %410 = vmatprep.subr.mxu0 0.0
    %411 = vmatpush1.msra.mxu0 0.0
    %412 = vmatprep.subr.mxu0 0.0
    %413 = vmatpush1.msra.mxu0 0.0
    %414 = vmatprep.subr.mxu0 0.0
    %415 = vmatpush1.msra.mxu0 0.0
    %416 = vmatprep.subr.mxu0 0.0
    %417 = vmatpush1.msra.mxu0 0.0
    %418 = vmatprep.subr.mxu0 0.0
    %419 = vmatpush1.msra.mxu0 0.0
    %420 = vmatprep.subr.mxu0 0.0
    %421 = vmatpush1.msra.mxu0 0.0
    %422 = vmatprep.subr.mxu0 0.0
    %423 = vmatpush1.msra.mxu0 0.0
    %424 = vmatprep.subr.mxu0 0.0
    %425 = vmatpush1.msra.mxu0 0.0
    %426 = vmatprep.subr.mxu0 0.0
    %427 = vmatpush1.msra.mxu0 0.0
    %428 = vmatprep.subr.mxu0 0.0
    %429 = vmatpush1.msra.mxu0 0.0
    %430 = vmatprep.subr.mxu0 0.0
    %431 = vmatpush1.msra.mxu0 0.0
    %432 = vmatprep.subr.mxu0 0.0
    %433 = vmatpush1.msra.mxu0 0.0
    %434 = vmatprep.subr.mxu0 0.0
    %435 = vmatpush1.msra.mxu0 0.0
    %436 = vmatprep.subr.mxu0 0.0
    %437 = vmatpush1.msra.mxu0 0.0
    %438 = vmatprep.subr.mxu0 0.0
    %439 = vmatpush1.msra.mxu0 0.0
    %440 = vmatprep.subr.mxu0 0.0
    %441 = vmatpush1.msra.mxu0 0.0
    %442 = vmatprep.subr.mxu0 0.0
    %443 = vmatpush1.msra.mxu0 0.0
    %444 = vmatprep.subr.mxu0 0.0
    %445 = vmatpush1.msra.mxu0 0.0
    %446 = vmatprep.subr.mxu0 0.0
    %447 = vmatpush1.msra.mxu0 0.0
    %448 = vmatprep.mubr.f32.mxu0 0.0
    %449 = vmatmul.mubr.f32.gmra.mrb[0].mxu0 %v372
    %v450 = vpop.f32.mrb[0].mxu0
    %v451 = vadd.f32 %v364, %v450
    %v452 = vpop.f32.mrb[0].mxu0
    %v453 = vadd.f32 %v368, %v452
    %454 = vmatprep.mubr.f32.mxu0 0.0
    %455 = vmatmul.mubr.f32.gmra.mrb[0].mxu0 %v375
    %v456 = vpop.f32.mrb[0].mxu0
    %v457 = vadd.f32 %v364, %v456
    %v458 = vpop.f32.mrb[0].mxu0
    %v459 = vadd.f32 %v368, %v458
    %460 = vdwg.mxu0
    %v461 = vld [vmem:[#allocation2] sm:$0xff]
    %vm462 = vcmp.gt.f32.partialorder %v461, 0.0
    %v463 = vsel %vm462, 0.0, -1e+09
    %465 = vrot.lane.b32.xlu0 %v451, 64
    %v466 = vpop.permute.xlu0 %465
    %vm467 = vcmask 130048
    %v468 = vsel %vm467, %v451, 0
    %v470 = vsel %vm467, %v466, 0
    %472 = vmatprep.subr.mxu0 0.0
    %473 = vmatpush1.xpose.msra.mxu0 %v470
    %474 = vmatprep.subr.mxu0 0.0
    %475 = vmatpush1.xpose.msra.mxu0 0.0
    %476 = vmatprep.subr.mxu0 0.0
    %477 = vmatpush1.xpose.msra.mxu0 0.0
    %478 = vmatprep.subr.mxu0 0.0
    %479 = vmatpush1.xpose.msra.mxu0 0.0
    %480 = vmatprep.subr.mxu0 0.0
    %481 = vmatpush1.xpose.msra.mxu0 0.0
    %482 = vmatprep.subr.mxu0 0.0
    %483 = vmatpush1.xpose.msra.mxu0 0.0
    %484 = vmatprep.subr.mxu0 0.0
    %485 = vmatpush1.xpose.msra.mxu0 0.0
    %486 = vmatprep.subr.mxu0 0.0
    %487 = vmatpush1.xpose.msra.mxu0 0.0
    %488 = vmatprep.subr.mxu0 0.0
    %489 = vmatpush1.xpose.msra.mxu0 0.0
    %490 = vmatprep.subr.mxu0 0.0
    %491 = vmatpush1.xpose.msra.mxu0 0.0
    %492 = vmatprep.subr.mxu0 0.0
    %493 = vmatpush1.xpose.msra.mxu0 0.0
    %494 = vmatprep.subr.mxu0 0.0
    %495 = vmatpush1.xpose.msra.mxu0 0.0
    %496 = vmatprep.subr.mxu0 0.0
    %497 = vmatpush1.xpose.msra.mxu0 0.0
    %498 = vmatprep.subr.mxu0 0.0
    %499 = vmatpush1.xpose.msra.mxu0 0.0
    %500 = vmatprep.subr.mxu0 0.0
    %501 = vmatpush1.xpose.msra.mxu0 0.0
    %502 = vmatprep.subr.mxu0 0.0
    %503 = vmatpush1.xpose.msra.mxu0 0.0
    %504 = vmatprep.subr.mxu0 0.0
    %505 = vmatpush1.xpose.msra.mxu0 0.0
    %506 = vmatprep.subr.mxu0 0.0
    %507 = vmatpush1.xpose.msra.mxu0 0.0
    %508 = vmatprep.subr.mxu0 0.0
    %509 = vmatpush1.xpose.msra.mxu0 0.0
    %510 = vmatprep.subr.mxu0 0.0
    %511 = vmatpush1.xpose.msra.mxu0 0.0
    %512 = vmatprep.subr.mxu0 0.0
    %513 = vmatpush1.xpose.msra.mxu0 0.0
    %514 = vmatprep.subr.mxu0 0.0
    %515 = vmatpush1.xpose.msra.mxu0 0.0
    %516 = vmatprep.subr.mxu0 0.0
    %517 = vmatpush1.xpose.msra.mxu0 0.0
    %518 = vmatprep.subr.mxu0 0.0
    %519 = vmatpush1.xpose.msra.mxu0 0.0
    %520 = vmatprep.subr.mxu0 0.0
    %521 = vmatpush1.xpose.msra.mxu0 0.0
    %522 = vmatprep.subr.mxu0 0.0
    %523 = vmatpush1.xpose.msra.mxu0 0.0
    %524 = vmatprep.subr.mxu0 0.0
    %525 = vmatpush1.xpose.msra.mxu0 0.0
    %526 = vmatprep.subr.mxu0 0.0
    %527 = vmatpush1.xpose.msra.mxu0 0.0
    %528 = vmatprep.subr.mxu0 0.0
    %529 = vmatpush1.xpose.msra.mxu0 0.0
    %530 = vmatprep.subr.mxu0 0.0
    %531 = vmatpush1.xpose.msra.mxu0 0.0
    %532 = vmatprep.subr.mxu0 0.0
    %533 = vmatpush1.xpose.msra.mxu0 0.0
    %534 = vmatprep.subr.mxu0 0.0
    %535 = vmatpush1.xpose.msra.mxu0 0.0
    %536 = vmatprep.mubr.f32.mxu0 0.0
    %537 = vmatmul.mubr.f32.gmra.mrb[0].mxu0 %v468
    %v538 = vpop.f32.mrb[0].mxu0
    %v539 = vadd.f32 0.0, %v538
    %v540 = vpop.f32.mrb[0].mxu0
    %541 = vdwg.mxu0
    %v542 = vmul.f32 %v539, 0.25
    %v543 = vadd.f32 %v542, %v463
    %vm544 = vcmask 64512
    %v545 = vsel %vm544, %v543, -inf
    %546 = vmax.xlane.f32.xlu0 %v545
    %v547 = vpop.xlane.xlu0 %546
    %v548 = vsub.f32 %v543, %v547
    %v549 = vmul.f32 %v548, 1.442695
    %v550 = vpow.pop %v549
    %v551 = vsel %vm544, %v550, 0.0
    %552 = vadd.xlane.f32.xlu0 %v551
    %v553 = vpop.xlane.xlu0 %552
    %v554 = vrcp.pop %v553
    %v555 = vmul.f32 %v550, %v554
    %556 = vst.msk [vmem:[#allocation17] sm:$0xff] %vm544, %v555
    %v558 = vsel %vm544, %v555, 0
    %560 = vmatprep.subr.mxu0 0.0
    %561 = vmatpush1.msra.mxu0 %v453
    %562 = vmatprep.subr.mxu0 0.0
    %563 = vmatpush1.msra.mxu0 0.0
    %564 = vmatprep.subr.mxu0 0.0
    %565 = vmatpush1.msra.mxu0 0.0
    %566 = vmatprep.subr.mxu0 0.0
    %567 = vmatpush1.msra.mxu0 0.0
    %568 = vmatprep.subr.mxu0 0.0
    %569 = vmatpush1.msra.mxu0 0.0
    %570 = vmatprep.subr.mxu0 0.0
    %571 = vmatpush1.msra.mxu0 0.0
    %572 = vmatprep.subr.mxu0 0.0
    %573 = vmatpush1.msra.mxu0 0.0
    %574 = vmatprep.subr.mxu0 0.0
    %575 = vmatpush1.msra.mxu0 0.0
    %576 = vmatprep.subr.mxu0 0.0
    %577 = vmatpush1.msra.mxu0 0.0
    %578 = vmatprep.subr.mxu0 0.0
    %579 = vmatpush1.msra.mxu0 0.0
    %580 = vmatprep.subr.mxu0 0.0
    %581 = vmatpush1.msra.mxu0 0.0
    %582 = vmatprep.subr.mxu0 0.0
    %583 = vmatpush1.msra.mxu0 0.0
    %584 = vmatprep.subr.mxu0 0.0
    %585 = vmatpush1.msra.mxu0 0.0
    %586 = vmatprep.subr.mxu0 0.0
    %587 = vmatpush1.msra.mxu0 0.0
    %588 = vmatprep.subr.mxu0 0.0
    %589 = vmatpush1.msra.mxu0 0.0
    %590 = vmatprep.subr.mxu0 0.0
    %591 = vmatpush1.msra.mxu0 0.0
    %592 = vmatprep.subr.mxu0 0.0
    %593 = vmatpush1.msra.mxu0 0.0
    %594 = vmatprep.subr.mxu0 0.0
    %595 = vmatpush1.msra.mxu0 0.0
    %596 = vmatprep.subr.mxu0 0.0
    %597 = vmatpush1.msra.mxu0 0.0
    %598 = vmatprep.subr.mxu0 0.0
    %599 = vmatpush1.msra.mxu0 0.0
    %600 = vmatprep.subr.mxu0 0.0
    %601 = vmatpush1.msra.mxu0 0.0
    %602 = vmatprep.subr.mxu0 0.0
    %603 = vmatpush1.msra.mxu0 0.0
    %604 = vmatprep.subr.mxu0 0.0
    %605 = vmatpush1.msra.mxu0 0.0
    %606 = vmatprep.subr.mxu0 0.0
    %607 = vmatpush1.msra.mxu0 0.0
    %608 = vmatprep.subr.mxu0 0.0
    %609 = vmatpush1.msra.mxu0 0.0
    %610 = vmatprep.subr.mxu0 0.0
    %611 = vmatpush1.msra.mxu0 0.0
    %612 = vmatprep.subr.mxu0 0.0
    %613 = vmatpush1.msra.mxu0 0.0
    %614 = vmatprep.subr.mxu0 0.0
    %615 = vmatpush1.msra.mxu0 0.0
    %616 = vmatprep.subr.mxu0 0.0
    %617 = vmatpush1.msra.mxu0 0.0
    %618 = vmatprep.subr.mxu0 0.0
    %619 = vmatpush1.msra.mxu0 0.0
    %620 = vmatprep.subr.mxu0 0.0
    %621 = vmatpush1.msra.mxu0 0.0
    %622 = vmatprep.subr.mxu0 0.0
    %623 = vmatpush1.msra.mxu0 0.0
    %624 = vmatprep.mubr.f32.mxu0 0.0
    %625 = vmatmul.mubr.f32.gmra.mrb[0].mxu0 %v558
    %v626 = vpop.f32.mrb[0].mxu0
    %v627 = vadd.f32 0.0, %v626
    %v628 = vpop.f32.mrb[0].mxu0
    %629 = vdwg.mxu0
    %630 = vrot.lane.b32.xlu0 %v451, 112
    %v631 = vpop.permute.xlu0 %630
    %632 = vrot.lane.b32.xlu0 %v451, 48
    %v633 = vpop.permute.xlu0 %632
    %v634 = vsel %vm467, %v631, 0
    %v636 = vsel %vm467, %v633, 0
    %638 = vmatprep.subr.mxu0 0.0
    %639 = vmatpush1.xpose.msra.mxu0 %v636
    %640 = vmatprep.subr.mxu0 0.0
    %641 = vmatpush1.xpose.msra.mxu0 0.0
    %642 = vmatprep.subr.mxu0 0.0
    %643 = vmatpush1.xpose.msra.mxu0 0.0
    %644 = vmatprep.subr.mxu0 0.0
    %645 = vmatpush1.xpose.msra.mxu0 0.0
    %646 = vmatprep.subr.mxu0 0.0
    %647 = vmatpush1.xpose.msra.mxu0 0.0
    %648 = vmatprep.subr.mxu0 0.0
    %649 = vmatpush1.xpose.msra.mxu0 0.0
    %650 = vmatprep.subr.mxu0 0.0
    %651 = vmatpush1.xpose.msra.mxu0 0.0
    %652 = vmatprep.subr.mxu0 0.0
    %653 = vmatpush1.xpose.msra.mxu0 0.0
    %654 = vmatprep.subr.mxu0 0.0
    %655 = vmatpush1.xpose.msra.mxu0 0.0
    %656 = vmatprep.subr.mxu0 0.0
    %657 = vmatpush1.xpose.msra.mxu0 0.0
    %658 = vmatprep.subr.mxu0 0.0
    %659 = vmatpush1.xpose.msra.mxu0 0.0
    %660 = vmatprep.subr.mxu0 0.0
    %661 = vmatpush1.xpose.msra.mxu0 0.0
    %662 = vmatprep.subr.mxu0 0.0
    %663 = vmatpush1.xpose.msra.mxu0 0.0
    %664 = vmatprep.subr.mxu0 0.0
    %665 = vmatpush1.xpose.msra.mxu0 0.0
    %666 = vmatprep.subr.mxu0 0.0
    %667 = vmatpush1.xpose.msra.mxu0 0.0
    %668 = vmatprep.subr.mxu0 0.0
    %669 = vmatpush1.xpose.msra.mxu0 0.0
    %670 = vmatprep.subr.mxu0 0.0
    %671 = vmatpush1.xpose.msra.mxu0 0.0
    %672 = vmatprep.subr.mxu0 0.0
    %673 = vmatpush1.xpose.msra.mxu0 0.0
    %674 = vmatprep.subr.mxu0 0.0
    %675 = vmatpush1.xpose.msra.mxu0 0.0
    %676 = vmatprep.subr.mxu0 0.0
    %677 = vmatpush1.xpose.msra.mxu0 0.0
    %678 = vmatprep.subr.mxu0 0.0
    %679 = vmatpush1.xpose.msra.mxu0 0.0
    %680 = vmatprep.subr.mxu0 0.0
    %681 = vmatpush1.xpose.msra.mxu0 0.0
    %682 = vmatprep.subr.mxu0 0.0
    %683 = vmatpush1.xpose.msra.mxu0 0.0
    %684 = vmatprep.subr.mxu0 0.0
    %685 = vmatpush1.xpose.msra.mxu0 0.0
    %686 = vmatprep.subr.mxu0 0.0
    %687 = vmatpush1.xpose.msra.mxu0 0.0
    %688 = vmatprep.subr.mxu0 0.0
    %689 = vmatpush1.xpose.msra.mxu0 0.0
    %690 = vmatprep.subr.mxu0 0.0
    %691 = vmatpush1.xpose.msra.mxu0 0.0
    %692 = vmatprep.subr.mxu0 0.0
    %693 = vmatpush1.xpose.msra.mxu0 0.0
    %694 = vmatprep.subr.mxu0 0.0
    %695 = vmatpush1.xpose.msra.mxu0 0.0
    %696 = vmatprep.subr.mxu0 0.0
    %697 = vmatpush1.xpose.msra.mxu0 0.0
    %698 = vmatprep.subr.mxu0 0.0
    %699 = vmatpush1.xpose.msra.mxu0 0.0
    %700 = vmatprep.subr.mxu0 0.0
    %701 = vmatpush1.xpose.msra.mxu0 0.0
    %702 = vmatprep.mubr.f32.mxu0 0.0
    %703 = vmatmul.mubr.f32.gmra.mrb[0].mxu0 %v634
    %v704 = vpop.f32.mrb[0].mxu0
    %v705 = vadd.f32 0.0, %v704
    %v706 = vpop.f32.mrb[0].mxu0
    %707 = vdwg.mxu0
    %v708 = vmul.f32 %v705, 0.25
    %v709 = vadd.f32 %v708, %v463
    %v710 = vsel %vm544, %v709, -inf
    %711 = vmax.xlane.f32.xlu0 %v710
    %v712 = vpop.xlane.xlu0 %711
    %v713 = vsub.f32 %v709, %v712
    %v714 = vmul.f32 %v713, 1.442695
    %v715 = vpow.pop %v714
    %v716 = vsel %vm544, %v715, 0.0
    %717 = vadd.xlane.f32.xlu0 %v716
    %v718 = vpop.xlane.xlu0 %717
    %v719 = vrcp.pop %v718
    %v720 = vmul.f32 %v715, %v719
    %s721 = scalar_lea.vmem [#allocation17], 8
    %722 = vst.msk [vmem:[%s721] sm:$0xff] %vm544, %v720
    %724 = vrot.lane.b32.xlu0 %v453, 112
    %v725 = vpop.permute.xlu0 %724
    %v728 = vsel %vm544, %v720, 0
    %730 = vmatprep.subr.mxu0 0.0
    %731 = vmatpush1.msra.mxu0 %v725
    %732 = vmatprep.subr.mxu0 0.0
    %733 = vmatpush1.msra.mxu0 0.0
    %734 = vmatprep.subr.mxu0 0.0
    %735 = vmatpush1.msra.mxu0 0.0
    %736 = vmatprep.subr.mxu0 0.0
    %737 = vmatpush1.msra.mxu0 0.0
    %738 = vmatprep.subr.mxu0 0.0
    %739 = vmatpush1.msra.mxu0 0.0
    %740 = vmatprep.subr.mxu0 0.0
    %741 = vmatpush1.msra.mxu0 0.0
    %742 = vmatprep.subr.mxu0 0.0
    %743 = vmatpush1.msra.mxu0 0.0
    %744 = vmatprep.subr.mxu0 0.0
    %745 = vmatpush1.msra.mxu0 0.0
    %746 = vmatprep.subr.mxu0 0.0
    %747 = vmatpush1.msra.mxu0 0.0
    %748 = vmatprep.subr.mxu0 0.0
    %749 = vmatpush1.msra.mxu0 0.0
    %750 = vmatprep.subr.mxu0 0.0
    %751 = vmatpush1.msra.mxu0 0.0
    %752 = vmatprep.subr.mxu0 0.0
    %753 = vmatpush1.msra.mxu0 0.0
    %754 = vmatprep.subr.mxu0 0.0
    %755 = vmatpush1.msra.mxu0 0.0
    %756 = vmatprep.subr.mxu0 0.0
    %757 = vmatpush1.msra.mxu0 0.0
    %758 = vmatprep.subr.mxu0 0.0
    %759 = vmatpush1.msra.mxu0 0.0
    %760 = vmatprep.subr.mxu0 0.0
    %761 = vmatpush1.msra.mxu0 0.0
    %762 = vmatprep.subr.mxu0 0.0
    %763 = vmatpush1.msra.mxu0 0.0
    %764 = vmatprep.subr.mxu0 0.0
    %765 = vmatpush1.msra.mxu0 0.0
    %766 = vmatprep.subr.mxu0 0.0
    %767 = vmatpush1.msra.mxu0 0.0
    %768 = vmatprep.subr.mxu0 0.0
    %769 = vmatpush1.msra.mxu0 0.0
    %770 = vmatprep.subr.mxu0 0.0
    %771 = vmatpush1.msra.mxu0 0.0
    %772 = vmatprep.subr.mxu0 0.0
    %773 = vmatpush1.msra.mxu0 0.0
    %774 = vmatprep.subr.mxu0 0.0
    %775 = vmatpush1.msra.mxu0 0.0
    %776 = vmatprep.subr.mxu0 0.0
    %777 = vmatpush1.msra.mxu0 0.0
    %778 = vmatprep.subr.mxu0 0.0
    %779 = vmatpush1.msra.mxu0 0.0
    %780 = vmatprep.subr.mxu0 0.0
    %781 = vmatpush1.msra.mxu0 0.0
    %782 = vmatprep.subr.mxu0 0.0
    %783 = vmatpush1.msra.mxu0 0.0
    %784 = vmatprep.subr.mxu0 0.0
    %785 = vmatpush1.msra.mxu0 0.0
    %786 = vmatprep.subr.mxu0 0.0
    %787 = vmatpush1.msra.mxu0 0.0
    %788 = vmatprep.subr.mxu0 0.0
    %789 = vmatpush1.msra.mxu0 0.0
    %790 = vmatprep.subr.mxu0 0.0
    %791 = vmatpush1.msra.mxu0 0.0
    %792 = vmatprep.subr.mxu0 0.0
    %793 = vmatpush1.msra.mxu0 0.0
    %794 = vmatprep.mubr.f32.mxu0 0.0
    %795 = vmatmul.mubr.f32.gmra.mrb[0].mxu0 %v728
    %v796 = vpop.f32.mrb[0].mxu0
    %v797 = vadd.f32 0.0, %v796
    %v798 = vpop.f32.mrb[0].mxu0
    %799 = vdwg.mxu0
    %v801 = vsel %vm467, %v797, 0
    %803 = vmatprep.subr.mxu0 0.0
    %804 = vmatpush1.msra.mxu0 %v353
    %805 = vmatprep.subr.mxu0 0.0
    %806 = vmatpush1.msra.mxu0 %v354
    %807 = vmatprep.subr.mxu0 0.0
    %808 = vmatpush1.msra.mxu0 0.0
    %809 = vmatprep.subr.mxu0 0.0
    %810 = vmatpush1.msra.mxu0 0.0
    %811 = vmatprep.subr.mxu0 0.0
    %812 = vmatpush1.msra.mxu0 0.0
    %813 = vmatprep.subr.mxu0 0.0
    %814 = vmatpush1.msra.mxu0 0.0
    %815 = vmatprep.subr.mxu0 0.0
    %816 = vmatpush1.msra.mxu0 0.0
    %817 = vmatprep.subr.mxu0 0.0
    %818 = vmatpush1.msra.mxu0 0.0
    %819 = vmatprep.subr.mxu0 0.0
    %820 = vmatpush1.msra.mxu0 0.0
    %821 = vmatprep.subr.mxu0 0.0
    %822 = vmatpush1.msra.mxu0 0.0
    %823 = vmatprep.subr.mxu0 0.0
    %824 = vmatpush1.msra.mxu0 0.0
    %825 = vmatprep.subr.mxu0 0.0
    %826 = vmatpush1.msra.mxu0 0.0
    %827 = vmatprep.subr.mxu0 0.0
    %828 = vmatpush1.msra.mxu0 0.0
    %829 = vmatprep.subr.mxu0 0.0
    %830 = vmatpush1.msra.mxu0 0.0
    %831 = vmatprep.subr.mxu0 0.0
    %832 = vmatpush1.msra.mxu0 0.0
    %833 = vmatprep.subr.mxu0 0.0
    %834 = vmatpush1.msra.mxu0 0.0
    %835 = vmatprep.subr.mxu0 0.0
    %836 = vmatpush1.msra.mxu0 0.0
    %837 = vmatprep.subr.mxu0 0.0
    %838 = vmatpush1.msra.mxu0 0.0
    %839 = vmatprep.subr.mxu0 0.0
    %840 = vmatpush1.msra.mxu0 0.0
    %841 = vmatprep.subr.mxu0 0.0
    %842 = vmatpush1.msra.mxu0 0.0
    %843 = vmatprep.subr.mxu0 0.0
    %844 = vmatpush1.msra.mxu0 0.0
    %845 = vmatprep.subr.mxu0 0.0
    %846 = vmatpush1.msra.mxu0 0.0
    %847 = vmatprep.subr.mxu0 0.0
    %848 = vmatpush1.msra.mxu0 0.0
    %849 = vmatprep.subr.mxu0 0.0
    %850 = vmatpush1.msra.mxu0 0.0
    %851 = vmatprep.subr.mxu0 0.0
    %852 = vmatpush1.msra.mxu0 0.0
    %853 = vmatprep.subr.mxu0 0.0
    %854 = vmatpush1.msra.mxu0 0.0
    %855 = vmatprep.subr.mxu0 0.0
    %856 = vmatpush1.msra.mxu0 0.0
    %857 = vmatprep.subr.mxu0 0.0
    %858 = vmatpush1.msra.mxu0 0.0
    %859 = vmatprep.subr.mxu0 0.0
    %860 = vmatpush1.msra.mxu0 0.0
    %861 = vmatprep.subr.mxu0 0.0
    %862 = vmatpush1.msra.mxu0 0.0
    %863 = vmatprep.subr.mxu0 0.0
    %864 = vmatpush1.msra.mxu0 0.0
    %865 = vmatprep.subr.mxu0 0.0
    %866 = vmatpush1.msra.mxu0 0.0
    %867 = vmatprep.mubr.f32.mxu0 0.0
    %868 = vmatmul.mubr.f32.gmra.mrb[0].mxu0 %v801
    %v869 = vpop.f32.mrb[0].mxu0
    %v870 = vadd.f32 0.0, %v869
    %v871 = vpop.f32.mrb[0].mxu0
    %872 = vdwg.mxu0
    %v874 = vsel %vm467, %v627, 0
    %876 = vmatprep.subr.mxu0 0.0
    %877 = vmatpush1.msra.mxu0 %v351
    %878 = vmatprep.subr.mxu0 0.0
    %879 = vmatpush1.msra.mxu0 %v352
    %880 = vmatprep.subr.mxu0 0.0
    %881 = vmatpush1.msra.mxu0 0.0
    %882 = vmatprep.subr.mxu0 0.0
    %883 = vmatpush1.msra.mxu0 0.0
    %884 = vmatprep.subr.mxu0 0.0
    %885 = vmatpush1.msra.mxu0 0.0
    %886 = vmatprep.subr.mxu0 0.0
    %887 = vmatpush1.msra.mxu0 0.0
    %888 = vmatprep.subr.mxu0 0.0
    %889 = vmatpush1.msra.mxu0 0.0
    %890 = vmatprep.subr.mxu0 0.0
    %891 = vmatpush1.msra.mxu0 0.0
    %892 = vmatprep.subr.mxu0 0.0
    %893 = vmatpush1.msra.mxu0 0.0
    %894 = vmatprep.subr.mxu0 0.0
    %895 = vmatpush1.msra.mxu0 0.0
    %896 = vmatprep.subr.mxu0 0.0
    %897 = vmatpush1.msra.mxu0 0.0
    %898 = vmatprep.subr.mxu0 0.0
    %899 = vmatpush1.msra.mxu0 0.0
    %900 = vmatprep.subr.mxu0 0.0
    %901 = vmatpush1.msra.mxu0 0.0
    %902 = vmatprep.subr.mxu0 0.0
    %903 = vmatpush1.msra.mxu0 0.0
    %904 = vmatprep.subr.mxu0 0.0
    %905 = vmatpush1.msra.mxu0 0.0
    %906 = vmatprep.subr.mxu0 0.0
    %907 = vmatpush1.msra.mxu0 0.0
    %908 = vmatprep.subr.mxu0 0.0
    %909 = vmatpush1.msra.mxu0 0.0
    %910 = vmatprep.subr.mxu0 0.0
    %911 = vmatpush1.msra.mxu0 0.0
    %912 = vmatprep.subr.mxu0 0.0
    %913 = vmatpush1.msra.mxu0 0.0
    %914 = vmatprep.subr.mxu0 0.0
    %915 = vmatpush1.msra.mxu0 0.0
    %916 = vmatprep.subr.mxu0 0.0
    %917 = vmatpush1.msra.mxu0 0.0
    %918 = vmatprep.subr.mxu0 0.0
    %919 = vmatpush1.msra.mxu0 0.0
    %920 = vmatprep.subr.mxu0 0.0
    %921 = vmatpush1.msra.mxu0 0.0
    %922 = vmatprep.subr.mxu0 0.0
    %923 = vmatpush1.msra.mxu0 0.0
    %924 = vmatprep.subr.mxu0 0.0
    %925 = vmatpush1.msra.mxu0 0.0
    %926 = vmatprep.subr.mxu0 0.0
    %927 = vmatpush1.msra.mxu0 0.0
    %928 = vmatprep.subr.mxu0 0.0
    %929 = vmatpush1.msra.mxu0 0.0
    %930 = vmatprep.subr.mxu0 0.0
    %931 = vmatpush1.msra.mxu0 0.0
    %932 = vmatprep.subr.mxu0 0.0
    %933 = vmatpush1.msra.mxu0 0.0
    %934 = vmatprep.subr.mxu0 0.0
    %935 = vmatpush1.msra.mxu0 0.0
    %936 = vmatprep.subr.mxu0 0.0
    %937 = vmatpush1.msra.mxu0 0.0
    %938 = vmatprep.subr.mxu0 0.0
    %939 = vmatpush1.msra.mxu0 0.0
    %940 = vmatprep.mubr.f32.mxu0 0.0
    %941 = vmatmul.mubr.f32.gmra.mrb[0].mxu0 %v874
    %v942 = vpop.f32.mrb[0].mxu0
    %v943 = vadd.f32 %v870, %v942
    %v944 = vpop.f32.mrb[0].mxu0
    %945 = vdwg.mxu0
    %946 = vrot.lane.b32.xlu0 %v451, 96
    %v947 = vpop.permute.xlu0 %946
    %948 = vrot.lane.b32.xlu0 %v451, 32
    %v949 = vpop.permute.xlu0 %948
    %v950 = vsel %vm467, %v947, 0
    %v952 = vsel %vm467, %v949, 0
    %954 = vmatprep.subr.mxu0 0.0
    %955 = vmatpush1.xpose.msra.mxu0 %v952
    %956 = vmatprep.subr.mxu0 0.0
    %957 = vmatpush1.xpose.msra.mxu0 0.0
    %958 = vmatprep.subr.mxu0 0.0
    %959 = vmatpush1.xpose.msra.mxu0 0.0
    %960 = vmatprep.subr.mxu0 0.0
    %961 = vmatpush1.xpose.msra.mxu0 0.0
    %962 = vmatprep.subr.mxu0 0.0
    %963 = vmatpush1.xpose.msra.mxu0 0.0
    %964 = vmatprep.subr.mxu0 0.0
    %965 = vmatpush1.xpose.msra.mxu0 0.0
    %966 = vmatprep.subr.mxu0 0.0
    %967 = vmatpush1.xpose.msra.mxu0 0.0
    %968 = vmatprep.subr.mxu0 0.0
    %969 = vmatpush1.xpose.msra.mxu0 0.0
    %970 = vmatprep.subr.mxu0 0.0
    %971 = vmatpush1.xpose.msra.mxu0 0.0
    %972 = vmatprep.subr.mxu0 0.0
    %973 = vmatpush1.xpose.msra.mxu0 0.0
    %974 = vmatprep.subr.mxu0 0.0
    %975 = vmatpush1.xpose.msra.mxu0 0.0
    %976 = vmatprep.subr.mxu0 0.0
    %977 = vmatpush1.xpose.msra.mxu0 0.0
    %978 = vmatprep.subr.mxu0 0.0
    %979 = vmatpush1.xpose.msra.mxu0 0.0
    %980 = vmatprep.subr.mxu0 0.0
    %981 = vmatpush1.xpose.msra.mxu0 0.0
    %982 = vmatprep.subr.mxu0 0.0
    %983 = vmatpush1.xpose.msra.mxu0 0.0
    %984 = vmatprep.subr.mxu0 0.0
    %985 = vmatpush1.xpose.msra.mxu0 0.0
    %986 = vmatprep.subr.mxu0 0.0
    %987 = vmatpush1.xpose.msra.mxu0 0.0
    %988 = vmatprep.subr.mxu0 0.0
    %989 = vmatpush1.xpose.msra.mxu0 0.0
    %990 = vmatprep.subr.mxu0 0.0
    %991 = vmatpush1.xpose.msra.mxu0 0.0
    %992 = vmatprep.subr.mxu0 0.0
    %993 = vmatpush1.xpose.msra.mxu0 0.0
    %994 = vmatprep.subr.mxu0 0.0
    %995 = vmatpush1.xpose.msra.mxu0 0.0
    %996 = vmatprep.subr.mxu0 0.0
    %997 = vmatpush1.xpose.msra.mxu0 0.0
    %998 = vmatprep.subr.mxu0 0.0
    %999 = vmatpush1.xpose.msra.mxu0 0.0
    %1000 = vmatprep.subr.mxu0 0.0
    %1001 = vmatpush1.xpose.msra.mxu0 0.0
    %1002 = vmatprep.subr.mxu0 0.0
    %1003 = vmatpush1.xpose.msra.mxu0 0.0
    %1004 = vmatprep.subr.mxu0 0.0
    %1005 = vmatpush1.xpose.msra.mxu0 0.0
    %1006 = vmatprep.subr.mxu0 0.0
    %1007 = vmatpush1.xpose.msra.mxu0 0.0
    %1008 = vmatprep.subr.mxu0 0.0
    %1009 = vmatpush1.xpose.msra.mxu0 0.0
    %1010 = vmatprep.subr.mxu0 0.0
    %1011 = vmatpush1.xpose.msra.mxu0 0.0
    %1012 = vmatprep.subr.mxu0 0.0
    %1013 = vmatpush1.xpose.msra.mxu0 0.0
    %1014 = vmatprep.subr.mxu0 0.0
    %1015 = vmatpush1.xpose.msra.mxu0 0.0
    %1016 = vmatprep.subr.mxu0 0.0
    %1017 = vmatpush1.xpose.msra.mxu0 0.0
    %1018 = vmatprep.mubr.f32.mxu0 0.0
    %1019 = vmatmul.mubr.f32.gmra.mrb[0].mxu0 %v950
    %v1020 = vpop.f32.mrb[0].mxu0
    %v1021 = vadd.f32 0.0, %v1020
    %v1022 = vpop.f32.mrb[0].mxu0
    %1023 = vdwg.mxu0
    %v1024 = vmul.f32 %v1021, 0.25
    %v1025 = vadd.f32 %v1024, %v463
    %v1026 = vsel %vm544, %v1025, -inf
    %1027 = vmax.xlane.f32.xlu0 %v1026
    %v1028 = vpop.xlane.xlu0 %1027
    %v1029 = vsub.f32 %v1025, %v1028
    %v1030 = vmul.f32 %v1029, 1.442695
    %v1031 = vpow.pop %v1030
    %v1032 = vsel %vm544, %v1031, 0.0
    %1033 = vadd.xlane.f32.xlu0 %v1032
    %v1034 = vpop.xlane.xlu0 %1033
    %v1035 = vrcp.pop %v1034
    %v1036 = vmul.f32 %v1031, %v1035
    %s1037 = scalar_lea.vmem [#allocation17], 16
    %1038 = vst.msk [vmem:[%s1037] sm:$0xff] %vm544, %v1036
    %1039 = vrot.lane.b32.xlu0 %v453, 96
    %v1040 = vpop.permute.xlu0 %1039
    %v1043 = vsel %vm544, %v1036, 0
    %1045 = vmatprep.subr.mxu0 0.0
    %1046 = vmatpush1.msra.mxu0 %v1040
    %1047 = vmatprep.subr.mxu0 0.0
    %1048 = vmatpush1.msra.mxu0 0.0
    %1049 = vmatprep.subr.mxu0 0.0
    %1050 = vmatpush1.msra.mxu0 0.0
    %1051 = vmatprep.subr.mxu0 0.0
    %1052 = vmatpush1.msra.mxu0 0.0
    %1053 = vmatprep.subr.mxu0 0.0
    %1054 = vmatpush1.msra.mxu0 0.0
    %1055 = vmatprep.subr.mxu0 0.0
    %1056 = vmatpush1.msra.mxu0 0.0
    %1057 = vmatprep.subr.mxu0 0.0
    %1058 = vmatpush1.msra.mxu0 0.0
    %1059 = vmatprep.subr.mxu0 0.0
    %1060 = vmatpush1.msra.mxu0 0.0
    %1061 = vmatprep.subr.mxu0 0.0
    %1062 = vmatpush1.msra.mxu0 0.0
    %1063 = vmatprep.subr.mxu0 0.0
    %1064 = vmatpush1.msra.mxu0 0.0
    %1065 = vmatprep.subr.mxu0 0.0
    %1066 = vmatpush1.msra.mxu0 0.0
    %1067 = vmatprep.subr.mxu0 0.0
    %1068 = vmatpush1.msra.mxu0 0.0
    %1069 = vmatprep.subr.mxu0 0.0
    %1070 = vmatpush1.msra.mxu0 0.0
    %1071 = vmatprep.subr.mxu0 0.0
    %1072 = vmatpush1.msra.mxu0 0.0
    %1073 = vmatprep.subr.mxu0 0.0
    %1074 = vmatpush1.msra.mxu0 0.0
    %1075 = vmatprep.subr.mxu0 0.0
    %1076 = vmatpush1.msra.mxu0 0.0
    %1077 = vmatprep.subr.mxu0 0.0
    %1078 = vmatpush1.msra.mxu0 0.0
    %1079 = vmatprep.subr.mxu0 0.0
    %1080 = vmatpush1.msra.mxu0 0.0
    %1081 = vmatprep.subr.mxu0 0.0
    %1082 = vmatpush1.msra.mxu0 0.0
    %1083 = vmatprep.subr.mxu0 0.0
    %1084 = vmatpush1.msra.mxu0 0.0
    %1085 = vmatprep.subr.mxu0 0.0
    %1086 = vmatpush1.msra.mxu0 0.0
    %1087 = vmatprep.subr.mxu0 0.0
    %1088 = vmatpush1.msra.mxu0 0.0
    %1089 = vmatprep.subr.mxu0 0.0
    %1090 = vmatpush1.msra.mxu0 0.0
    %1091 = vmatprep.subr.mxu0 0.0
    %1092 = vmatpush1.msra.mxu0 0.0
    %1093 = vmatprep.subr.mxu0 0.0
    %1094 = vmatpush1.msra.mxu0 0.0
    %1095 = vmatprep.subr.mxu0 0.0
    %1096 = vmatpush1.msra.mxu0 0.0
    %1097 = vmatprep.subr.mxu0 0.0
    %1098 = vmatpush1.msra.mxu0 0.0
    %1099 = vmatprep.subr.mxu0 0.0
    %1100 = vmatpush1.msra.mxu0 0.0
    %1101 = vmatprep.subr.mxu0 0.0
    %1102 = vmatpush1.msra.mxu0 0.0
    %1103 = vmatprep.subr.mxu0 0.0
    %1104 = vmatpush1.msra.mxu0 0.0
    %1105 = vmatprep.subr.mxu0 0.0
    %1106 = vmatpush1.msra.mxu0 0.0
    %1107 = vmatprep.subr.mxu0 0.0
    %1108 = vmatpush1.msra.mxu0 0.0
    %1109 = vmatprep.mubr.f32.mxu0 0.0
    %1110 = vmatmul.mubr.f32.gmra.mrb[0].mxu0 %v1043
    %v1111 = vpop.f32.mrb[0].mxu0
    %v1112 = vadd.f32 0.0, %v1111
    %v1113 = vpop.f32.mrb[0].mxu0
    %1114 = vdwg.mxu0
    %v1116 = vsel %vm467, %v1112, 0
    %1118 = vmatprep.subr.mxu0 0.0
    %1119 = vmatpush1.msra.mxu0 %v355
    %1120 = vmatprep.subr.mxu0 0.0
    %1121 = vmatpush1.msra.mxu0 %v356
    %1122 = vmatprep.subr.mxu0 0.0
    %1123 = vmatpush1.msra.mxu0 0.0
    %1124 = vmatprep.subr.mxu0 0.0
    %1125 = vmatpush1.msra.mxu0 0.0
    %1126 = vmatprep.subr.mxu0 0.0
    %1127 = vmatpush1.msra.mxu0 0.0
    %1128 = vmatprep.subr.mxu0 0.0
    %1129 = vmatpush1.msra.mxu0 0.0
    %1130 = vmatprep.subr.mxu0 0.0
    %1131 = vmatpush1.msra.mxu0 0.0
    %1132 = vmatprep.subr.mxu0 0.0
    %1133 = vmatpush1.msra.mxu0 0.0
    %1134 = vmatprep.subr.mxu0 0.0
    %1135 = vmatpush1.msra.mxu0 0.0
    %1136 = vmatprep.subr.mxu0 0.0
    %1137 = vmatpush1.msra.mxu0 0.0
    %1138 = vmatprep.subr.mxu0 0.0
    %1139 = vmatpush1.msra.mxu0 0.0
    %1140 = vmatprep.subr.mxu0 0.0
    %1141 = vmatpush1.msra.mxu0 0.0
    %1142 = vmatprep.subr.mxu0 0.0
    %1143 = vmatpush1.msra.mxu0 0.0
    %1144 = vmatprep.subr.mxu0 0.0
    %1145 = vmatpush1.msra.mxu0 0.0
    %1146 = vmatprep.subr.mxu0 0.0
    %1147 = vmatpush1.msra.mxu0 0.0
    %1148 = vmatprep.subr.mxu0 0.0
    %1149 = vmatpush1.msra.mxu0 0.0
    %1150 = vmatprep.subr.mxu0 0.0
    %1151 = vmatpush1.msra.mxu0 0.0
    %1152 = vmatprep.subr.mxu0 0.0
    %1153 = vmatpush1.msra.mxu0 0.0
    %1154 = vmatprep.subr.mxu0 0.0
    %1155 = vmatpush1.msra.mxu0 0.0
    %1156 = vmatprep.subr.mxu0 0.0
    %1157 = vmatpush1.msra.mxu0 0.0
    %1158 = vmatprep.subr.mxu0 0.0
    %1159 = vmatpush1.msra.mxu0 0.0
    %1160 = vmatprep.subr.mxu0 0.0
    %1161 = vmatpush1.msra.mxu0 0.0
    %1162 = vmatprep.subr.mxu0 0.0
    %1163 = vmatpush1.msra.mxu0 0.0
    %1164 = vmatprep.subr.mxu0 0.0
    %1165 = vmatpush1.msra.mxu0 0.0
    %1166 = vmatprep.subr.mxu0 0.0
    %1167 = vmatpush1.msra.mxu0 0.0
    %1168 = vmatprep.subr.mxu0 0.0
    %1169 = vmatpush1.msra.mxu0 0.0
    %1170 = vmatprep.subr.mxu0 0.0
    %1171 = vmatpush1.msra.mxu0 0.0
    %1172 = vmatprep.subr.mxu0 0.0
    %1173 = vmatpush1.msra.mxu0 0.0
    %1174 = vmatprep.subr.mxu0 0.0
    %1175 = vmatpush1.msra.mxu0 0.0
    %1176 = vmatprep.subr.mxu0 0.0
    %1177 = vmatpush1.msra.mxu0 0.0
    %1178 = vmatprep.subr.mxu0 0.0
    %1179 = vmatpush1.msra.mxu0 0.0
    %1180 = vmatprep.subr.mxu0 0.0
    %1181 = vmatpush1.msra.mxu0 0.0
    %1182 = vmatprep.mubr.f32.mxu0 0.0
    %1183 = vmatmul.mubr.f32.gmra.mrb[0].mxu0 %v1116
    %v1184 = vpop.f32.mrb[0].mxu0
    %v1185 = vadd.f32 0.0, %v1184
    %v1186 = vpop.f32.mrb[0].mxu0
    %1187 = vdwg.mxu0
    %v1188 = vadd.f32 %v943, %v1185
    %1189 = vrot.lane.b32.xlu0 %v451, 80
    %v1190 = vpop.permute.xlu0 %1189
    %1191 = vrot.lane.b32.xlu0 %v451, 16
    %v1192 = vpop.permute.xlu0 %1191
    %v1193 = vsel %vm467, %v1190, 0
    %v1195 = vsel %vm467, %v1192, 0
    %1197 = vmatprep.subr.mxu0 0.0
    %1198 = vmatpush1.xpose.msra.mxu0 %v1195
    %1199 = vmatprep.subr.mxu0 0.0
    %1200 = vmatpush1.xpose.msra.mxu0 0.0
    %1201 = vmatprep.subr.mxu0 0.0
    %1202 = vmatpush1.xpose.msra.mxu0 0.0
    %1203 = vmatprep.subr.mxu0 0.0
    %1204 = vmatpush1.xpose.msra.mxu0 0.0
    %1205 = vmatprep.subr.mxu0 0.0
    %1206 = vmatpush1.xpose.msra.mxu0 0.0
    %1207 = vmatprep.subr.mxu0 0.0
    %1208 = vmatpush1.xpose.msra.mxu0 0.0
    %1209 = vmatprep.subr.mxu0 0.0
    %1210 = vmatpush1.xpose.msra.mxu0 0.0
    %1211 = vmatprep.subr.mxu0 0.0
    %1212 = vmatpush1.xpose.msra.mxu0 0.0
    %1213 = vmatprep.subr.mxu0 0.0
    %1214 = vmatpush1.xpose.msra.mxu0 0.0
    %1215 = vmatprep.subr.mxu0 0.0
    %1216 = vmatpush1.xpose.msra.mxu0 0.0
    %1217 = vmatprep.subr.mxu0 0.0
    %1218 = vmatpush1.xpose.msra.mxu0 0.0
    %1219 = vmatprep.subr.mxu0 0.0
    %1220 = vmatpush1.xpose.msra.mxu0 0.0
    %1221 = vmatprep.subr.mxu0 0.0
    %1222 = vmatpush1.xpose.msra.mxu0 0.0
    %1223 = vmatprep.subr.mxu0 0.0
    %1224 = vmatpush1.xpose.msra.mxu0 0.0
    %1225 = vmatprep.subr.mxu0 0.0
    %1226 = vmatpush1.xpose.msra.mxu0 0.0
    %1227 = vmatprep.subr.mxu0 0.0
    %1228 = vmatpush1.xpose.msra.mxu0 0.0
    %1229 = vmatprep.subr.mxu0 0.0
    %1230 = vmatpush1.xpose.msra.mxu0 0.0
    %1231 = vmatprep.subr.mxu0 0.0
    %1232 = vmatpush1.xpose.msra.mxu0 0.0
    %1233 = vmatprep.subr.mxu0 0.0
    %1234 = vmatpush1.xpose.msra.mxu0 0.0
    %1235 = vmatprep.subr.mxu0 0.0
    %1236 = vmatpush1.xpose.msra.mxu0 0.0
    %1237 = vmatprep.subr.mxu0 0.0
    %1238 = vmatpush1.xpose.msra.mxu0 0.0
    %1239 = vmatprep.subr.mxu0 0.0
    %1240 = vmatpush1.xpose.msra.mxu0 0.0
    %1241 = vmatprep.subr.mxu0 0.0
    %1242 = vmatpush1.xpose.msra.mxu0 0.0
    %1243 = vmatprep.subr.mxu0 0.0
    %1244 = vmatpush1.xpose.msra.mxu0 0.0
    %1245 = vmatprep.subr.mxu0 0.0
    %1246 = vmatpush1.xpose.msra.mxu0 0.0
    %1247 = vmatprep.subr.mxu0 0.0
    %1248 = vmatpush1.xpose.msra.mxu0 0.0
    %1249 = vmatprep.subr.mxu0 0.0
    %1250 = vmatpush1.xpose.msra.mxu0 0.0
    %1251 = vmatprep.subr.mxu0 0.0
    %1252 = vmatpush1.xpose.msra.mxu0 0.0
    %1253 = vmatprep.subr.mxu0 0.0
    %1254 = vmatpush1.xpose.msra.mxu0 0.0
    %1255 = vmatprep.subr.mxu0 0.0
    %1256 = vmatpush1.xpose.msra.mxu0 0.0
    %1257 = vmatprep.subr.mxu0 0.0
    %1258 = vmatpush1.xpose.msra.mxu0 0.0
    %1259 = vmatprep.subr.mxu0 0.0
    %1260 = vmatpush1.xpose.msra.mxu0 0.0
    %1261 = vmatprep.mubr.f32.mxu0 0.0
    %1262 = vmatmul.mubr.f32.gmra.mrb[0].mxu0 %v1193
    %v1263 = vpop.f32.mrb[0].mxu0
    %v1264 = vadd.f32 0.0, %v1263
    %v1265 = vpop.f32.mrb[0].mxu0
    %1266 = vdwg.mxu0
    %v1267 = vmul.f32 %v1264, 0.25
    %v1268 = vadd.f32 %v1267, %v463
    %v1269 = vsel %vm544, %v1268, -inf
    %1270 = vmax.xlane.f32.xlu0 %v1269
    %v1271 = vpop.xlane.xlu0 %1270
    %v1272 = vsub.f32 %v1268, %v1271
    %v1273 = vmul.f32 %v1272, 1.442695
    %v1274 = vpow.pop %v1273
    %v1275 = vsel %vm544, %v1274, 0.0
    %1276 = vadd.xlane.f32.xlu0 %v1275
    %v1277 = vpop.xlane.xlu0 %1276
    %v1278 = vrcp.pop %v1277
    %v1279 = vmul.f32 %v1274, %v1278
    %s1280 = scalar_lea.vmem [#allocation17], 24
    %1281 = vst.msk [vmem:[%s1280] sm:$0xff] %vm544, %v1279
    %1282 = vrot.lane.b32.xlu0 %v453, 80
    %v1283 = vpop.permute.xlu0 %1282
    %v1286 = vsel %vm544, %v1279, 0
    %1288 = vmatprep.subr.mxu0 0.0
    %1289 = vmatpush1.msra.mxu0 %v1283
    %1290 = vmatprep.subr.mxu0 0.0
    %1291 = vmatpush1.msra.mxu0 0.0
    %1292 = vmatprep.subr.mxu0 0.0
    %1293 = vmatpush1.msra.mxu0 0.0
    %1294 = vmatprep.subr.mxu0 0.0
    %1295 = vmatpush1.msra.mxu0 0.0
    %1296 = vmatprep.subr.mxu0 0.0
    %1297 = vmatpush1.msra.mxu0 0.0
    %1298 = vmatprep.subr.mxu0 0.0
    %1299 = vmatpush1.msra.mxu0 0.0
    %1300 = vmatprep.subr.mxu0 0.0
    %1301 = vmatpush1.msra.mxu0 0.0
    %1302 = vmatprep.subr.mxu0 0.0
    %1303 = vmatpush1.msra.mxu0 0.0
    %1304 = vmatprep.subr.mxu0 0.0
    %1305 = vmatpush1.msra.mxu0 0.0
    %1306 = vmatprep.subr.mxu0 0.0
    %1307 = vmatpush1.msra.mxu0 0.0
    %1308 = vmatprep.subr.mxu0 0.0
    %1309 = vmatpush1.msra.mxu0 0.0
    %1310 = vmatprep.subr.mxu0 0.0
    %1311 = vmatpush1.msra.mxu0 0.0
    %1312 = vmatprep.subr.mxu0 0.0
    %1313 = vmatpush1.msra.mxu0 0.0
    %1314 = vmatprep.subr.mxu0 0.0
    %1315 = vmatpush1.msra.mxu0 0.0
    %1316 = vmatprep.subr.mxu0 0.0
    %1317 = vmatpush1.msra.mxu0 0.0
    %1318 = vmatprep.subr.mxu0 0.0
    %1319 = vmatpush1.msra.mxu0 0.0
    %1320 = vmatprep.subr.mxu0 0.0
    %1321 = vmatpush1.msra.mxu0 0.0
    %1322 = vmatprep.subr.mxu0 0.0
    %1323 = vmatpush1.msra.mxu0 0.0
    %1324 = vmatprep.subr.mxu0 0.0
    %1325 = vmatpush1.msra.mxu0 0.0
    %1326 = vmatprep.subr.mxu0 0.0
    %1327 = vmatpush1.msra.mxu0 0.0
    %1328 = vmatprep.subr.mxu0 0.0
    %1329 = vmatpush1.msra.mxu0 0.0
    %1330 = vmatprep.subr.mxu0 0.0
    %1331 = vmatpush1.msra.mxu0 0.0
    %1332 = vmatprep.subr.mxu0 0.0
    %1333 = vmatpush1.msra.mxu0 0.0
    %1334 = vmatprep.subr.mxu0 0.0
    %1335 = vmatpush1.msra.mxu0 0.0
    %1336 = vmatprep.subr.mxu0 0.0
    %1337 = vmatpush1.msra.mxu0 0.0
    %1338 = vmatprep.subr.mxu0 0.0
    %1339 = vmatpush1.msra.mxu0 0.0
    %1340 = vmatprep.subr.mxu0 0.0
    %1341 = vmatpush1.msra.mxu0 0.0
    %1342 = vmatprep.subr.mxu0 0.0
    %1343 = vmatpush1.msra.mxu0 0.0
    %1344 = vmatprep.subr.mxu0 0.0
    %1345 = vmatpush1.msra.mxu0 0.0
    %1346 = vmatprep.subr.mxu0 0.0
    %1347 = vmatpush1.msra.mxu0 0.0
    %1348 = vmatprep.subr.mxu0 0.0
    %1349 = vmatpush1.msra.mxu0 0.0
    %1350 = vmatprep.subr.mxu0 0.0
    %1351 = vmatpush1.msra.mxu0 0.0
    %1352 = vmatprep.mubr.f32.mxu0 0.0
    %1353 = vmatmul.mubr.f32.gmra.mrb[0].mxu0 %v1286
    %v1354 = vpop.f32.mrb[0].mxu0
    %v1355 = vadd.f32 0.0, %v1354
    %v1356 = vpop.f32.mrb[0].mxu0
    %1357 = vdwg.mxu0
    %v1359 = vsel %vm467, %v1355, 0
    %1361 = vmatprep.subr.mxu0 0.0
    %1362 = vmatpush1.msra.mxu0 %v357
    %1363 = vmatprep.subr.mxu0 0.0
    %1364 = vmatpush1.msra.mxu0 %v358
    %1365 = vmatprep.subr.mxu0 0.0
    %1366 = vmatpush1.msra.mxu0 0.0
    %1367 = vmatprep.subr.mxu0 0.0
    %1368 = vmatpush1.msra.mxu0 0.0
    %1369 = vmatprep.subr.mxu0 0.0
    %1370 = vmatpush1.msra.mxu0 0.0
    %1371 = vmatprep.subr.mxu0 0.0
    %1372 = vmatpush1.msra.mxu0 0.0
    %1373 = vmatprep.subr.mxu0 0.0
    %1374 = vmatpush1.msra.mxu0 0.0
    %1375 = vmatprep.subr.mxu0 0.0
    %1376 = vmatpush1.msra.mxu0 0.0
    %1377 = vmatprep.subr.mxu0 0.0
    %1378 = vmatpush1.msra.mxu0 0.0
    %1379 = vmatprep.subr.mxu0 0.0
    %1380 = vmatpush1.msra.mxu0 0.0
    %1381 = vmatprep.subr.mxu0 0.0
    %1382 = vmatpush1.msra.mxu0 0.0
    %1383 = vmatprep.subr.mxu0 0.0
    %1384 = vmatpush1.msra.mxu0 0.0
    %1385 = vmatprep.subr.mxu0 0.0
    %1386 = vmatpush1.msra.mxu0 0.0
    %1387 = vmatprep.subr.mxu0 0.0
    %1388 = vmatpush1.msra.mxu0 0.0
    %1389 = vmatprep.subr.mxu0 0.0
    %1390 = vmatpush1.msra.mxu0 0.0
    %1391 = vmatprep.subr.mxu0 0.0
    %1392 = vmatpush1.msra.mxu0 0.0
    %1393 = vmatprep.subr.mxu0 0.0
    %1394 = vmatpush1.msra.mxu0 0.0
    %1395 = vmatprep.subr.mxu0 0.0
    %1396 = vmatpush1.msra.mxu0 0.0
    %1397 = vmatprep.subr.mxu0 0.0
    %1398 = vmatpush1.msra.mxu0 0.0
    %1399 = vmatprep.subr.mxu0 0.0
    %1400 = vmatpush1.msra.mxu0 0.0
    %1401 = vmatprep.subr.mxu0 0.0
    %1402 = vmatpush1.msra.mxu0 0.0
    %1403 = vmatprep.subr.mxu0 0.0
    %1404 = vmatpush1.msra.mxu0 0.0
    %1405 = vmatprep.subr.mxu0 0.0
    %1406 = vmatpush1.msra.mxu0 0.0
    %1407 = vmatprep.subr.mxu0 0.0
    %1408 = vmatpush1.msra.mxu0 0.0
    %1409 = vmatprep.subr.mxu0 0.0
    %1410 = vmatpush1.msra.mxu0 0.0
    %1411 = vmatprep.subr.mxu0 0.0
    %1412 = vmatpush1.msra.mxu0 0.0
    %1413 = vmatprep.subr.mxu0 0.0
    %1414 = vmatpush1.msra.mxu0 0.0
    %1415 = vmatprep.subr.mxu0 0.0
    %1416 = vmatpush1.msra.mxu0 0.0
    %1417 = vmatprep.subr.mxu0 0.0
    %1418 = vmatpush1.msra.mxu0 0.0
    %1419 = vmatprep.subr.mxu0 0.0
    %1420 = vmatpush1.msra.mxu0 0.0
    %1421 = vmatprep.subr.mxu0 0.0
    %1422 = vmatpush1.msra.mxu0 0.0
    %1423 = vmatprep.subr.mxu0 0.0
    %1424 = vmatpush1.msra.mxu0 0.0
    %1425 = vmatprep.mubr.f32.mxu0 0.0
    %1426 = vmatmul.mubr.f32.gmra.mrb[0].mxu0 %v1359
    %v1427 = vpop.f32.mrb[0].mxu0
    %v1428 = vadd.f32 0.0, %v1427
    %v1429 = vpop.f32.mrb[0].mxu0
    %1430 = vdwg.mxu0
    %v1431 = vadd.f32 %v1188, %v1428
    %s1432 = scalar_lea.vmem [#allocation2], 8
    %v1433 = vld [vmem:[%s1432] sm:$0xff]
    %vm1434 = vcmp.gt.f32.partialorder %v1433, 0.0
    %v1435 = vsel %vm1434, 0.0, -1e+09
    %1437 = vrot.lane.b32.xlu0 %v457, 64
    %v1438 = vpop.permute.xlu0 %1437
    %v1439 = vsel %vm467, %v457, 0
    %v1441 = vsel %vm467, %v1438, 0
    %1443 = vmatprep.subr.mxu0 0.0
    %1444 = vmatpush1.xpose.msra.mxu0 %v1441
    %1445 = vmatprep.subr.mxu0 0.0
    %1446 = vmatpush1.xpose.msra.mxu0 0.0
    %1447 = vmatprep.subr.mxu0 0.0
    %1448 = vmatpush1.xpose.msra.mxu0 0.0
    %1449 = vmatprep.subr.mxu0 0.0
    %1450 = vmatpush1.xpose.msra.mxu0 0.0
    %1451 = vmatprep.subr.mxu0 0.0
    %1452 = vmatpush1.xpose.msra.mxu0 0.0
    %1453 = vmatprep.subr.mxu0 0.0
    %1454 = vmatpush1.xpose.msra.mxu0 0.0
    %1455 = vmatprep.subr.mxu0 0.0
    %1456 = vmatpush1.xpose.msra.mxu0 0.0
    %1457 = vmatprep.subr.mxu0 0.0
    %1458 = vmatpush1.xpose.msra.mxu0 0.0
    %1459 = vmatprep.subr.mxu0 0.0
    %1460 = vmatpush1.xpose.msra.mxu0 0.0
    %1461 = vmatprep.subr.mxu0 0.0
    %1462 = vmatpush1.xpose.msra.mxu0 0.0
    %1463 = vmatprep.subr.mxu0 0.0
    %1464 = vmatpush1.xpose.msra.mxu0 0.0
    %1465 = vmatprep.subr.mxu0 0.0
    %1466 = vmatpush1.xpose.msra.mxu0 0.0
    %1467 = vmatprep.subr.mxu0 0.0
    %1468 = vmatpush1.xpose.msra.mxu0 0.0
    %1469 = vmatprep.subr.mxu0 0.0
    %1470 = vmatpush1.xpose.msra.mxu0 0.0
    %1471 = vmatprep.subr.mxu0 0.0
    %1472 = vmatpush1.xpose.msra.mxu0 0.0
    %1473 = vmatprep.subr.mxu0 0.0
    %1474 = vmatpush1.xpose.msra.mxu0 0.0
    %1475 = vmatprep.subr.mxu0 0.0
    %1476 = vmatpush1.xpose.msra.mxu0 0.0
    %1477 = vmatprep.subr.mxu0 0.0
    %1478 = vmatpush1.xpose.msra.mxu0 0.0
    %1479 = vmatprep.subr.mxu0 0.0
    %1480 = vmatpush1.xpose.msra.mxu0 0.0
    %1481 = vmatprep.subr.mxu0 0.0
    %1482 = vmatpush1.xpose.msra.mxu0 0.0
    %1483 = vmatprep.subr.mxu0 0.0
    %1484 = vmatpush1.xpose.msra.mxu0 0.0
    %1485 = vmatprep.subr.mxu0 0.0
    %1486 = vmatpush1.xpose.msra.mxu0 0.0
    %1487 = vmatprep.subr.mxu0 0.0
    %1488 = vmatpush1.xpose.msra.mxu0 0.0
    %1489 = vmatprep.subr.mxu0 0.0
    %1490 = vmatpush1.xpose.msra.mxu0 0.0
    %1491 = vmatprep.subr.mxu0 0.0
    %1492 = vmatpush1.xpose.msra.mxu0 0.0
    %1493 = vmatprep.subr.mxu0 0.0
    %1494 = vmatpush1.xpose.msra.mxu0 0.0
    %1495 = vmatprep.subr.mxu0 0.0
    %1496 = vmatpush1.xpose.msra.mxu0 0.0
    %1497 = vmatprep.subr.mxu0 0.0
    %1498 = vmatpush1.xpose.msra.mxu0 0.0
    %1499 = vmatprep.subr.mxu0 0.0
    %1500 = vmatpush1.xpose.msra.mxu0 0.0
    %1501 = vmatprep.subr.mxu0 0.0
    %1502 = vmatpush1.xpose.msra.mxu0 0.0
    %1503 = vmatprep.subr.mxu0 0.0
    %1504 = vmatpush1.xpose.msra.mxu0 0.0
    %1505 = vmatprep.subr.mxu0 0.0
    %1506 = vmatpush1.xpose.msra.mxu0 0.0
    %1507 = vmatprep.mubr.f32.mxu0 0.0
    %1508 = vmatmul.mubr.f32.gmra.mrb[0].mxu0 %v1439
    %v1509 = vpop.f32.mrb[0].mxu0
    %v1510 = vadd.f32 0.0, %v1509
    %v1511 = vpop.f32.mrb[0].mxu0
    %1512 = vdwg.mxu0
    %v1513 = vmul.f32 %v1510, 0.25
    %v1514 = vadd.f32 %v1513, %v1435
    %v1515 = vsel %vm544, %v1514, -inf
    %1516 = vmax.xlane.f32.xlu0 %v1515
    %v1517 = vpop.xlane.xlu0 %1516
    %v1518 = vsub.f32 %v1514, %v1517
    %v1519 = vmul.f32 %v1518, 1.442695
    %v1520 = vpow.pop %v1519
    %v1521 = vsel %vm544, %v1520, 0.0
    %1522 = vadd.xlane.f32.xlu0 %v1521
    %v1523 = vpop.xlane.xlu0 %1522
    %v1524 = vrcp.pop %v1523
    %v1525 = vmul.f32 %v1520, %v1524
    %s1526 = scalar_lea.vmem [#allocation17], 32
    %1527 = vst.msk [vmem:[%s1526] sm:$0xff] %vm544, %v1525
    %v1529 = vsel %vm544, %v1525, 0
    %1531 = vmatprep.subr.mxu0 0.0
    %1532 = vmatpush1.msra.mxu0 %v459
    %1533 = vmatprep.subr.mxu0 0.0
    %1534 = vmatpush1.msra.mxu0 0.0
    %1535 = vmatprep.subr.mxu0 0.0
    %1536 = vmatpush1.msra.mxu0 0.0
    %1537 = vmatprep.subr.mxu0 0.0
    %1538 = vmatpush1.msra.mxu0 0.0
    %1539 = vmatprep.subr.mxu0 0.0
    %1540 = vmatpush1.msra.mxu0 0.0
    %1541 = vmatprep.subr.mxu0 0.0
    %1542 = vmatpush1.msra.mxu0 0.0
    %1543 = vmatprep.subr.mxu0 0.0
    %1544 = vmatpush1.msra.mxu0 0.0
    %1545 = vmatprep.subr.mxu0 0.0
    %1546 = vmatpush1.msra.mxu0 0.0
    %1547 = vmatprep.subr.mxu0 0.0
    %1548 = vmatpush1.msra.mxu0 0.0
    %1549 = vmatprep.subr.mxu0 0.0
    %1550 = vmatpush1.msra.mxu0 0.0
    %1551 = vmatprep.subr.mxu0 0.0
    %1552 = vmatpush1.msra.mxu0 0.0
    %1553 = vmatprep.subr.mxu0 0.0
    %1554 = vmatpush1.msra.mxu0 0.0
    %1555 = vmatprep.subr.mxu0 0.0
    %1556 = vmatpush1.msra.mxu0 0.0
    %1557 = vmatprep.subr.mxu0 0.0
    %1558 = vmatpush1.msra.mxu0 0.0
    %1559 = vmatprep.subr.mxu0 0.0
    %1560 = vmatpush1.msra.mxu0 0.0
    %1561 = vmatprep.subr.mxu0 0.0
    %1562 = vmatpush1.msra.mxu0 0.0
    %1563 = vmatprep.subr.mxu0 0.0
    %1564 = vmatpush1.msra.mxu0 0.0
    %1565 = vmatprep.subr.mxu0 0.0
    %1566 = vmatpush1.msra.mxu0 0.0
    %1567 = vmatprep.subr.mxu0 0.0
    %1568 = vmatpush1.msra.mxu0 0.0
    %1569 = vmatprep.subr.mxu0 0.0
    %1570 = vmatpush1.msra.mxu0 0.0
    %1571 = vmatprep.subr.mxu0 0.0
    %1572 = vmatpush1.msra.mxu0 0.0
    %1573 = vmatprep.subr.mxu0 0.0
    %1574 = vmatpush1.msra.mxu0 0.0
    %1575 = vmatprep.subr.mxu0 0.0
    %1576 = vmatpush1.msra.mxu0 0.0
    %1577 = vmatprep.subr.mxu0 0.0
    %1578 = vmatpush1.msra.mxu0 0.0
    %1579 = vmatprep.subr.mxu0 0.0
    %1580 = vmatpush1.msra.mxu0 0.0
    %1581 = vmatprep.subr.mxu0 0.0
    %1582 = vmatpush1.msra.mxu0 0.0
    %1583 = vmatprep.subr.mxu0 0.0
    %1584 = vmatpush1.msra.mxu0 0.0
    %1585 = vmatprep.subr.mxu0 0.0
    %1586 = vmatpush1.msra.mxu0 0.0
    %1587 = vmatprep.subr.mxu0 0.0
    %1588 = vmatpush1.msra.mxu0 0.0
    %1589 = vmatprep.subr.mxu0 0.0
    %1590 = vmatpush1.msra.mxu0 0.0
    %1591 = vmatprep.subr.mxu0 0.0
    %1592 = vmatpush1.msra.mxu0 0.0
    %1593 = vmatprep.subr.mxu0 0.0
    %1594 = vmatpush1.msra.mxu0 0.0
    %1595 = vmatprep.mubr.f32.mxu0 0.0
    %1596 = vmatmul.mubr.f32.gmra.mrb[0].mxu0 %v1529
    %v1597 = vpop.f32.mrb[0].mxu0
    %v1598 = vadd.f32 0.0, %v1597
    %v1599 = vpop.f32.mrb[0].mxu0
    %1600 = vdwg.mxu0
    %1601 = vrot.lane.b32.xlu0 %v457, 112
    %v1602 = vpop.permute.xlu0 %1601
    %1603 = vrot.lane.b32.xlu0 %v457, 48
    %v1604 = vpop.permute.xlu0 %1603
    %v1605 = vsel %vm467, %v1602, 0
    %v1607 = vsel %vm467, %v1604, 0
    %1609 = vmatprep.subr.mxu0 0.0
    %1610 = vmatpush1.xpose.msra.mxu0 %v1607
    %1611 = vmatprep.subr.mxu0 0.0
    %1612 = vmatpush1.xpose.msra.mxu0 0.0
    %1613 = vmatprep.subr.mxu0 0.0
    %1614 = vmatpush1.xpose.msra.mxu0 0.0
    %1615 = vmatprep.subr.mxu0 0.0
    %1616 = vmatpush1.xpose.msra.mxu0 0.0
    %1617 = vmatprep.subr.mxu0 0.0
    %1618 = vmatpush1.xpose.msra.mxu0 0.0
    %1619 = vmatprep.subr.mxu0 0.0
    %1620 = vmatpush1.xpose.msra.mxu0 0.0
    %1621 = vmatprep.subr.mxu0 0.0
    %1622 = vmatpush1.xpose.msra.mxu0 0.0
    %1623 = vmatprep.subr.mxu0 0.0
    %1624 = vmatpush1.xpose.msra.mxu0 0.0
    %1625 = vmatprep.subr.mxu0 0.0
    %1626 = vmatpush1.xpose.msra.mxu0 0.0
    %1627 = vmatprep.subr.mxu0 0.0
    %1628 = vmatpush1.xpose.msra.mxu0 0.0
    %1629 = vmatprep.subr.mxu0 0.0
    %1630 = vmatpush1.xpose.msra.mxu0 0.0
    %1631 = vmatprep.subr.mxu0 0.0
    %1632 = vmatpush1.xpose.msra.mxu0 0.0
    %1633 = vmatprep.subr.mxu0 0.0
    %1634 = vmatpush1.xpose.msra.mxu0 0.0
    %1635 = vmatprep.subr.mxu0 0.0
    %1636 = vmatpush1.xpose.msra.mxu0 0.0
    %1637 = vmatprep.subr.mxu0 0.0
    %1638 = vmatpush1.xpose.msra.mxu0 0.0
    %1639 = vmatprep.subr.mxu0 0.0
    %1640 = vmatpush1.xpose.msra.mxu0 0.0
    %1641 = vmatprep.subr.mxu0 0.0
    %1642 = vmatpush1.xpose.msra.mxu0 0.0
    %1643 = vmatprep.subr.mxu0 0.0
    %1644 = vmatpush1.xpose.msra.mxu0 0.0
    %1645 = vmatprep.subr.mxu0 0.0
    %1646 = vmatpush1.xpose.msra.mxu0 0.0
    %1647 = vmatprep.subr.mxu0 0.0
    %1648 = vmatpush1.xpose.msra.mxu0 0.0
    %1649 = vmatprep.subr.mxu0 0.0
    %1650 = vmatpush1.xpose.msra.mxu0 0.0
    %1651 = vmatprep.subr.mxu0 0.0
    %1652 = vmatpush1.xpose.msra.mxu0 0.0
    %1653 = vmatprep.subr.mxu0 0.0
    %1654 = vmatpush1.xpose.msra.mxu0 0.0
    %1655 = vmatprep.subr.mxu0 0.0
    %1656 = vmatpush1.xpose.msra.mxu0 0.0
    %1657 = vmatprep.subr.mxu0 0.0
    %1658 = vmatpush1.xpose.msra.mxu0 0.0
    %1659 = vmatprep.subr.mxu0 0.0
    %1660 = vmatpush1.xpose.msra.mxu0 0.0
    %1661 = vmatprep.subr.mxu0 0.0
    %1662 = vmatpush1.xpose.msra.mxu0 0.0
    %1663 = vmatprep.subr.mxu0 0.0
    %1664 = vmatpush1.xpose.msra.mxu0 0.0
    %1665 = vmatprep.subr.mxu0 0.0
    %1666 = vmatpush1.xpose.msra.mxu0 0.0
    %1667 = vmatprep.subr.mxu0 0.0
    %1668 = vmatpush1.xpose.msra.mxu0 0.0
    %1669 = vmatprep.subr.mxu0 0.0
    %1670 = vmatpush1.xpose.msra.mxu0 0.0
    %1671 = vmatprep.subr.mxu0 0.0
    %1672 = vmatpush1.xpose.msra.mxu0 0.0
    %1673 = vmatprep.mubr.f32.mxu0 0.0
    %1674 = vmatmul.mubr.f32.gmra.mrb[0].mxu0 %v1605
    %v1675 = vpop.f32.mrb[0].mxu0
    %v1676 = vadd.f32 0.0, %v1675
    %v1677 = vpop.f32.mrb[0].mxu0
    %1678 = vdwg.mxu0
    %v1679 = vmul.f32 %v1676, 0.25
    %v1680 = vadd.f32 %v1679, %v1435
    %v1681 = vsel %vm544, %v1680, -inf
    %1682 = vmax.xlane.f32.xlu0 %v1681
    %v1683 = vpop.xlane.xlu0 %1682
    %v1684 = vsub.f32 %v1680, %v1683
    %v1685 = vmul.f32 %v1684, 1.442695
    %v1686 = vpow.pop %v1685
    %v1687 = vsel %vm544, %v1686, 0.0
    %1688 = vadd.xlane.f32.xlu0 %v1687
    %v1689 = vpop.xlane.xlu0 %1688
    %v1690 = vrcp.pop %v1689
    %v1691 = vmul.f32 %v1686, %v1690
    %s1692 = scalar_lea.vmem [#allocation17], 40
    %1693 = vst.msk [vmem:[%s1692] sm:$0xff] %vm544, %v1691
    %1695 = vrot.lane.b32.xlu0 %v459, 112
    %v1696 = vpop.permute.xlu0 %1695
    %v1699 = vsel %vm544, %v1691, 0
    %1701 = vmatprep.subr.mxu0 0.0
    %1702 = vmatpush1.msra.mxu0 %v1696
    %1703 = vmatprep.subr.mxu0 0.0
    %1704 = vmatpush1.msra.mxu0 0.0
    %1705 = vmatprep.subr.mxu0 0.0
    %1706 = vmatpush1.msra.mxu0 0.0
    %1707 = vmatprep.subr.mxu0 0.0
    %1708 = vmatpush1.msra.mxu0 0.0
    %1709 = vmatprep.subr.mxu0 0.0
    %1710 = vmatpush1.msra.mxu0 0.0
    %1711 = vmatprep.subr.mxu0 0.0
    %1712 = vmatpush1.msra.mxu0 0.0
    %1713 = vmatprep.subr.mxu0 0.0
    %1714 = vmatpush1.msra.mxu0 0.0
    %1715 = vmatprep.subr.mxu0 0.0
    %1716 = vmatpush1.msra.mxu0 0.0
    %1717 = vmatprep.subr.mxu0 0.0
    %1718 = vmatpush1.msra.mxu0 0.0
    %1719 = vmatprep.subr.mxu0 0.0
    %1720 = vmatpush1.msra.mxu0 0.0
    %1721 = vmatprep.subr.mxu0 0.0
    %1722 = vmatpush1.msra.mxu0 0.0
    %1723 = vmatprep.subr.mxu0 0.0
    %1724 = vmatpush1.msra.mxu0 0.0
    %1725 = vmatprep.subr.mxu0 0.0
    %1726 = vmatpush1.msra.mxu0 0.0
    %1727 = vmatprep.subr.mxu0 0.0
    %1728 = vmatpush1.msra.mxu0 0.0
    %1729 = vmatprep.subr.mxu0 0.0
    %1730 = vmatpush1.msra.mxu0 0.0
    %1731 = vmatprep.subr.mxu0 0.0
    %1732 = vmatpush1.msra.mxu0 0.0
    %1733 = vmatprep.subr.mxu0 0.0
    %1734 = vmatpush1.msra.mxu0 0.0
    %1735 = vmatprep.subr.mxu0 0.0
    %1736 = vmatpush1.msra.mxu0 0.0
    %1737 = vmatprep.subr.mxu0 0.0
    %1738 = vmatpush1.msra.mxu0 0.0
    %1739 = vmatprep.subr.mxu0 0.0
    %1740 = vmatpush1.msra.mxu0 0.0
    %1741 = vmatprep.subr.mxu0 0.0
    %1742 = vmatpush1.msra.mxu0 0.0
    %1743 = vmatprep.subr.mxu0 0.0
    %1744 = vmatpush1.msra.mxu0 0.0
    %1745 = vmatprep.subr.mxu0 0.0
    %1746 = vmatpush1.msra.mxu0 0.0
    %1747 = vmatprep.subr.mxu0 0.0
    %1748 = vmatpush1.msra.mxu0 0.0
    %1749 = vmatprep.subr.mxu0 0.0
    %1750 = vmatpush1.msra.mxu0 0.0
    %1751 = vmatprep.subr.mxu0 0.0
    %1752 = vmatpush1.msra.mxu0 0.0
    %1753 = vmatprep.subr.mxu0 0.0
    %1754 = vmatpush1.msra.mxu0 0.0
    %1755 = vmatprep.subr.mxu0 0.0
    %1756 = vmatpush1.msra.mxu0 0.0
    %1757 = vmatprep.subr.mxu0 0.0
    %1758 = vmatpush1.msra.mxu0 0.0
    %1759 = vmatprep.subr.mxu0 0.0
    %1760 = vmatpush1.msra.mxu0 0.0
    %1761 = vmatprep.subr.mxu0 0.0
    %1762 = vmatpush1.msra.mxu0 0.0
    %1763 = vmatprep.subr.mxu0 0.0
    %1764 = vmatpush1.msra.mxu0 0.0
    %1765 = vmatprep.mubr.f32.mxu0 0.0
    %1766 = vmatmul.mubr.f32.gmra.mrb[0].mxu0 %v1699
    %v1767 = vpop.f32.mrb[0].mxu0
    %v1768 = vadd.f32 0.0, %v1767
    %v1769 = vpop.f32.mrb[0].mxu0
    %1770 = vdwg.mxu0
    %v1772 = vsel %vm467, %v1768, 0
    %1774 = vmatprep.subr.mxu0 0.0
    %1775 = vmatpush1.msra.mxu0 %v353
    %1776 = vmatprep.subr.mxu0 0.0
    %1777 = vmatpush1.msra.mxu0 %v354
    %1778 = vmatprep.subr.mxu0 0.0
    %1779 = vmatpush1.msra.mxu0 0.0
    %1780 = vmatprep.subr.mxu0 0.0
    %1781 = vmatpush1.msra.mxu0 0.0
    %1782 = vmatprep.subr.mxu0 0.0
    %1783 = vmatpush1.msra.mxu0 0.0
    %1784 = vmatprep.subr.mxu0 0.0
    %1785 = vmatpush1.msra.mxu0 0.0
    %1786 = vmatprep.subr.mxu0 0.0
    %1787 = vmatpush1.msra.mxu0 0.0
    %1788 = vmatprep.subr.mxu0 0.0
    %1789 = vmatpush1.msra.mxu0 0.0
    %1790 = vmatprep.subr.mxu0 0.0
    %1791 = vmatpush1.msra.mxu0 0.0
    %1792 = vmatprep.subr.mxu0 0.0
    %1793 = vmatpush1.msra.mxu0 0.0
    %1794 = vmatprep.subr.mxu0 0.0
    %1795 = vmatpush1.msra.mxu0 0.0
    %1796 = vmatprep.subr.mxu0 0.0
    %1797 = vmatpush1.msra.mxu0 0.0
    %1798 = vmatprep.subr.mxu0 0.0
    %1799 = vmatpush1.msra.mxu0 0.0
    %1800 = vmatprep.subr.mxu0 0.0
    %1801 = vmatpush1.msra.mxu0 0.0
    %1802 = vmatprep.subr.mxu0 0.0
    %1803 = vmatpush1.msra.mxu0 0.0
    %1804 = vmatprep.subr.mxu0 0.0
    %1805 = vmatpush1.msra.mxu0 0.0
    %1806 = vmatprep.subr.mxu0 0.0
    %1807 = vmatpush1.msra.mxu0 0.0
    %1808 = vmatprep.subr.mxu0 0.0
    %1809 = vmatpush1.msra.mxu0 0.0
    %1810 = vmatprep.subr.mxu0 0.0
    %1811 = vmatpush1.msra.mxu0 0.0
    %1812 = vmatprep.subr.mxu0 0.0
    %1813 = vmatpush1.msra.mxu0 0.0
    %1814 = vmatprep.subr.mxu0 0.0
    %1815 = vmatpush1.msra.mxu0 0.0
    %1816 = vmatprep.subr.mxu0 0.0
    %1817 = vmatpush1.msra.mxu0 0.0
    %1818 = vmatprep.subr.mxu0 0.0
    %1819 = vmatpush1.msra.mxu0 0.0
    %1820 = vmatprep.subr.mxu0 0.0
    %1821 = vmatpush1.msra.mxu0 0.0
    %1822 = vmatprep.subr.mxu0 0.0
    %1823 = vmatpush1.msra.mxu0 0.0
    %1824 = vmatprep.subr.mxu0 0.0
    %1825 = vmatpush1.msra.mxu0 0.0
    %1826 = vmatprep.subr.mxu0 0.0
    %1827 = vmatpush1.msra.mxu0 0.0
    %1828 = vmatprep.subr.mxu0 0.0
    %1829 = vmatpush1.msra.mxu0 0.0
    %1830 = vmatprep.subr.mxu0 0.0
    %1831 = vmatpush1.msra.mxu0 0.0
    %1832 = vmatprep.subr.mxu0 0.0
    %1833 = vmatpush1.msra.mxu0 0.0
    %1834 = vmatprep.subr.mxu0 0.0
    %1835 = vmatpush1.msra.mxu0 0.0
    %1836 = vmatprep.subr.mxu0 0.0
    %1837 = vmatpush1.msra.mxu0 0.0
    %1838 = vmatprep.mubr.f32.mxu0 0.0
    %1839 = vmatmul.mubr.f32.gmra.mrb[0].mxu0 %v1772
    %v1840 = vpop.f32.mrb[0].mxu0
    %v1841 = vadd.f32 0.0, %v1840
    %v1842 = vpop.f32.mrb[0].mxu0
    %1843 = vdwg.mxu0
    %v1845 = vsel %vm467, %v1598, 0
    %1847 = vmatprep.subr.mxu0 0.0
    %1848 = vmatpush1.msra.mxu0 %v351
    %1849 = vmatprep.subr.mxu0 0.0
    %1850 = vmatpush1.msra.mxu0 %v352
    %1851 = vmatprep.subr.mxu0 0.0
    %1852 = vmatpush1.msra.mxu0 0.0
    %1853 = vmatprep.subr.mxu0 0.0
    %1854 = vmatpush1.msra.mxu0 0.0
    %1855 = vmatprep.subr.mxu0 0.0
    %1856 = vmatpush1.msra.mxu0 0.0
    %1857 = vmatprep.subr.mxu0 0.0
    %1858 = vmatpush1.msra.mxu0 0.0
    %1859 = vmatprep.subr.mxu0 0.0
    %1860 = vmatpush1.msra.mxu0 0.0
    %1861 = vmatprep.subr.mxu0 0.0
    %1862 = vmatpush1.msra.mxu0 0.0
    %1863 = vmatprep.subr.mxu0 0.0
    %1864 = vmatpush1.msra.mxu0 0.0
    %1865 = vmatprep.subr.mxu0 0.0
    %1866 = vmatpush1.msra.mxu0 0.0
    %1867 = vmatprep.subr.mxu0 0.0
    %1868 = vmatpush1.msra.mxu0 0.0
    %1869 = vmatprep.subr.mxu0 0.0
    %1870 = vmatpush1.msra.mxu0 0.0
    %1871 = vmatprep.subr.mxu0 0.0
    %1872 = vmatpush1.msra.mxu0 0.0
    %1873 = vmatprep.subr.mxu0 0.0
    %1874 = vmatpush1.msra.mxu0 0.0
    %1875 = vmatprep.subr.mxu0 0.0
    %1876 = vmatpush1.msra.mxu0 0.0
    %1877 = vmatprep.subr.mxu0 0.0
    %1878 = vmatpush1.msra.mxu0 0.0
    %1879 = vmatprep.subr.mxu0 0.0
    %1880 = vmatpush1.msra.mxu0 0.0
    %1881 = vmatprep.subr.mxu0 0.0
    %1882 = vmatpush1.msra.mxu0 0.0
    %1883 = vmatprep.subr.mxu0 0.0
    %1884 = vmatpush1.msra.mxu0 0.0
    %1885 = vmatprep.subr.mxu0 0.0
    %1886 = vmatpush1.msra.mxu0 0.0
    %1887 = vmatprep.subr.mxu0 0.0
    %1888 = vmatpush1.msra.mxu0 0.0
    %1889 = vmatprep.subr.mxu0 0.0
    %1890 = vmatpush1.msra.mxu0 0.0
    %1891 = vmatprep.subr.mxu0 0.0
    %1892 = vmatpush1.msra.mxu0 0.0
    %1893 = vmatprep.subr.mxu0 0.0
    %1894 = vmatpush1.msra.mxu0 0.0
    %1895 = vmatprep.subr.mxu0 0.0
    %1896 = vmatpush1.msra.mxu0 0.0
    %1897 = vmatprep.subr.mxu0 0.0
    %1898 = vmatpush1.msra.mxu0 0.0
    %1899 = vmatprep.subr.mxu0 0.0
    %1900 = vmatpush1.msra.mxu0 0.0
    %1901 = vmatprep.subr.mxu0 0.0
    %1902 = vmatpush1.msra.mxu0 0.0
    %1903 = vmatprep.subr.mxu0 0.0
    %1904 = vmatpush1.msra.mxu0 0.0
    %1905 = vmatprep.subr.mxu0 0.0
    %1906 = vmatpush1.msra.mxu0 0.0
    %1907 = vmatprep.subr.mxu0 0.0
    %1908 = vmatpush1.msra.mxu0 0.0
    %1909 = vmatprep.subr.mxu0 0.0
    %1910 = vmatpush1.msra.mxu0 0.0
    %1911 = vmatprep.mubr.f32.mxu0 0.0
    %1912 = vmatmul.mubr.f32.gmra.mrb[0].mxu0 %v1845
    %v1913 = vpop.f32.mrb[0].mxu0
    %v1914 = vadd.f32 %v1841, %v1913
    %v1915 = vpop.f32.mrb[0].mxu0
    %1916 = vdwg.mxu0
    %1917 = vrot.lane.b32.xlu0 %v457, 96
    %v1918 = vpop.permute.xlu0 %1917
    %1919 = vrot.lane.b32.xlu0 %v457, 32
    %v1920 = vpop.permute.xlu0 %1919
    %v1921 = vsel %vm467, %v1918, 0
    %v1923 = vsel %vm467, %v1920, 0
    %1925 = vmatprep.subr.mxu0 0.0
    %1926 = vmatpush1.xpose.msra.mxu0 %v1923
    %1927 = vmatprep.subr.mxu0 0.0
    %1928 = vmatpush1.xpose.msra.mxu0 0.0
    %1929 = vmatprep.subr.mxu0 0.0
    %1930 = vmatpush1.xpose.msra.mxu0 0.0
    %1931 = vmatprep.subr.mxu0 0.0
    %1932 = vmatpush1.xpose.msra.mxu0 0.0
    %1933 = vmatprep.subr.mxu0 0.0
    %1934 = vmatpush1.xpose.msra.mxu0 0.0
    %1935 = vmatprep.subr.mxu0 0.0
    %1936 = vmatpush1.xpose.msra.mxu0 0.0
    %1937 = vmatprep.subr.mxu0 0.0
    %1938 = vmatpush1.xpose.msra.mxu0 0.0
    %1939 = vmatprep.subr.mxu0 0.0
    %1940 = vmatpush1.xpose.msra.mxu0 0.0
    %1941 = vmatprep.subr.mxu0 0.0
    %1942 = vmatpush1.xpose.msra.mxu0 0.0
    %1943 = vmatprep.subr.mxu0 0.0
    %1944 = vmatpush1.xpose.msra.mxu0 0.0
    %1945 = vmatprep.subr.mxu0 0.0
    %1946 = vmatpush1.xpose.msra.mxu0 0.0
    %1947 = vmatprep.subr.mxu0 0.0
    %1948 = vmatpush1.xpose.msra.mxu0 0.0
    %1949 = vmatprep.subr.mxu0 0.0
    %1950 = vmatpush1.xpose.msra.mxu0 0.0
    %1951 = vmatprep.subr.mxu0 0.0
    %1952 = vmatpush1.xpose.msra.mxu0 0.0
    %1953 = vmatprep.subr.mxu0 0.0
    %1954 = vmatpush1.xpose.msra.mxu0 0.0
    %1955 = vmatprep.subr.mxu0 0.0
    %1956 = vmatpush1.xpose.msra.mxu0 0.0
    %1957 = vmatprep.subr.mxu0 0.0
    %1958 = vmatpush1.xpose.msra.mxu0 0.0
    %1959 = vmatprep.subr.mxu0 0.0
    %1960 = vmatpush1.xpose.msra.mxu0 0.0
    %1961 = vmatprep.subr.mxu0 0.0
    %1962 = vmatpush1.xpose.msra.mxu0 0.0
    %1963 = vmatprep.subr.mxu0 0.0
    %1964 = vmatpush1.xpose.msra.mxu0 0.0
    %1965 = vmatprep.subr.mxu0 0.0
    %1966 = vmatpush1.xpose.msra.mxu0 0.0
    %1967 = vmatprep.subr.mxu0 0.0
    %1968 = vmatpush1.xpose.msra.mxu0 0.0
    %1969 = vmatprep.subr.mxu0 0.0
    %1970 = vmatpush1.xpose.msra.mxu0 0.0
    %1971 = vmatprep.subr.mxu0 0.0
    %1972 = vmatpush1.xpose.msra.mxu0 0.0
    %1973 = vmatprep.subr.mxu0 0.0
    %1974 = vmatpush1.xpose.msra.mxu0 0.0
    %1975 = vmatprep.subr.mxu0 0.0
    %1976 = vmatpush1.xpose.msra.mxu0 0.0
    %1977 = vmatprep.subr.mxu0 0.0
    %1978 = vmatpush1.xpose.msra.mxu0 0.0
    %1979 = vmatprep.subr.mxu0 0.0
    %1980 = vmatpush1.xpose.msra.mxu0 0.0
    %1981 = vmatprep.subr.mxu0 0.0
    %1982 = vmatpush1.xpose.msra.mxu0 0.0
    %1983 = vmatprep.subr.mxu0 0.0
    %1984 = vmatpush1.xpose.msra.mxu0 0.0
    %1985 = vmatprep.subr.mxu0 0.0
    %1986 = vmatpush1.xpose.msra.mxu0 0.0
    %1987 = vmatprep.subr.mxu0 0.0
    %1988 = vmatpush1.xpose.msra.mxu0 0.0
    %1989 = vmatprep.mubr.f32.mxu0 0.0
    %1990 = vmatmul.mubr.f32.gmra.mrb[0].mxu0 %v1921
    %v1991 = vpop.f32.mrb[0].mxu0
    %v1992 = vadd.f32 0.0, %v1991
    %v1993 = vpop.f32.mrb[0].mxu0
    %1994 = vdwg.mxu0
    %v1995 = vmul.f32 %v1992, 0.25
    %v1996 = vadd.f32 %v1995, %v1435
    %v1997 = vsel %vm544, %v1996, -inf
    %1998 = vmax.xlane.f32.xlu0 %v1997
    %v1999 = vpop.xlane.xlu0 %1998
    %v2000 = vsub.f32 %v1996, %v1999
    %v2001 = vmul.f32 %v2000, 1.442695
    %v2002 = vpow.pop %v2001
    %v2003 = vsel %vm544, %v2002, 0.0
    %2004 = vadd.xlane.f32.xlu0 %v2003
    %v2005 = vpop.xlane.xlu0 %2004
    %v2006 = vrcp.pop %v2005
    %v2007 = vmul.f32 %v2002, %v2006
    %s2008 = scalar_lea.vmem [#allocation17], 48
    %2009 = vst.msk [vmem:[%s2008] sm:$0xff] %vm544, %v2007
    %2010 = vrot.lane.b32.xlu0 %v459, 96
    %v2011 = vpop.permute.xlu0 %2010
    %v2014 = vsel %vm544, %v2007, 0
    %2016 = vmatprep.subr.mxu0 0.0
    %2017 = vmatpush1.msra.mxu0 %v2011
    %2018 = vmatprep.subr.mxu0 0.0
    %2019 = vmatpush1.msra.mxu0 0.0
    %2020 = vmatprep.subr.mxu0 0.0
    %2021 = vmatpush1.msra.mxu0 0.0
    %2022 = vmatprep.subr.mxu0 0.0
    %2023 = vmatpush1.msra.mxu0 0.0
    %2024 = vmatprep.subr.mxu0 0.0
    %2025 = vmatpush1.msra.mxu0 0.0
    %2026 = vmatprep.subr.mxu0 0.0
    %2027 = vmatpush1.msra.mxu0 0.0
    %2028 = vmatprep.subr.mxu0 0.0
    %2029 = vmatpush1.msra.mxu0 0.0
    %2030 = vmatprep.subr.mxu0 0.0
    %2031 = vmatpush1.msra.mxu0 0.0
    %2032 = vmatprep.subr.mxu0 0.0
    %2033 = vmatpush1.msra.mxu0 0.0
    %2034 = vmatprep.subr.mxu0 0.0
    %2035 = vmatpush1.msra.mxu0 0.0
    %2036 = vmatprep.subr.mxu0 0.0
    %2037 = vmatpush1.msra.mxu0 0.0
    %2038 = vmatprep.subr.mxu0 0.0
    %2039 = vmatpush1.msra.mxu0 0.0
    %2040 = vmatprep.subr.mxu0 0.0
    %2041 = vmatpush1.msra.mxu0 0.0
    %2042 = vmatprep.subr.mxu0 0.0
    %2043 = vmatpush1.msra.mxu0 0.0
    %2044 = vmatprep.subr.mxu0 0.0
    %2045 = vmatpush1.msra.mxu0 0.0
    %2046 = vmatprep.subr.mxu0 0.0
    %2047 = vmatpush1.msra.mxu0 0.0
    %2048 = vmatprep.subr.mxu0 0.0
    %2049 = vmatpush1.msra.mxu0 0.0
    %2050 = vmatprep.subr.mxu0 0.0
    %2051 = vmatpush1.msra.mxu0 0.0
    %2052 = vmatprep.subr.mxu0 0.0
    %2053 = vmatpush1.msra.mxu0 0.0
    %2054 = vmatprep.subr.mxu0 0.0
    %2055 = vmatpush1.msra.mxu0 0.0
    %2056 = vmatprep.subr.mxu0 0.0
    %2057 = vmatpush1.msra.mxu0 0.0
    %2058 = vmatprep.subr.mxu0 0.0
    %2059 = vmatpush1.msra.mxu0 0.0
    %2060 = vmatprep.subr.mxu0 0.0
    %2061 = vmatpush1.msra.mxu0 0.0
    %2062 = vmatprep.subr.mxu0 0.0
    %2063 = vmatpush1.msra.mxu0 0.0
    %2064 = vmatprep.subr.mxu0 0.0
    %2065 = vmatpush1.msra.mxu0 0.0
    %2066 = vmatprep.subr.mxu0 0.0
    %2067 = vmatpush1.msra.mxu0 0.0
    %2068 = vmatprep.subr.mxu0 0.0
    %2069 = vmatpush1.msra.mxu0 0.0
    %2070 = vmatprep.subr.mxu0 0.0
    %2071 = vmatpush1.msra.mxu0 0.0
    %2072 = vmatprep.subr.mxu0 0.0
    %2073 = vmatpush1.msra.mxu0 0.0
    %2074 = vmatprep.subr.mxu0 0.0
    %2075 = vmatpush1.msra.mxu0 0.0
    %2076 = vmatprep.subr.mxu0 0.0
    %2077 = vmatpush1.msra.mxu0 0.0
    %2078 = vmatprep.subr.mxu0 0.0
    %2079 = vmatpush1.msra.mxu0 0.0
    %2080 = vmatprep.mubr.f32.mxu0 0.0
    %2081 = vmatmul.mubr.f32.gmra.mrb[0].mxu0 %v2014
    %v2082 = vpop.f32.mrb[0].mxu0
    %v2083 = vadd.f32 0.0, %v2082
    %v2084 = vpop.f32.mrb[0].mxu0
    %2085 = vdwg.mxu0
    %v2087 = vsel %vm467, %v2083, 0
    %2089 = vmatprep.subr.mxu0 0.0
    %2090 = vmatpush1.msra.mxu0 %v355
    %2091 = vmatprep.subr.mxu0 0.0
    %2092 = vmatpush1.msra.mxu0 %v356
    %2093 = vmatprep.subr.mxu0 0.0
    %2094 = vmatpush1.msra.mxu0 0.0
    %2095 = vmatprep.subr.mxu0 0.0
    %2096 = vmatpush1.msra.mxu0 0.0
    %2097 = vmatprep.subr.mxu0 0.0
    %2098 = vmatpush1.msra.mxu0 0.0
    %2099 = vmatprep.subr.mxu0 0.0
    %2100 = vmatpush1.msra.mxu0 0.0
    %2101 = vmatprep.subr.mxu0 0.0
    %2102 = vmatpush1.msra.mxu0 0.0
    %2103 = vmatprep.subr.mxu0 0.0
    %2104 = vmatpush1.msra.mxu0 0.0
    %2105 = vmatprep.subr.mxu0 0.0
    %2106 = vmatpush1.msra.mxu0 0.0
    %2107 = vmatprep.subr.mxu0 0.0
    %2108 = vmatpush1.msra.mxu0 0.0
    %2109 = vmatprep.subr.mxu0 0.0
    %2110 = vmatpush1.msra.mxu0 0.0
    %2111 = vmatprep.subr.mxu0 0.0
    %2112 = vmatpush1.msra.mxu0 0.0
    %2113 = vmatprep.subr.mxu0 0.0
    %2114 = vmatpush1.msra.mxu0 0.0
    %2115 = vmatprep.subr.mxu0 0.0
    %2116 = vmatpush1.msra.mxu0 0.0
    %2117 = vmatprep.subr.mxu0 0.0
    %2118 = vmatpush1.msra.mxu0 0.0
    %2119 = vmatprep.subr.mxu0 0.0
    %2120 = vmatpush1.msra.mxu0 0.0
    %2121 = vmatprep.subr.mxu0 0.0
    %2122 = vmatpush1.msra.mxu0 0.0
    %2123 = vmatprep.subr.mxu0 0.0
    %2124 = vmatpush1.msra.mxu0 0.0
    %2125 = vmatprep.subr.mxu0 0.0
    %2126 = vmatpush1.msra.mxu0 0.0
    %2127 = vmatprep.subr.mxu0 0.0
    %2128 = vmatpush1.msra.mxu0 0.0
    %2129 = vmatprep.subr.mxu0 0.0
    %2130 = vmatpush1.msra.mxu0 0.0
    %2131 = vmatprep.subr.mxu0 0.0
    %2132 = vmatpush1.msra.mxu0 0.0
    %2133 = vmatprep.subr.mxu0 0.0
    %2134 = vmatpush1.msra.mxu0 0.0
    %2135 = vmatprep.subr.mxu0 0.0
    %2136 = vmatpush1.msra.mxu0 0.0
    %2137 = vmatprep.subr.mxu0 0.0
    %2138 = vmatpush1.msra.mxu0 0.0
    %2139 = vmatprep.subr.mxu0 0.0
    %2140 = vmatpush1.msra.mxu0 0.0
    %2141 = vmatprep.subr.mxu0 0.0
    %2142 = vmatpush1.msra.mxu0 0.0
    %2143 = vmatprep.subr.mxu0 0.0
    %2144 = vmatpush1.msra.mxu0 0.0
    %2145 = vmatprep.subr.mxu0 0.0
    %2146 = vmatpush1.msra.mxu0 0.0
    %2147 = vmatprep.subr.mxu0 0.0
    %2148 = vmatpush1.msra.mxu0 0.0
    %2149 = vmatprep.subr.mxu0 0.0
    %2150 = vmatpush1.msra.mxu0 0.0
    %2151 = vmatprep.subr.mxu0 0.0
    %2152 = vmatpush1.msra.mxu0 0.0
    %2153 = vmatprep.mubr.f32.mxu0 0.0
    %2154 = vmatmul.mubr.f32.gmra.mrb[0].mxu0 %v2087
    %v2155 = vpop.f32.mrb[0].mxu0
    %v2156 = vadd.f32 0.0, %v2155
    %v2157 = vpop.f32.mrb[0].mxu0
    %2158 = vdwg.mxu0
    %v2159 = vadd.f32 %v1914, %v2156
    %2160 = vrot.lane.b32.xlu0 %v457, 80
    %v2161 = vpop.permute.xlu0 %2160
    %2162 = vrot.lane.b32.xlu0 %v457, 16
    %v2163 = vpop.permute.xlu0 %2162
    %v2164 = vsel %vm467, %v2161, 0
    %v2166 = vsel %vm467, %v2163, 0
    %2168 = vmatprep.subr.mxu0 0.0
    %2169 = vmatpush1.xpose.msra.mxu0 %v2166
    %2170 = vmatprep.subr.mxu0 0.0
    %2171 = vmatpush1.xpose.msra.mxu0 0.0
    %2172 = vmatprep.subr.mxu0 0.0
    %2173 = vmatpush1.xpose.msra.mxu0 0.0
    %2174 = vmatprep.subr.mxu0 0.0
    %2175 = vmatpush1.xpose.msra.mxu0 0.0
    %2176 = vmatprep.subr.mxu0 0.0
    %2177 = vmatpush1.xpose.msra.mxu0 0.0
    %2178 = vmatprep.subr.mxu0 0.0
    %2179 = vmatpush1.xpose.msra.mxu0 0.0
    %2180 = vmatprep.subr.mxu0 0.0
    %2181 = vmatpush1.xpose.msra.mxu0 0.0
    %2182 = vmatprep.subr.mxu0 0.0
    %2183 = vmatpush1.xpose.msra.mxu0 0.0
    %2184 = vmatprep.subr.mxu0 0.0
    %2185 = vmatpush1.xpose.msra.mxu0 0.0
    %2186 = vmatprep.subr.mxu0 0.0
    %2187 = vmatpush1.xpose.msra.mxu0 0.0
    %2188 = vmatprep.subr.mxu0 0.0
    %2189 = vmatpush1.xpose.msra.mxu0 0.0
    %2190 = vmatprep.subr.mxu0 0.0
    %2191 = vmatpush1.xpose.msra.mxu0 0.0
    %2192 = vmatprep.subr.mxu0 0.0
    %2193 = vmatpush1.xpose.msra.mxu0 0.0
    %2194 = vmatprep.subr.mxu0 0.0
    %2195 = vmatpush1.xpose.msra.mxu0 0.0
    %2196 = vmatprep.subr.mxu0 0.0
    %2197 = vmatpush1.xpose.msra.mxu0 0.0
    %2198 = vmatprep.subr.mxu0 0.0
    %2199 = vmatpush1.xpose.msra.mxu0 0.0
    %2200 = vmatprep.subr.mxu0 0.0
    %2201 = vmatpush1.xpose.msra.mxu0 0.0
    %2202 = vmatprep.subr.mxu0 0.0
    %2203 = vmatpush1.xpose.msra.mxu0 0.0
    %2204 = vmatprep.subr.mxu0 0.0
    %2205 = vmatpush1.xpose.msra.mxu0 0.0
    %2206 = vmatprep.subr.mxu0 0.0
    %2207 = vmatpush1.xpose.msra.mxu0 0.0
    %2208 = vmatprep.subr.mxu0 0.0
    %2209 = vmatpush1.xpose.msra.mxu0 0.0
    %2210 = vmatprep.subr.mxu0 0.0
    %2211 = vmatpush1.xpose.msra.mxu0 0.0
    %2212 = vmatprep.subr.mxu0 0.0
    %2213 = vmatpush1.xpose.msra.mxu0 0.0
    %2214 = vmatprep.subr.mxu0 0.0
    %2215 = vmatpush1.xpose.msra.mxu0 0.0
    %2216 = vmatprep.subr.mxu0 0.0
    %2217 = vmatpush1.xpose.msra.mxu0 0.0
    %2218 = vmatprep.subr.mxu0 0.0
    %2219 = vmatpush1.xpose.msra.mxu0 0.0
    %2220 = vmatprep.subr.mxu0 0.0
    %2221 = vmatpush1.xpose.msra.mxu0 0.0
    %2222 = vmatprep.subr.mxu0 0.0
    %2223 = vmatpush1.xpose.msra.mxu0 0.0
    %2224 = vmatprep.subr.mxu0 0.0
    %2225 = vmatpush1.xpose.msra.mxu0 0.0
    %2226 = vmatprep.subr.mxu0 0.0
    %2227 = vmatpush1.xpose.msra.mxu0 0.0
    %2228 = vmatprep.subr.mxu0 0.0
    %2229 = vmatpush1.xpose.msra.mxu0 0.0
    %2230 = vmatprep.subr.mxu0 0.0
    %2231 = vmatpush1.xpose.msra.mxu0 0.0
    %2232 = vmatprep.mubr.f32.mxu0 0.0
    %2233 = vmatmul.mubr.f32.gmra.mrb[0].mxu0 %v2164
    %v2234 = vpop.f32.mrb[0].mxu0
    %v2235 = vadd.f32 0.0, %v2234
    %v2236 = vpop.f32.mrb[0].mxu0
    %2237 = vdwg.mxu0
    %v2238 = vmul.f32 %v2235, 0.25
    %v2239 = vadd.f32 %v2238, %v1435
    %v2240 = vsel %vm544, %v2239, -inf
    %2241 = vmax.xlane.f32.xlu0 %v2240
    %v2242 = vpop.xlane.xlu0 %2241
    %v2243 = vsub.f32 %v2239, %v2242
    %v2244 = vmul.f32 %v2243, 1.442695
    %v2245 = vpow.pop %v2244
    %v2246 = vsel %vm544, %v2245, 0.0
    %2247 = vadd.xlane.f32.xlu0 %v2246
    %v2248 = vpop.xlane.xlu0 %2247
    %v2249 = vrcp.pop %v2248
    %v2250 = vmul.f32 %v2245, %v2249
    %s2251 = scalar_lea.vmem [#allocation17], 56
    %2252 = vst.msk [vmem:[%s2251] sm:$0xff] %vm544, %v2250
    %2253 = vrot.lane.b32.xlu0 %v459, 80
    %v2254 = vpop.permute.xlu0 %2253
    %v2257 = vsel %vm544, %v2250, 0
    %2259 = vmatprep.subr.mxu0 0.0
    %2260 = vmatpush1.msra.mxu0 %v2254
    %2261 = vmatprep.subr.mxu0 0.0
    %2262 = vmatpush1.msra.mxu0 0.0
    %2263 = vmatprep.subr.mxu0 0.0
    %2264 = vmatpush1.msra.mxu0 0.0
    %2265 = vmatprep.subr.mxu0 0.0
    %2266 = vmatpush1.msra.mxu0 0.0
    %2267 = vmatprep.subr.mxu0 0.0
    %2268 = vmatpush1.msra.mxu0 0.0
    %2269 = vmatprep.subr.mxu0 0.0
    %2270 = vmatpush1.msra.mxu0 0.0
    %2271 = vmatprep.subr.mxu0 0.0
    %2272 = vmatpush1.msra.mxu0 0.0
    %2273 = vmatprep.subr.mxu0 0.0
    %2274 = vmatpush1.msra.mxu0 0.0
    %2275 = vmatprep.subr.mxu0 0.0
    %2276 = vmatpush1.msra.mxu0 0.0
    %2277 = vmatprep.subr.mxu0 0.0
    %2278 = vmatpush1.msra.mxu0 0.0
    %2279 = vmatprep.subr.mxu0 0.0
    %2280 = vmatpush1.msra.mxu0 0.0
    %2281 = vmatprep.subr.mxu0 0.0
    %2282 = vmatpush1.msra.mxu0 0.0
    %2283 = vmatprep.subr.mxu0 0.0
    %2284 = vmatpush1.msra.mxu0 0.0
    %2285 = vmatprep.subr.mxu0 0.0
    %2286 = vmatpush1.msra.mxu0 0.0
    %2287 = vmatprep.subr.mxu0 0.0
    %2288 = vmatpush1.msra.mxu0 0.0
    %2289 = vmatprep.subr.mxu0 0.0
    %2290 = vmatpush1.msra.mxu0 0.0
    %2291 = vmatprep.subr.mxu0 0.0
    %2292 = vmatpush1.msra.mxu0 0.0
    %2293 = vmatprep.subr.mxu0 0.0
    %2294 = vmatpush1.msra.mxu0 0.0
    %2295 = vmatprep.subr.mxu0 0.0
    %2296 = vmatpush1.msra.mxu0 0.0
    %2297 = vmatprep.subr.mxu0 0.0
    %2298 = vmatpush1.msra.mxu0 0.0
    %2299 = vmatprep.subr.mxu0 0.0
    %2300 = vmatpush1.msra.mxu0 0.0
    %2301 = vmatprep.subr.mxu0 0.0
    %2302 = vmatpush1.msra.mxu0 0.0
    %2303 = vmatprep.subr.mxu0 0.0
    %2304 = vmatpush1.msra.mxu0 0.0
    %2305 = vmatprep.subr.mxu0 0.0
    %2306 = vmatpush1.msra.mxu0 0.0
    %2307 = vmatprep.subr.mxu0 0.0
    %2308 = vmatpush1.msra.mxu0 0.0
    %2309 = vmatprep.subr.mxu0 0.0
    %2310 = vmatpush1.msra.mxu0 0.0
    %2311 = vmatprep.subr.mxu0 0.0
    %2312 = vmatpush1.msra.mxu0 0.0
    %2313 = vmatprep.subr.mxu0 0.0
    %2314 = vmatpush1.msra.mxu0 0.0
    %2315 = vmatprep.subr.mxu0 0.0
    %2316 = vmatpush1.msra.mxu0 0.0
    %2317 = vmatprep.subr.mxu0 0.0
    %2318 = vmatpush1.msra.mxu0 0.0
    %2319 = vmatprep.subr.mxu0 0.0
    %2320 = vmatpush1.msra.mxu0 0.0
    %2321 = vmatprep.subr.mxu0 0.0
    %2322 = vmatpush1.msra.mxu0 0.0
    %2323 = vmatprep.mubr.f32.mxu0 0.0
    %2324 = vmatmul.mubr.f32.gmra.mrb[0].mxu0 %v2257
    %v2325 = vpop.f32.mrb[0].mxu0
    %v2326 = vadd.f32 0.0, %v2325
    %v2327 = vpop.f32.mrb[0].mxu0
    %2328 = vdwg.mxu0
    %v2330 = vsel %vm467, %v2326, 0
    %2332 = vmatprep.subr.mxu0 0.0
    %2333 = vmatpush1.msra.mxu0 %v357
    %2334 = vmatprep.subr.mxu0 0.0
    %2335 = vmatpush1.msra.mxu0 %v358
    %2336 = vmatprep.subr.mxu0 0.0
    %2337 = vmatpush1.msra.mxu0 0.0
    %2338 = vmatprep.subr.mxu0 0.0
    %2339 = vmatpush1.msra.mxu0 0.0
    %2340 = vmatprep.subr.mxu0 0.0
    %2341 = vmatpush1.msra.mxu0 0.0
    %2342 = vmatprep.subr.mxu0 0.0
    %2343 = vmatpush1.msra.mxu0 0.0
    %2344 = vmatprep.subr.mxu0 0.0
    %2345 = vmatpush1.msra.mxu0 0.0
    %2346 = vmatprep.subr.mxu0 0.0
    %2347 = vmatpush1.msra.mxu0 0.0
    %2348 = vmatprep.subr.mxu0 0.0
    %2349 = vmatpush1.msra.mxu0 0.0
    %2350 = vmatprep.subr.mxu0 0.0
    %2351 = vmatpush1.msra.mxu0 0.0
    %2352 = vmatprep.subr.mxu0 0.0
    %2353 = vmatpush1.msra.mxu0 0.0
    %2354 = vmatprep.subr.mxu0 0.0
    %2355 = vmatpush1.msra.mxu0 0.0
    %2356 = vmatprep.subr.mxu0 0.0
    %2357 = vmatpush1.msra.mxu0 0.0
    %2358 = vmatprep.subr.mxu0 0.0
    %2359 = vmatpush1.msra.mxu0 0.0
    %2360 = vmatprep.subr.mxu0 0.0
    %2361 = vmatpush1.msra.mxu0 0.0
    %2362 = vmatprep.subr.mxu0 0.0
    %2363 = vmatpush1.msra.mxu0 0.0
    %2364 = vmatprep.subr.mxu0 0.0
    %2365 = vmatpush1.msra.mxu0 0.0
    %2366 = vmatprep.subr.mxu0 0.0
    %2367 = vmatpush1.msra.mxu0 0.0
    %2368 = vmatprep.subr.mxu0 0.0
    %2369 = vmatpush1.msra.mxu0 0.0
    %2370 = vmatprep.subr.mxu0 0.0
    %2371 = vmatpush1.msra.mxu0 0.0
    %2372 = vmatprep.subr.mxu0 0.0
    %2373 = vmatpush1.msra.mxu0 0.0
    %2374 = vmatprep.subr.mxu0 0.0
    %2375 = vmatpush1.msra.mxu0 0.0
    %2376 = vmatprep.subr.mxu0 0.0
    %2377 = vmatpush1.msra.mxu0 0.0
    %2378 = vmatprep.subr.mxu0 0.0
    %2379 = vmatpush1.msra.mxu0 0.0
    %2380 = vmatprep.subr.mxu0 0.0
    %2381 = vmatpush1.msra.mxu0 0.0
    %2382 = vmatprep.subr.mxu0 0.0
    %2383 = vmatpush1.msra.mxu0 0.0
    %2384 = vmatprep.subr.mxu0 0.0
    %2385 = vmatpush1.msra.mxu0 0.0
    %2386 = vmatprep.subr.mxu0 0.0
    %2387 = vmatpush1.msra.mxu0 0.0
    %2388 = vmatprep.subr.mxu0 0.0
    %2389 = vmatpush1.msra.mxu0 0.0
    %2390 = vmatprep.subr.mxu0 0.0
    %2391 = vmatpush1.msra.mxu0 0.0
    %2392 = vmatprep.subr.mxu0 0.0
    %2393 = vmatpush1.msra.mxu0 0.0
    %2394 = vmatprep.subr.mxu0 0.0
    %2395 = vmatpush1.msra.mxu0 0.0
    %2396 = vmatprep.mubr.f32.mxu0 0.0
    %2397 = vmatmul.mubr.f32.gmra.mrb[0].mxu0 %v2330
    %v2398 = vpop.f32.mrb[0].mxu0
    %v2399 = vadd.f32 0.0, %v2398
    %v2400 = vpop.f32.mrb[0].mxu0
    %2401 = vdwg.mxu0
    %v2402 = vadd.f32 %v2159, %v2399
    %v2404 = vlaneseq
    %v2405 = vshrl.u32 %v2404, 7
    %v2406 = vsub.s32 0, %v2405
    %v2407 = vrot.slane %v359, %v2406
    %v2409 = vadd.f32 %v1431, %v2407
    %v2410 = vadd.f32 %v2402, %v2407
    %v2411 = vadd.f32 %v334, %v2409
    %v2412 = vadd.f32 %v335, %v2410
    %v2413 = vld [vmem:[%s12] sm:$0x1]
    %v2414 = vld [vmem:[%s13] sm:$0x1]
    %v2415 = vsel %vm292, %v2411, 0.0
    %2416 = vadd.xlane.f32.xlu0 %v2415
    %v2417 = vpop.xlane.xlu0 %2416
    %v2418 = vsel %vm292, %v2412, 0.0
    %2419 = vadd.xlane.f32.xlu0 %v2418
    %v2420 = vpop.xlane.xlu0 %2419
    %v2421 = vmul.f32 %v2417, %v299
    %v2422 = vmul.f32 %v2420, %v299
    %v2423 = vsub.f32 %v2411, %v2421
    %v2424 = vsub.f32 %v2412, %v2422
    %v2425 = vmul.f32 %v2423, %v2423
    %v2426 = vmul.f32 %v2424, %v2424
    %v2427 = vsel %vm292, %v2425, 0.0
    %2428 = vadd.xlane.f32.xlu0 %v2427
    %v2429 = vpop.xlane.xlu0 %2428
    %v2430 = vsel %vm292, %v2426, 0.0
    %2431 = vadd.xlane.f32.xlu0 %v2430
    %v2432 = vpop.xlane.xlu0 %2431
    %v2433 = vmul.f32 %v2429, %v299
    %v2434 = vmul.f32 %v2432, %v299
    %v2435 = vadd.f32 %v2433, 1e-05
    %v2436 = vadd.f32 %v2434, 1e-05
    %v2437 = vrsqrt.pop %v2435
    %v2438 = vrsqrt.pop %v2436
    %v2439 = vmul.f32 %v2423, %v2437
    %v2440 = vmul.f32 %v2424, %v2438
    %v2442 = vlaneseq
    %v2443 = vshrl.u32 %v2442, 7
    %v2444 = vsub.s32 0, %v2443
    %v2445 = vrot.slane %v2413, %v2444
    %v2447 = vmul.f32 %v2439, %v2445
    %v2448 = vmul.f32 %v2440, %v2445
    %v2450 = vlaneseq
    %v2451 = vshrl.u32 %v2450, 7
    %v2452 = vsub.s32 0, %v2451
    %v2453 = vrot.slane %v2414, %v2452
    %v2455 = vadd.f32 %v2447, %v2453
    %v2456 = vadd.f32 %v2448, %v2453
    %v2457 = vld [vmem:[#allocation13] sm:$0xff]
    %v2458 = vld [vmem:[#allocation13 + $0x8] sm:$0xff]
    %v2459 = vld [vmem:[#allocation13 + $0x10] sm:$0xff]
    %v2460 = vld [vmem:[#allocation13 + $0x18] sm:$0xff]
    %v2461 = vld [vmem:[#allocation13 + $0x20] sm:$0xff]
    %v2462 = vld [vmem:[#allocation13 + $0x28] sm:$0xff]
    %v2463 = vld [vmem:[#allocation13 + $0x30] sm:$0x3f]
    %v2464 = vld [vmem:[%s15] sm:$0x1]
    %v2466 = vlaneseq
    %v2467 = vshrl.u32 %v2466, 7
    %v2468 = vsub.s32 0, %v2467
    %v2469 = vrot.slane %v2464, %v2468
    %v2472 = vsel %vm292, %v2455, 0
    %v2475 = vsel %vm292, %v2456, 0
    %v2478 = vsel %vm377, %v2463, 0
    %2480 = vmatprep.subr.mxu0 0.0
    %2481 = vmatpush1.msra.mxu0 %v2457
    %2482 = vmatprep.subr.mxu0 0.0
    %2483 = vmatpush1.msra.mxu0 %v2458
    %2484 = vmatprep.subr.mxu0 0.0
    %2485 = vmatpush1.msra.mxu0 %v2459
    %2486 = vmatprep.subr.mxu0 0.0
    %2487 = vmatpush1.msra.mxu0 %v2460
    %2488 = vmatprep.subr.mxu0 0.0
    %2489 = vmatpush1.msra.mxu0 %v2461
    %2490 = vmatprep.subr.mxu0 0.0
    %2491 = vmatpush1.msra.mxu0 %v2462
    %2492 = vmatprep.subr.mxu0 0.0
    %2493 = vmatpush1.msra.mxu0 %v2478
    %2494 = vmatprep.subr.mxu0 0.0
    %2495 = vmatpush1.msra.mxu0 0.0
    %2496 = vmatprep.subr.mxu0 0.0
    %2497 = vmatpush1.msra.mxu0 0.0
    %2498 = vmatprep.subr.mxu0 0.0
    %2499 = vmatpush1.msra.mxu0 0.0
    %2500 = vmatprep.subr.mxu0 0.0
    %2501 = vmatpush1.msra.mxu0 0.0
    %2502 = vmatprep.subr.mxu0 0.0
    %2503 = vmatpush1.msra.mxu0 0.0
    %2504 = vmatprep.subr.mxu0 0.0
    %2505 = vmatpush1.msra.mxu0 0.0
    %2506 = vmatprep.subr.mxu0 0.0
    %2507 = vmatpush1.msra.mxu0 0.0
    %2508 = vmatprep.subr.mxu0 0.0
    %2509 = vmatpush1.msra.mxu0 0.0
    %2510 = vmatprep.subr.mxu0 0.0
    %2511 = vmatpush1.msra.mxu0 0.0
    %2512 = vmatprep.subr.mxu0 0.0
    %2513 = vmatpush1.msra.mxu0 0.0
    %2514 = vmatprep.subr.mxu0 0.0
    %2515 = vmatpush1.msra.mxu0 0.0
    %2516 = vmatprep.subr.mxu0 0.0
    %2517 = vmatpush1.msra.mxu0 0.0
    %2518 = vmatprep.subr.mxu0 0.0
    %2519 = vmatpush1.msra.mxu0 0.0
    %2520 = vmatprep.subr.mxu0 0.0
    %2521 = vmatpush1.msra.mxu0 0.0
    %2522 = vmatprep.subr.mxu0 0.0
    %2523 = vmatpush1.msra.mxu0 0.0
    %2524 = vmatprep.subr.mxu0 0.0
    %2525 = vmatpush1.msra.mxu0 0.0
    %2526 = vmatprep.subr.mxu0 0.0
    %2527 = vmatpush1.msra.mxu0 0.0
    %2528 = vmatprep.subr.mxu0 0.0
    %2529 = vmatpush1.msra.mxu0 0.0
    %2530 = vmatprep.subr.mxu0 0.0
    %2531 = vmatpush1.msra.mxu0 0.0
    %2532 = vmatprep.subr.mxu0 0.0
    %2533 = vmatpush1.msra.mxu0 0.0
    %2534 = vmatprep.subr.mxu0 0.0
    %2535 = vmatpush1.msra.mxu0 0.0
    %2536 = vmatprep.subr.mxu0 0.0
    %2537 = vmatpush1.msra.mxu0 0.0
    %2538 = vmatprep.subr.mxu0 0.0
    %2539 = vmatpush1.msra.mxu0 0.0
    %2540 = vmatprep.subr.mxu0 0.0
    %2541 = vmatpush1.msra.mxu0 0.0
    %2542 = vmatprep.subr.mxu0 0.0
    %2543 = vmatpush1.msra.mxu0 0.0
    %2544 = vmatprep.mubr.f32.mxu0 0.0
    %2545 = vmatmul.mubr.f32.gmra.mrb[0].mxu0 %v2472
    %v2546 = vpop.f32.mrb[0].mxu0
    %v2547 = vadd.f32 %v2469, %v2546
    %v2548 = vpop.f32.mrb[0].mxu0
    %2549 = vmatprep.mubr.f32.mxu0 0.0
    %2550 = vmatmul.mubr.f32.gmra.mrb[0].mxu0 %v2475
    %v2551 = vpop.f32.mrb[0].mxu0
    %v2552 = vadd.f32 %v2469, %v2551
    %v2553 = vpop.f32.mrb[0].mxu0
    %2554 = vdwg.mxu0
    %v2555 = vmax.f32 %v2547, 0.0
    %v2556 = vmax.f32 %v2552, 0.0
    %v2557 = vld [vmem:[#allocation14] sm:$0xff]
    %v2558 = vld [vmem:[#allocation14 + $0x8] sm:$0xff]
    %v2559 = vld [vmem:[#allocation14 + $0x10] sm:$0xff]
    %v2560 = vld [vmem:[#allocation14 + $0x18] sm:$0xff]
    %v2561 = vld [vmem:[%s17] sm:$0x1]
    %v2563 = vlaneseq
    %v2564 = vshrl.u32 %v2563, 7
    %v2565 = vsub.s32 0, %v2564
    %v2566 = vrot.slane %v2561, %v2565
    %vm2568 = vcmask 261120
    %v2570 = vsel %vm2568, %v2555, 0
    %v2573 = vsel %vm2568, %v2556, 0
    %2575 = vmatprep.subr.mxu0 0.0
    %2576 = vmatpush1.msra.mxu0 %v2557
    %2577 = vmatprep.subr.mxu0 0.0
    %2578 = vmatpush1.msra.mxu0 %v2558
    %2579 = vmatprep.subr.mxu0 0.0
    %2580 = vmatpush1.msra.mxu0 %v2559
    %2581 = vmatprep.subr.mxu0 0.0
    %2582 = vmatpush1.msra.mxu0 %v2560
    %2583 = vmatprep.subr.mxu0 0.0
    %2584 = vmatpush1.msra.mxu0 0.0
    %2585 = vmatprep.subr.mxu0 0.0
    %2586 = vmatpush1.msra.mxu0 0.0
    %2587 = vmatprep.subr.mxu0 0.0
    %2588 = vmatpush1.msra.mxu0 0.0
    %2589 = vmatprep.subr.mxu0 0.0
    %2590 = vmatpush1.msra.mxu0 0.0
    %2591 = vmatprep.subr.mxu0 0.0
    %2592 = vmatpush1.msra.mxu0 0.0
    %2593 = vmatprep.subr.mxu0 0.0
    %2594 = vmatpush1.msra.mxu0 0.0
    %2595 = vmatprep.subr.mxu0 0.0
    %2596 = vmatpush1.msra.mxu0 0.0
    %2597 = vmatprep.subr.mxu0 0.0
    %2598 = vmatpush1.msra.mxu0 0.0
    %2599 = vmatprep.subr.mxu0 0.0
    %2600 = vmatpush1.msra.mxu0 0.0
    %2601 = vmatprep.subr.mxu0 0.0
    %2602 = vmatpush1.msra.mxu0 0.0
    %2603 = vmatprep.subr.mxu0 0.0
    %2604 = vmatpush1.msra.mxu0 0.0
    %2605 = vmatprep.subr.mxu0 0.0
    %2606 = vmatpush1.msra.mxu0 0.0
    %2607 = vmatprep.subr.mxu0 0.0
    %2608 = vmatpush1.msra.mxu0 0.0
    %2609 = vmatprep.subr.mxu0 0.0
    %2610 = vmatpush1.msra.mxu0 0.0
    %2611 = vmatprep.subr.mxu0 0.0
    %2612 = vmatpush1.msra.mxu0 0.0
    %2613 = vmatprep.subr.mxu0 0.0
    %2614 = vmatpush1.msra.mxu0 0.0
    %2615 = vmatprep.subr.mxu0 0.0
    %2616 = vmatpush1.msra.mxu0 0.0
    %2617 = vmatprep.subr.mxu0 0.0
    %2618 = vmatpush1.msra.mxu0 0.0
    %2619 = vmatprep.subr.mxu0 0.0
    %2620 = vmatpush1.msra.mxu0 0.0
    %2621 = vmatprep.subr.mxu0 0.0
    %2622 = vmatpush1.msra.mxu0 0.0
    %2623 = vmatprep.subr.mxu0 0.0
    %2624 = vmatpush1.msra.mxu0 0.0
    %2625 = vmatprep.subr.mxu0 0.0
    %2626 = vmatpush1.msra.mxu0 0.0
    %2627 = vmatprep.subr.mxu0 0.0
    %2628 = vmatpush1.msra.mxu0 0.0
    %2629 = vmatprep.subr.mxu0 0.0
    %2630 = vmatpush1.msra.mxu0 0.0
    %2631 = vmatprep.subr.mxu0 0.0
    %2632 = vmatpush1.msra.mxu0 0.0
    %2633 = vmatprep.subr.mxu0 0.0
    %2634 = vmatpush1.msra.mxu0 0.0
    %2635 = vmatprep.subr.mxu0 0.0
    %2636 = vmatpush1.msra.mxu0 0.0
    %2637 = vmatprep.subr.mxu0 0.0
    %2638 = vmatpush1.msra.mxu0 0.0
    %2639 = vmatprep.mubr.f32.mxu0 0.0
    %2640 = vmatmul.mubr.f32.gmra.mrb[0].mxu0 %v2570
    %v2641 = vpop.f32.mrb[0].mxu0
    %v2642 = vadd.f32 %v2566, %v2641
    %v2643 = vpop.f32.mrb[0].mxu0
    %2644 = vmatprep.mubr.f32.mxu0 0.0
    %2645 = vmatmul.mubr.f32.gmra.mrb[0].mxu0 %v2573
    %v2646 = vpop.f32.mrb[0].mxu0
    %v2647 = vadd.f32 %v2566, %v2646
    %v2648 = vpop.f32.mrb[0].mxu0
    %2649 = vdwg.mxu0
    %v2650 = vadd.f32 %v2455, %v2642
    %v2651 = vadd.f32 %v2456, %v2647
    %v2652 = vld [vmem:[%s18] sm:$0x1]
    %v2653 = vld [vmem:[%s19] sm:$0x1]
    %v2654 = vsel %vm292, %v2650, 0.0
    %2655 = vadd.xlane.f32.xlu0 %v2654
    %v2656 = vpop.xlane.xlu0 %2655
    %v2657 = vsel %vm292, %v2651, 0.0
    %2658 = vadd.xlane.f32.xlu0 %v2657
    %v2659 = vpop.xlane.xlu0 %2658
    %v2660 = vmul.f32 %v2656, %v299
    %v2661 = vmul.f32 %v2659, %v299
    %v2662 = vsub.f32 %v2650, %v2660
    %v2663 = vsub.f32 %v2651, %v2661
    %v2664 = vmul.f32 %v2662, %v2662
    %v2665 = vmul.f32 %v2663, %v2663
    %v2666 = vsel %vm292, %v2664, 0.0
    %2667 = vadd.xlane.f32.xlu0 %v2666
    %v2668 = vpop.xlane.xlu0 %2667
    %v2669 = vsel %vm292, %v2665, 0.0
    %2670 = vadd.xlane.f32.xlu0 %v2669
    %v2671 = vpop.xlane.xlu0 %2670
    %v2672 = vmul.f32 %v2668, %v299
    %v2673 = vmul.f32 %v2671, %v299
    %v2674 = vadd.f32 %v2672, 1e-05
    %v2675 = vadd.f32 %v2673, 1e-05
    %v2676 = vrsqrt.pop %v2674
    %v2677 = vrsqrt.pop %v2675
    %v2678 = vmul.f32 %v2662, %v2676
    %v2679 = vmul.f32 %v2663, %v2677
    %v2681 = vlaneseq
    %v2682 = vshrl.u32 %v2681, 7
    %v2683 = vsub.s32 0, %v2682
    %v2684 = vrot.slane %v2652, %v2683
    %v2686 = vmul.f32 %v2678, %v2684
    %v2687 = vmul.f32 %v2679, %v2684
    %v2689 = vlaneseq
    %v2690 = vshrl.u32 %v2689, 7
    %v2691 = vsub.s32 0, %v2690
    %v2692 = vrot.slane %v2653, %v2691
    %v2694 = vadd.f32 %v2686, %v2692
    %v2695 = vadd.f32 %v2687, %v2692
    %2696 = vst.msk [vmem:[#allocation16] sm:$0xff] %vm292, %v2694
    %2697 = vst.msk [vmem:[#allocation16 + $0x8] sm:$0xff] %vm292, %v2695
    // Predicated region
    $region114: #{communication_forward.1} parent=1 // pred_check
      _
    $region115: #{communication_forward.1} parent=1 // pred_check_branch
      %2699 = sbr.rel (0) target = $region117
    $region116: #{communication_forward.1} parent=1 // pred_region
      %s2701 = ssub.s32 256, 256
      %2702 = vsyncadd [#allocation4], %s2701
      %s2703 = sshll.u32 [#allocation16], 4
      %s2704 = int_to_ptr.vmem [resolvable:$true] %s2703
      %2709 = dma.vmem_to_hbm [thread:$0]  %s2704, 256, %s20, [#allocation4], 128, 128, 8
    $region117: #{communication_forward.1} parent=1 // pred_fallthru
      _
    // Predicated region
    $region118: #{communication_forward.1} parent=1 // pred_check
      _
    $region119: #{communication_forward.1} parent=1 // pred_check_branch
      %2711 = sbr.rel (0) target = $region121
    $region120: #{communication_forward.1} parent=1 // pred_region
      %s2713 = ssub.s32 1024, 1024
      %2714 = vsyncadd [#allocation18], %s2713
      %s2715 = sshll.u32 [#allocation17], 4
      %s2716 = int_to_ptr.vmem [resolvable:$true] %s2715
      %2721 = dma.vmem_to_hbm [thread:$0]  %s2716, 1024, %s21, [#allocation18], 128, 128, 8
    $region121: #{communication_forward.1} parent=1 // pred_fallthru
      _
    // Predicated region
    $region122: #{communication_forward.1} parent=1 // pred_check
      _
    $region123: #{communication_forward.1} parent=1 // pred_check_branch
      %2723 = sbr.rel (0) target = $region125
    $region124: #{communication_forward.1} parent=1 // pred_region
      %2724 = dma.done [#allocation4], 256
    $region125: #{communication_forward.1} parent=1 // pred_fallthru
      _
    // Predicated region
    $region126: #{communication_forward.1} parent=1 // pred_check
      _
    $region127: #{communication_forward.1} parent=1 // pred_check_branch
      %2726 = sbr.rel (0) target = $region129
    $region128: #{communication_forward.1} parent=1 // pred_region
      %2727 = dma.done [#allocation18], 1024
    $region129: #{communication_forward.1} parent=1 // pred_fallthru
      _
    %2728 = vsyncpa [#allocation3], 1
    %2729 = vsyncpa [#allocation6], 1
    %2730 = vsyncpa [#allocation9], 1
    %2731 = vsyncpa [#allocation12], 1
    %2732 = vsyncpa [#allocation15], 1
    %2733 = vsyncpa [#allocation4], 1
    %2734 = vsyncpa [#allocation18], 1

</llo_original>
